<compile_context>
chip_gen: v7x
topology: tpu7x:2x2x1
jax: 0.10.0
libtpu: 0.0.40
codegen_flags: <defaults>
</compile_context>

<pallas_src>
import functools
import math

import jax
import jax.numpy as jnp
from jax import lax
from jax.experimental import pallas as pl
from jax.experimental.pallas import tpu as pltpu

MAX_NEIGHBORS = 64
SA1_OUT = 64          # real (unpadded) output width of sa1's MLP
SA2_OUT = 128         # real output width of sa2's MLP
K_CHUNK = 16          # neighbors processed per MXU pass inside _pointconv_kernel


def _round_up(x, m):
    return ((x + m - 1) // m) * m


@functools.lru_cache(maxsize=None)
def _tpu_budget():
    """(vmem_limit_bytes, base center-tile, edge pipeline depth) per TPU generation."""
    cap = 128 * 1024 * 1024
    try:
        info = pltpu.get_tpu_info()
        cap = int(getattr(info, "vmem_capacity_bytes", cap))
    except Exception:
        pass
    if cap <= 64 * 1024 * 1024:
        # v7x: 64 MiB per TensorCore -> conservative cap, smaller tiles.
        return 32 * 1024 * 1024, 128, 2
    # v5e / v6e: 128 MiB physical -> bigger tiles, deeper edge buffering.
    return 64 * 1024 * 1024, 256, 3


def _pick_tm(M, base_tm):
    """Largest tile that fits the budget, but >=2 grid blocks whenever possible so
    both v7x TensorCores get work on the 'parallel' grid axis."""
    Mp8 = _round_up(max(M, 1), 8)
    if Mp8 <= 8:
        return Mp8
    if Mp8 < 2 * base_tm:
        return min(base_tm, _round_up(pl.cdiv(Mp8, 2), 8))
    return base_tm


# ----------------------------- Pallas kernels ------------------------------

def _pointconv_kernel(edge_ref, w1_ref, b1_ref, w2_ref, b2_ref, out_ref, *, k_chunk):
    # edge_ref: (tm, K, Cin) bf16 neighborhood features [x_j, pos_j - pos_i].
    #           Invalid neighbor slots duplicate the center's own edge, so a plain
    #           max over K equals the masked max (no mask tensor, no -inf rows).
    # out_ref : (tm, H2) bf16 per-center max-aggregated features (aggr='max').
    tm, K, Cin = edge_ref.shape
    H2 = out_ref.shape[-1]
    n_chunks = K // k_chunk

    w1 = w1_ref[...]
    b1 = b1_ref[0]
    w2 = w2_ref[...]
    b2 = b2_ref[0]

    def chunk_max(c, acc):
        start = pl.multiple_of(c * k_chunk, k_chunk)
        e = edge_ref[:, pl.ds(start, k_chunk), :].reshape(tm * k_chunk, Cin)
        # Linear -> folded eval-mode BatchNorm -> ReLU (f32 accumulate / elementwise)
        h = jnp.dot(e, w1, preferred_element_type=jnp.float32) + b1
        h = jnp.maximum(h, 0.0)
        # plain last Linear (torch_geometric MLP plain_last=True)
        y = jnp.dot(h.astype(w2.dtype), w2, preferred_element_type=jnp.float32) + b2
        return jnp.maximum(acc, jnp.max(y.reshape(tm, k_chunk, H2), axis=1))

    acc0 = jnp.full((tm, H2), -jnp.inf, jnp.float32)
    acc = lax.fori_loop(0, n_chunks, chunk_max, acc0, unroll=True)
    out_ref[...] = acc.astype(out_ref.dtype)


def _sa3_pool_kernel(x_ref, w1_ref, b1_ref, w2_ref, b2_ref, out_ref, *, rows_valid):
    # One grid step per graph: GlobalSAModule MLP([130,256,256]) on [x, pos]
    # followed by global_max_pool over that graph's (padded) rows.
    x = x_ref[0]                                                       # (M2p, 256) bf16
    h = jnp.dot(x, w1_ref[...], preferred_element_type=jnp.float32) + b1_ref[0]
    h = jnp.maximum(h, 0.0)
    y = jnp.dot(h.astype(w2_ref.dtype), w2_ref[...],
                preferred_element_type=jnp.float32) + b2_ref[0]        # (M2p, 256)
    row = lax.broadcasted_iota(jnp.int32, y.shape, 0)
    y = jnp.where(row < rows_valid, y, -jnp.inf)                       # mask padded rows
    out_ref[0] = jnp.max(y, axis=0, keepdims=True)                     # (1, 256) pool


def _head_kernel(g_ref, z_ref,
                 wp1_ref, bp1_ref, wp2_ref, bp2_ref,
                 wh1g_ref, wh1s_ref, bh1_ref, wh2_ref, bh2_ref, out_ref):
    # Single grid step, batched over all graphs (Bp rows) so the MXU sees full
    # sublane tiles instead of one (1, 256) row per graph:
    #   sdf_pre_layer : MLP([256,256,256]) on z_sdf,
    #   head          : MLP([512,256,1024]) on cat([pooled, sdf_encoded]).
    z = z_ref[...].astype(wp1_ref.dtype)
    s = jnp.maximum(jnp.dot(z, wp1_ref[...],
                            preferred_element_type=jnp.float32) + bp1_ref[0], 0.0)
    s = jnp.dot(s.astype(wp2_ref.dtype), wp2_ref[...],
                preferred_element_type=jnp.float32) + bp2_ref[0]       # (Bp, 256)

    g = g_ref[...].astype(wh1g_ref.dtype)
    # head Linear on cat([g, s], -1) realized as a split matmul (W1[:256] / W1[256:])
    h = (jnp.dot(g, wh1g_ref[...], preferred_element_type=jnp.float32)
         + jnp.dot(s.astype(wh1s_ref.dtype), wh1s_ref[...],
                   preferred_element_type=jnp.float32)
         + bh1_ref[0])
    h = jnp.maximum(h, 0.0)
    out_ref[...] = (jnp.dot(h.astype(wh2_ref.dtype), wh2_ref[...],
                            preferred_element_type=jnp.float32) + bh2_ref[0])


# ----------------------------- kernel wrappers ------------------------------

def pointconv(edge, w1, b1, w2, b2):
    M, K, Cin = edge.shape
    H1 = w1.shape[1]
    H2 = w2.shape[1]
    vmem_limit, base_tm, buf_depth = _tpu_budget()

    tm = _pick_tm(M, base_tm)
    Mp = _round_up(M, tm)
    if Mp != M:
        edge = jnp.pad(edge, ((0, Mp - M), (0, 0), (0, 0)))
    n_blocks = Mp // tm
    k_chunk = K_CHUNK if K % K_CHUNK == 0 else 8

    edge_kwargs = {}
    if buf_depth > 2 and n_blocks > buf_depth:
        # v5e/v6e: deeper edge pipelining to hide the edge DMA behind MXU work.
        edge_kwargs["pipeline_mode"] = pl.Buffered(buf_depth)
    edge_spec = pl.BlockSpec((tm, K, Cin), lambda i: (i, 0, 0), **edge_kwargs)

    out = pl.pallas_call(
        functools.partial(_pointconv_kernel, k_chunk=k_chunk),
        out_shape=jax.ShapeDtypeStruct((Mp, H2), jnp.bfloat16),
        grid=(n_blocks,),
        in_specs=[
            edge_spec,
            pl.BlockSpec((Cin, H1), lambda i: (0, 0)),
            pl.BlockSpec((1, H1), lambda i: (0, 0)),
            pl.BlockSpec((H1, H2), lambda i: (0, 0)),
            pl.BlockSpec((1, H2), lambda i: (0, 0)),
        ],
        out_specs=pl.BlockSpec((tm, H2), lambda i: (i, 0)),
        compiler_params=pltpu.CompilerParams(
            dimension_semantics=("parallel",),
            vmem_limit_bytes=vmem_limit),
    )(edge, w1, b1, w2, b2)
    return out[:M]


def global_sa_head(x2, pos2, z_sdf, sa3_p, pre_p, head_p):
    B, M2, _ = x2.shape
    c3p = sa3_p[0].shape[0]                   # 256: lane-dense padded [x, pos] width
    out_dim = head_p[3].shape[1]
    zdim = z_sdf.shape[-1]
    vmem_limit, _, _ = _tpu_budget()

    feats = jnp.concatenate(
        [x2.astype(jnp.bfloat16), pos2.astype(jnp.bfloat16)], axis=-1)
    M2p = _round_up(M2, 8)
    feats = jnp.pad(feats, ((0, 0), (0, M2p - M2), (0, c3p - feats.shape[-1])))

    def full_b(shape):
        return pl.BlockSpec(shape, lambda b: (0,) * len(shape))

    # Per-graph GlobalSAModule MLP + max pool -> pooled (B, 256).
    pooled = pl.pallas_call(
        functools.partial(_sa3_pool_kernel, rows_valid=M2),
        out_shape=jax.ShapeDtypeStruct((B, 1, 256), jnp.float32),
        grid=(B,),
        in_specs=[
            pl.BlockSpec((1, M2p, c3p), lambda b: (b, 0, 0)),
            full_b(sa3_p[0].shape), full_b(sa3_p[1].shape),
            full_b(sa3_p[2].shape), full_b(sa3_p[3].shape),
        ],
        out_specs=pl.BlockSpec((1, 1, 256), lambda b: (b, 0, 0)),
        compiler_params=pltpu.CompilerParams(
            dimension_semantics=("parallel",),
            vmem_limit_bytes=vmem_limit),
    )(feats, *sa3_p)

    # sdf_pre_layer + head batched over all graphs in one MXU-friendly step.
    Bp = _round_up(B, 8)
    g = jnp.pad(pooled.reshape(B, 256), ((0, Bp - B), (0, 0)))
    z = jnp.pad(z_sdf.astype(jnp.float32), ((0, Bp - B), (0, 0)))

    def full1(shape):
        return pl.BlockSpec(shape, lambda i: (0,) * len(shape))

    out = pl.pallas_call(
        _head_kernel,
        out_shape=jax.ShapeDtypeStruct((Bp, out_dim), jnp.float32),
        grid=(1,),
        in_specs=[full1((Bp, 256)), full1((Bp, zdim))]
                 + [full1(p.shape) for p in pre_p]
                 + [full1(p.shape) for p in head_p],
        out_specs=full1((Bp, out_dim)),
        compiler_params=pltpu.CompilerParams(
            dimension_semantics=("arbitrary",),
            vmem_limit_bytes=vmem_limit),
    )(g, z, *pre_p, *head_p)
    return out[:B]


# ------------------------ graph construction (plain JAX glue) ---------------

def fps_dense(pos, n_sample):
    """Farthest point sampling per graph (incremental min-distance, no NxN matrix)."""
    # TODO(synk): torch_cluster.fps defaults to random_start=True; we use start index 0.
    N = pos.shape[1]

    def one(p):
        def body(i, state):
            sel, mind, last = state
            d = jnp.sum((p - p[last]) ** 2, axis=-1)
            mind = jnp.minimum(mind, d)
            nxt = jnp.argmax(mind).astype(jnp.int32)
            return sel.at[i].set(nxt), mind, nxt

        sel0 = jnp.zeros((n_sample,), jnp.int32)
        mind0 = jnp.full((N,), jnp.inf, jnp.float32)
        sel, _, _ = lax.fori_loop(1, n_sample, body, (sel0, mind0, jnp.int32(0)))
        return sel

    return jax.vmap(one)(pos)


def radius_dense(pos_src, pos_ctr, ctr_idx, r, max_k):
    """Up to max_k sources within radius r per center (lowest index first).  Empty
    slots reuse the center's own index (distance 0 <= r), so duplicates never change
    a max aggregation and -inf rows cannot occur.  K is padded to a multiple of 8."""
    # TODO(synk): torch_geometric.radius keeps first-found ordering, not lowest-index.
    B, N, _ = pos_src.shape
    K = min(max_k, N)
    d2 = jnp.sum((pos_ctr[:, :, None, :] - pos_src[:, None, :, :]) ** 2, axis=-1)
    valid = d2 <= r * r
    idx = jnp.arange(N, dtype=jnp.int32)
    key = jnp.where(valid, idx[None, None, :], N + idx[None, None, :])
    neg_top, order = lax.top_k(-key, K)            # K smallest keys = lowest valid idx
    sel_valid = (-neg_top) < N
    nbr = jnp.where(sel_valid, order.astype(jnp.int32), ctr_idx[:, :, None])
    Kp = _round_up(K, 8)
    if Kp != K:
        fill = jnp.broadcast_to(ctr_idx[:, :, None], nbr.shape[:2] + (Kp - K,))
        nbr = jnp.concatenate([nbr, fill], axis=-1)
    return nbr


def gather_edges(x_src, pos_src, pos_ctr, nbr_idx, cin_pad):
    take = jax.vmap(lambda a, i: a[i])
    x_j = take(x_src, nbr_idx)                                  # (B, M, K, F)
    rel = take(pos_src, nbr_idx) - pos_ctr[:, :, None, :]       # pos_j - pos_i
    edge = jnp.concatenate([x_j.astype(jnp.bfloat16),
                            rel.astype(jnp.bfloat16)], axis=-1)
    pad = cin_pad - edge.shape[-1]
    if pad:
        edge = jnp.pad(edge, ((0, 0), (0, 0), (0, 0), (0, pad)))
    return edge


def sa_module(x, pos, ratio, r, params):
    # TODO(synk): the neighborhood gather is still materialized in HBM; fusing it into
    # _pointconv_kernel (scalar-prefetched nbr_idx + in-kernel gather) would roughly
    # halve HBM traffic for this stage.
    B, N, _ = x.shape
    n_sample = int(math.ceil(ratio * N))
    idx = fps_dense(pos, n_sample)                               # (B, M)
    take = jax.vmap(lambda a, i: a[i])
    pos_ctr = take(pos, idx)                                     # (B, M, D)
    nbr_idx = radius_dense(pos, pos_ctr, idx, r, MAX_NEIGHBORS)  # (B, M, K)
    edge = gather_edges(x, pos, pos_ctr, nbr_idx, params[0].shape[0])
    M, K, C = edge.shape[1], edge.shape[2], edge.shape[3]
    out = pointconv(edge.reshape(B * M, K, C), *params)          # (B*M, H2_pad) bf16
    return out.reshape(B, M, -1), pos_ctr


# ------------------------------ parameters ----------------------------------

def init_linear(key, fan_in, fan_out):
    k1, k2 = jax.random.split(key)
    bound = 1.0 / math.sqrt(fan_in)
    w = jax.random.uniform(k1, (fan_in, fan_out), jnp.float32, -bound, bound)
    b = jax.random.uniform(k2, (1, fan_out), jnp.float32, -bound, bound)
    return w, b


def fold_bn(w, b, gamma, beta, mean, var, eps=1e-5):
    # Fold eval-mode BatchNorm1d (running stats) into the preceding Linear.
    s = gamma / jnp.sqrt(var + eps)
    return w * s[None, :], b * s[None, :] + (beta - mean * s)[None, :]


def _pad_to(a, shape):
    return jnp.pad(a, [(0, t - s) for s, t in zip(a.shape, shape)])


def make_conv_mlp(key, c0, c1, c2, c0p, c1p, c2p):
    """MLP([c0,c1,c2]) (default BatchNorm, plain last), zero-padded to lane-friendly shapes."""
    ka, kb = jax.random.split(key)
    w1, b1 = init_linear(ka, c0, c1)
    gamma, beta = jnp.ones((c1,)), jnp.zeros((c1,))
    mean, var = jnp.zeros((c1,)), jnp.ones((c1,))
    w1, b1 = fold_bn(w1, b1, gamma, beta, mean, var)
    w2, b2 = init_linear(kb, c1, c2)
    return (_pad_to(w1, (c0p, c1p)).astype(jnp.bfloat16), _pad_to(b1, (1, c1p)),
            _pad_to(w2, (c1p, c2p)).astype(jnp.bfloat16), _pad_to(b2, (1, c2p)))


def init_params(key, node_features=5, input_dim=2, latent_dim=256, output_dim=1024):
    ks = jax.random.split(key, 7)
    c_in1 = node_features + input_dim                                  # 7
    sa1 = make_conv_mlp(ks[0], c_in1, 32, 64, _round_up(c_in1, 8), 128, 128)
    sa2 = make_conv_mlp(ks[1], 64 + input_dim, 64, 128,
                        _round_up(64 + input_dim, 8), 128, 128)
    # sa3 input [x(128), pos(2)] padded 130 -> 256 lanes for unmasked lane-dense loads.
    sa3 = make_conv_mlp(ks[2], 128 + input_dim, 256, 256, 256, 256, 256)
    # sdf_pre_layer: MLP([256,256,256], norm=None); dropout identity in eval mode.
    wp1, bp1 = init_linear(ks[3], latent_dim, 256)
    wp2, bp2 = init_linear(ks[4], 256, 256)
    # final mlp: MLP([256+256, 256, output_dim], norm=None)
    wh1, bh1 = init_linear(ks[5], 512, 256)
    wh2, bh2 = init_linear(ks[6], 256, output_dim)
    bf = lambda a: a.astype(jnp.bfloat16)          # bf16 operands, f32 accumulation
    pre = (bf(wp1), bp1, bf(wp2), bp2)
    head = (bf(wh1[:256]), bf(wh1[256:]), bh1, bf(wh2), bh2)   # split rows for concat
    return {"sa1": sa1, "sa2": sa2, "sa3": sa3, "pre": pre, "head": head}


# ------------------------------ full forward --------------------------------

def pointnet2_forward(x, pos, z_sdf, params):
    # sa1: SAModule(0.5, 0.2, MLP([7, 32, 64]))
    x1, pos1 = sa_module(x, pos, 0.5, 0.2, params["sa1"])
    x1 = x1[..., :SA1_OUT]                          # drop lane padding before next gather
    # sa2: SAModule(0.25, 0.4, MLP([66, 64, 128]))
    x2, pos2 = sa_module(x1, pos1, 0.25, 0.4, params["sa2"])
    x2 = x2[..., :SA2_OUT]
    # sa3 (GlobalSAModule MLP([130,256,256]) + global_max_pool), then the batched
    # sdf_pre_layer + final MLP head.  Dropout is identity in eval mode.
    return global_sa_head(x2, pos2, z_sdf, params["sa3"], params["pre"], params["head"])


if __name__ == "__main__":
    key = jax.random.PRNGKey(0)
    B, N = 2, 32            # 2 graphs, 32 points each
    NODE_F, POS_D, LATENT = 5, 2, 256
    kx, kp, kz, kw = jax.random.split(key, 4)
    x = jax.random.normal(kx, (B, N, NODE_F), jnp.float32)
    pos = jax.random.uniform(kp, (B, N, POS_D), jnp.float32)
    z_sdf = jax.random.normal(kz, (B, LATENT), jnp.float32)
    params = init_params(kw, node_features=NODE_F, input_dim=POS_D, latent_dim=LATENT)

    out = jax.jit(pointnet2_forward)(x, pos, z_sdf, params)
    out = jax.block_until_ready(out)
    assert out.shape == (B, 1024) and out.dtype == jnp.float32
    assert bool(jnp.all(jnp.isfinite(out)))
    print("KERNEL_OK")
</pallas_src>

<mosaic_0001>
module attributes {stable_mosaic.version = 11 : i64} {
  func.func @_pointconv_kernel(%arg0: i32, %arg1: memref<16x32x8xbf16, #tpu.memory_space<vmem>>, %arg2: memref<8x128xbf16, #tpu.memory_space<vmem>>, %arg3: memref<1x128xf32, #tpu.memory_space<vmem>>, %arg4: memref<128x128xbf16, #tpu.memory_space<vmem>>, %arg5: memref<1x128xf32, #tpu.memory_space<vmem>>, %arg6: memref<16x128xbf16, #tpu.memory_space<vmem>>) attributes {dimension_semantics = [#tpu.dimension_semantics<parallel>], iteration_bounds = array<i64: 2>, scalar_prefetch = 0 : i64, scratch_operands = 0 : i64, tpu.core_type = #tpu.core_type<tc>, window_params = [{transform_indices = @transform_0, window_bounds = array<i64: 16, 32, 8>}, {pipeline_mode = #tpu.pipeline_mode<synchronous>, transform_indices = @transform_1, window_bounds = array<i64: 8, 128>}, {pipeline_mode = #tpu.pipeline_mode<synchronous>, transform_indices = @transform_2, window_bounds = array<i64: 1, 128>}, {pipeline_mode = #tpu.pipeline_mode<synchronous>, transform_indices = @transform_3, window_bounds = array<i64: 128, 128>}, {pipeline_mode = #tpu.pipeline_mode<synchronous>, transform_indices = @transform_4, window_bounds = array<i64: 1, 128>}, {transform_indices = @transform_5, window_bounds = array<i64: 16, 128>}]} {
    %c0 = arith.constant 0 : index
    %c0_0 = arith.constant 0 : index
    %0 = vector.load %arg2[%c0, %c0_0] : memref<8x128xbf16, #tpu.memory_space<vmem>>, vector<8x128xbf16>
    %c0_1 = arith.constant 0 : index
    %c0_2 = arith.constant 0 : index
    %1 = vector.load %arg3[%c0_1, %c0_2] : memref<1x128xf32, #tpu.memory_space<vmem>>, vector<1x128xf32>
    %2 = vector.shape_cast %1 : vector<1x128xf32> to vector<128xf32>
    %c0_3 = arith.constant 0 : index
    %c0_4 = arith.constant 0 : index
    %3 = vector.load %arg4[%c0_3, %c0_4] : memref<128x128xbf16, #tpu.memory_space<vmem>>, vector<128x128xbf16>
    %c0_5 = arith.constant 0 : index
    %c0_6 = arith.constant 0 : index
    %4 = vector.load %arg5[%c0_5, %c0_6] : memref<1x128xf32, #tpu.memory_space<vmem>>, vector<1x128xf32>
    %5 = vector.shape_cast %4 : vector<1x128xf32> to vector<128xf32>
    %cst = arith.constant 0xFF800000 : f32
    %6 = vector.broadcast %cst : f32 to vector<16x128xf32>
    %c0_i32 = arith.constant 0 : i32
    %c16_i32 = arith.constant 16 : i32
    %7 = arith.muli %c0_i32, %c16_i32 : i32
    %8 = tpu.assume_multiple %7, 16 : i32
    %c0_7 = arith.constant 0 : index
    %9 = arith.index_cast %8 : i32 to index
    %c0_8 = arith.constant 0 : index
    %10 = vector.load %arg1[%c0_7, %9, %c0_8] : memref<16x32x8xbf16, #tpu.memory_space<vmem>>, vector<16x16x8xbf16>
    %11 = vector.shape_cast %10 : vector<16x16x8xbf16> to vector<256x8xbf16>
    %cst_9 = arith.constant dense<0.000000e+00> : vector<256x128xf32>
    %12 = tpu.matmul %11, %0, %cst_9 {dimension_numbers = #tpu.dot_dimension_numbers<[1], [0], [0], [1], [0, 0, 1, 1], [], []>} : vector<256x8xbf16>, vector<8x128xbf16>, vector<256x128xf32> -> vector<256x128xf32>
    %13 = vector.shape_cast %2 : vector<128xf32> to vector<1x128xf32>
    %14 = vector.broadcast %13 : vector<1x128xf32> to vector<256x128xf32>
    %15 = arith.addf %12, %14 : vector<256x128xf32>
    %cst_10 = arith.constant 0.000000e+00 : f32
    %16 = vector.broadcast %cst_10 : f32 to vector<256x128xf32>
    %17 = arith.maximumf %15, %16 : vector<256x128xf32>
    %18 = arith.truncf %17 : vector<256x128xf32> to vector<256x128xbf16>
    %cst_11 = arith.constant dense<0.000000e+00> : vector<256x128xf32>
    %19 = tpu.matmul %18, %3, %cst_11 {dimension_numbers = #tpu.dot_dimension_numbers<[1], [0], [0], [1], [0, 0, 1, 1], [], []>} : vector<256x128xbf16>, vector<128x128xbf16>, vector<256x128xf32> -> vector<256x128xf32>
    %20 = vector.shape_cast %5 : vector<128xf32> to vector<1x128xf32>
    %21 = vector.broadcast %20 : vector<1x128xf32> to vector<256x128xf32>
    %22 = arith.addf %19, %21 : vector<256x128xf32>
    %23 = vector.shape_cast %22 : vector<256x128xf32> to vector<16x16x128xf32>
    %cst_12 = arith.constant dense<0xFF800000> : vector<16x128xf32>
    %24 = vector.multi_reduction <maximumf>, %23, %cst_12 [1] : vector<16x16x128xf32> to vector<16x128xf32>
    %25 = arith.maximumf %6, %24 : vector<16x128xf32>
    %c1_i32 = arith.constant 1 : i32
    %c16_i32_13 = arith.constant 16 : i32
    %26 = arith.muli %c1_i32, %c16_i32_13 : i32
    %27 = tpu.assume_multiple %26, 16 : i32
    %c0_14 = arith.constant 0 : index
    %28 = arith.index_cast %27 : i32 to index
    %c0_15 = arith.constant 0 : index
    %29 = vector.load %arg1[%c0_14, %28, %c0_15] : memref<16x32x8xbf16, #tpu.memory_space<vmem>>, vector<16x16x8xbf16>
    %30 = vector.shape_cast %29 : vector<16x16x8xbf16> to vector<256x8xbf16>
    %cst_16 = arith.constant dense<0.000000e+00> : vector<256x128xf32>
    %31 = tpu.matmul %30, %0, %cst_16 {dimension_numbers = #tpu.dot_dimension_numbers<[1], [0], [0], [1], [0, 0, 1, 1], [], []>} : vector<256x8xbf16>, vector<8x128xbf16>, vector<256x128xf32> -> vector<256x128xf32>
    %32 = vector.shape_cast %2 : vector<128xf32> to vector<1x128xf32>
    %33 = vector.broadcast %32 : vector<1x128xf32> to vector<256x128xf32>
    %34 = arith.addf %31, %33 : vector<256x128xf32>
    %cst_17 = arith.constant 0.000000e+00 : f32
    %35 = vector.broadcast %cst_17 : f32 to vector<256x128xf32>
    %36 = arith.maximumf %34, %35 : vector<256x128xf32>
    %37 = arith.truncf %36 : vector<256x128xf32> to vector<256x128xbf16>
    %cst_18 = arith.constant dense<0.000000e+00> : vector<256x128xf32>
    %38 = tpu.matmul %37, %3, %cst_18 {dimension_numbers = #tpu.dot_dimension_numbers<[1], [0], [0], [1], [0, 0, 1, 1], [], []>} : vector<256x128xbf16>, vector<128x128xbf16>, vector<256x128xf32> -> vector<256x128xf32>
    %39 = vector.shape_cast %5 : vector<128xf32> to vector<1x128xf32>
    %40 = vector.broadcast %39 : vector<1x128xf32> to vector<256x128xf32>
    %41 = arith.addf %38, %40 : vector<256x128xf32>
    %42 = vector.shape_cast %41 : vector<256x128xf32> to vector<16x16x128xf32>
    %cst_19 = arith.constant dense<0xFF800000> : vector<16x128xf32>
    %43 = vector.multi_reduction <maximumf>, %42, %cst_19 [1] : vector<16x16x128xf32> to vector<16x128xf32>
    %44 = arith.maximumf %25, %43 : vector<16x128xf32>
    %c2_i32 = arith.constant 2 : i32
    %45 = arith.truncf %44 : vector<16x128xf32> to vector<16x128xbf16>
    %c0_20 = arith.constant 0 : index
    %c0_21 = arith.constant 0 : index
    %46 = vector.load %arg6[%c0_20, %c0_21] : memref<16x128xbf16, #tpu.memory_space<vmem>>, vector<16x128xbf16>
    tpu.vector_store %arg6[%c0_20, %c0_21], %45 {strides = array<i32>} : memref<16x128xbf16, #tpu.memory_space<vmem>>, vector<16x128xbf16>,
    return
  }
  func.func @transform_0(%arg0: i32) -> (i32, i32, i32) {
    %c0_i32 = arith.constant 0 : i32
    %c0_i32_0 = arith.constant 0 : i32
    %c0_i32_1 = arith.constant 0 : i32
    return %arg0, %c0_i32, %c0_i32_0 : i32, i32, i32
  }
  func.func @transform_1(%arg0: i32) -> (i32, i32) {
    %c0_i32 = arith.constant 0 : i32
    %c0_i32_0 = arith.constant 0 : i32
    %c0_i32_1 = arith.constant 0 : i32
    return %c0_i32, %c0_i32_0 : i32, i32
  }
  func.func @transform_2(%arg0: i32) -> (i32, i32) {
    %c0_i32 = arith.constant 0 : i32
    %c0_i32_0 = arith.constant 0 : i32
    %c0_i32_1 = arith.constant 0 : i32
    return %c0_i32, %c0_i32_0 : i32, i32
  }
  func.func @transform_3(%arg0: i32) -> (i32, i32) {
    %c0_i32 = arith.constant 0 : i32
    %c0_i32_0 = arith.constant 0 : i32
    %c0_i32_1 = arith.constant 0 : i32
    return %c0_i32, %c0_i32_0 : i32, i32
  }
  func.func @transform_4(%arg0: i32) -> (i32, i32) {
    %c0_i32 = arith.constant 0 : i32
    %c0_i32_0 = arith.constant 0 : i32
    %c0_i32_1 = arith.constant 0 : i32
    return %c0_i32, %c0_i32_0 : i32, i32
  }
  func.func @transform_5(%arg0: i32) -> (i32, i32) {
    %c0_i32 = arith.constant 0 : i32
    %c0_i32_0 = arith.constant 0 : i32
    return %arg0, %c0_i32 : i32, i32
  }
}

module attributes {stable_mosaic.version = 11 : i64} {
  func.func @_pointconv_kernel(%arg0: i32, %arg1: memref<8x16x72xbf16, #tpu.memory_space<vmem>>, %arg2: memref<72x128xbf16, #tpu.memory_space<vmem>>, %arg3: memref<1x128xf32, #tpu.memory_space<vmem>>, %arg4: memref<128x128xbf16, #tpu.memory_space<vmem>>, %arg5: memref<1x128xf32, #tpu.memory_space<vmem>>, %arg6: memref<8x128xbf16, #tpu.memory_space<vmem>>) attributes {dimension_semantics = [#tpu.dimension_semantics<parallel>], iteration_bounds = array<i64: 1>, scalar_prefetch = 0 : i64, scratch_operands = 0 : i64, tpu.core_type = #tpu.core_type<tc>, window_params = [{transform_indices = @transform_0, window_bounds = array<i64: 8, 16, 72>}, {pipeline_mode = #tpu.pipeline_mode<synchronous>, transform_indices = @transform_1, window_bounds = array<i64: 72, 128>}, {pipeline_mode = #tpu.pipeline_mode<synchronous>, transform_indices = @transform_2, window_bounds = array<i64: 1, 128>}, {pipeline_mode = #tpu.pipeline_mode<synchronous>, transform_indices = @transform_3, window_bounds = array<i64: 128, 128>}, {pipeline_mode = #tpu.pipeline_mode<synchronous>, transform_indices = @transform_4, window_bounds = array<i64: 1, 128>}, {transform_indices = @transform_5, window_bounds = array<i64: 8, 128>}]} {
    %c0 = arith.constant 0 : index
    %c0_0 = arith.constant 0 : index
    %0 = vector.load %arg2[%c0, %c0_0] : memref<72x128xbf16, #tpu.memory_space<vmem>>, vector<72x128xbf16>
    %c0_1 = arith.constant 0 : index
    %c0_2 = arith.constant 0 : index
    %1 = vector.load %arg3[%c0_1, %c0_2] : memref<1x128xf32, #tpu.memory_space<vmem>>, vector<1x128xf32>
    %2 = vector.shape_cast %1 : vector<1x128xf32> to vector<128xf32>
    %c0_3 = arith.constant 0 : index
    %c0_4 = arith.constant 0 : index
    %3 = vector.load %arg4[%c0_3, %c0_4] : memref<128x128xbf16, #tpu.memory_space<vmem>>, vector<128x128xbf16>
    %c0_5 = arith.constant 0 : index
    %c0_6 = arith.constant 0 : index
    %4 = vector.load %arg5[%c0_5, %c0_6] : memref<1x128xf32, #tpu.memory_space<vmem>>, vector<1x128xf32>
    %5 = vector.shape_cast %4 : vector<1x128xf32> to vector<128xf32>
    %cst = arith.constant 0xFF800000 : f32
    %6 = vector.broadcast %cst : f32 to vector<8x128xf32>
    %c0_i32 = arith.constant 0 : i32
    %c16_i32 = arith.constant 16 : i32
    %7 = arith.muli %c0_i32, %c16_i32 : i32
    %8 = tpu.assume_multiple %7, 16 : i32
    %c0_7 = arith.constant 0 : index
    %9 = arith.index_cast %8 : i32 to index
    %c0_8 = arith.constant 0 : index
    %10 = vector.load %arg1[%c0_7, %9, %c0_8] : memref<8x16x72xbf16, #tpu.memory_space<vmem>>, vector<8x16x72xbf16>
    %11 = vector.shape_cast %10 : vector<8x16x72xbf16> to vector<128x72xbf16>
    %cst_9 = arith.constant dense<0.000000e+00> : vector<128x128xf32>
    %12 = tpu.matmul %11, %0, %cst_9 {dimension_numbers = #tpu.dot_dimension_numbers<[1], [0], [0], [1], [0, 0, 1, 1], [], []>} : vector<128x72xbf16>, vector<72x128xbf16>, vector<128x128xf32> -> vector<128x128xf32>
    %13 = vector.shape_cast %2 : vector<128xf32> to vector<1x128xf32>
    %14 = vector.broadcast %13 : vector<1x128xf32> to vector<128x128xf32>
    %15 = arith.addf %12, %14 : vector<128x128xf32>
    %cst_10 = arith.constant 0.000000e+00 : f32
    %16 = vector.broadcast %cst_10 : f32 to vector<128x128xf32>
    %17 = arith.maximumf %15, %16 : vector<128x128xf32>
    %18 = arith.truncf %17 : vector<128x128xf32> to vector<128x128xbf16>
    %cst_11 = arith.constant dense<0.000000e+00> : vector<128x128xf32>
    %19 = tpu.matmul %18, %3, %cst_11 {dimension_numbers = #tpu.dot_dimension_numbers<[1], [0], [0], [1], [0, 0, 1, 1], [], []>} : vector<128x128xbf16>, vector<128x128xbf16>, vector<128x128xf32> -> vector<128x128xf32>
    %20 = vector.shape_cast %5 : vector<128xf32> to vector<1x128xf32>
    %21 = vector.broadcast %20 : vector<1x128xf32> to vector<128x128xf32>
    %22 = arith.addf %19, %21 : vector<128x128xf32>
    %23 = vector.shape_cast %22 : vector<128x128xf32> to vector<8x16x128xf32>
    %cst_12 = arith.constant dense<0xFF800000> : vector<8x128xf32>
    %24 = vector.multi_reduction <maximumf>, %23, %cst_12 [1] : vector<8x16x128xf32> to vector<8x128xf32>
    %25 = arith.maximumf %6, %24 : vector<8x128xf32>
    %c1_i32 = arith.constant 1 : i32
    %26 = arith.truncf %25 : vector<8x128xf32> to vector<8x128xbf16>
    %c0_13 = arith.constant 0 : index
    %c0_14 = arith.constant 0 : index
    %27 = vector.load %arg6[%c0_13, %c0_14] : memref<8x128xbf16, #tpu.memory_space<vmem>>, vector<8x128xbf16>
    tpu.vector_store %arg6[%c0_13, %c0_14], %26 {strides = array<i32>} : memref<8x128xbf16, #tpu.memory_space<vmem>>, vector<8x128xbf16>,
    return
  }
  func.func @transform_0(%arg0: i32) -> (i32, i32, i32) {
    %c0_i32 = arith.constant 0 : i32
    %c0_i32_0 = arith.constant 0 : i32
    %c0_i32_1 = arith.constant 0 : i32
    return %arg0, %c0_i32, %c0_i32_0 : i32, i32, i32
  }
  func.func @transform_1(%arg0: i32) -> (i32, i32) {
    %c0_i32 = arith.constant 0 : i32
    %c0_i32_0 = arith.constant 0 : i32
    %c0_i32_1 = arith.constant 0 : i32
    return %c0_i32, %c0_i32_0 : i32, i32
  }
  func.func @transform_2(%arg0: i32) -> (i32, i32) {
    %c0_i32 = arith.constant 0 : i32
    %c0_i32_0 = arith.constant 0 : i32
    %c0_i32_1 = arith.constant 0 : i32
    return %c0_i32, %c0_i32_0 : i32, i32
  }
  func.func @transform_3(%arg0: i32) -> (i32, i32) {
    %c0_i32 = arith.constant 0 : i32
    %c0_i32_0 = arith.constant 0 : i32
    %c0_i32_1 = arith.constant 0 : i32
    return %c0_i32, %c0_i32_0 : i32, i32
  }
  func.func @transform_4(%arg0: i32) -> (i32, i32) {
    %c0_i32 = arith.constant 0 : i32
    %c0_i32_0 = arith.constant 0 : i32
    %c0_i32_1 = arith.constant 0 : i32
    return %c0_i32, %c0_i32_0 : i32, i32
  }
  func.func @transform_5(%arg0: i32) -> (i32, i32) {
    %c0_i32 = arith.constant 0 : i32
    %c0_i32_0 = arith.constant 0 : i32
    return %arg0, %c0_i32 : i32, i32
  }
}

module attributes {stable_mosaic.version = 11 : i64} {
  func.func @_head_kernel(%arg0: i32, %arg1: memref<8x256xf32, #tpu.memory_space<vmem>>, %arg2: memref<8x256xf32, #tpu.memory_space<vmem>>, %arg3: memref<256x256xbf16, #tpu.memory_space<vmem>>, %arg4: memref<1x256xf32, #tpu.memory_space<vmem>>, %arg5: memref<256x256xbf16, #tpu.memory_space<vmem>>, %arg6: memref<1x256xf32, #tpu.memory_space<vmem>>, %arg7: memref<256x256xbf16, #tpu.memory_space<vmem>>, %arg8: memref<256x256xbf16, #tpu.memory_space<vmem>>, %arg9: memref<1x256xf32, #tpu.memory_space<vmem>>, %arg10: memref<256x1024xbf16, #tpu.memory_space<vmem>>, %arg11: memref<1x1024xf32, #tpu.memory_space<vmem>>, %arg12: memref<8x1024xf32, #tpu.memory_space<vmem>>) attributes {dimension_semantics = [#tpu.dimension_semantics<arbitrary>], iteration_bounds = array<i64: 1>, scalar_prefetch = 0 : i64, scratch_operands = 0 : i64, tpu.core_type = #tpu.core_type<tc>, window_params = [{pipeline_mode = #tpu.pipeline_mode<synchronous>, transform_indices = @transform_0, window_bounds = array<i64: 8, 256>}, {pipeline_mode = #tpu.pipeline_mode<synchronous>, transform_indices = @transform_1, window_bounds = array<i64: 8, 256>}, {pipeline_mode = #tpu.pipeline_mode<synchronous>, transform_indices = @transform_2, window_bounds = array<i64: 256, 256>}, {pipeline_mode = #tpu.pipeline_mode<synchronous>, transform_indices = @transform_3, window_bounds = array<i64: 1, 256>}, {pipeline_mode = #tpu.pipeline_mode<synchronous>, transform_indices = @transform_4, window_bounds = array<i64: 256, 256>}, {pipeline_mode = #tpu.pipeline_mode<synchronous>, transform_indices = @transform_5, window_bounds = array<i64: 1, 256>}, {pipeline_mode = #tpu.pipeline_mode<synchronous>, transform_indices = @transform_6, window_bounds = array<i64: 256, 256>}, {pipeline_mode = #tpu.pipeline_mode<synchronous>, transform_indices = @transform_7, window_bounds = array<i64: 256, 256>}, {pipeline_mode = #tpu.pipeline_mode<synchronous>, transform_indices = @transform_8, window_bounds = array<i64: 1, 256>}, {pipeline_mode = #tpu.pipeline_mode<synchronous>, transform_indices = @transform_9, window_bounds = array<i64: 256, 1024>}, {pipeline_mode = #tpu.pipeline_mode<synchronous>, transform_indices = @transform_10, window_bounds = array<i64: 1, 1024>}, {pipeline_mode = #tpu.pipeline_mode<synchronous>, transform_indices = @transform_11, window_bounds = array<i64: 8, 1024>}]} {
    %c0 = arith.constant 0 : index
    %c0_0 = arith.constant 0 : index
    %0 = vector.load %arg2[%c0, %c0_0] : memref<8x256xf32, #tpu.memory_space<vmem>>, vector<8x256xf32>
    %1 = arith.truncf %0 : vector<8x256xf32> to vector<8x256xbf16>
    %c0_1 = arith.constant 0 : index
    %c0_2 = arith.constant 0 : index
    %2 = vector.load %arg3[%c0_1, %c0_2] : memref<256x256xbf16, #tpu.memory_space<vmem>>, vector<256x256xbf16>
    %cst = arith.constant dense<0.000000e+00> : vector<8x256xf32>
    %3 = tpu.matmul %1, %2, %cst {dimension_numbers = #tpu.dot_dimension_numbers<[1], [0], [0], [1], [0, 0, 1, 1], [], []>} : vector<8x256xbf16>, vector<256x256xbf16>, vector<8x256xf32> -> vector<8x256xf32>
    %c0_3 = arith.constant 0 : index
    %c0_4 = arith.constant 0 : index
    %4 = vector.load %arg4[%c0_3, %c0_4] : memref<1x256xf32, #tpu.memory_space<vmem>>, vector<1x256xf32>
    %5 = vector.shape_cast %4 : vector<1x256xf32> to vector<256xf32>
    %6 = vector.shape_cast %5 : vector<256xf32> to vector<1x256xf32>
    %7 = vector.broadcast %6 : vector<1x256xf32> to vector<8x256xf32>
    %8 = arith.addf %3, %7 : vector<8x256xf32>
    %cst_5 = arith.constant 0.000000e+00 : f32
    %9 = vector.broadcast %cst_5 : f32 to vector<8x256xf32>
    %10 = arith.maximumf %8, %9 : vector<8x256xf32>
    %11 = arith.truncf %10 : vector<8x256xf32> to vector<8x256xbf16>
    %c0_6 = arith.constant 0 : index
    %c0_7 = arith.constant 0 : index
    %12 = vector.load %arg5[%c0_6, %c0_7] : memref<256x256xbf16, #tpu.memory_space<vmem>>, vector<256x256xbf16>
    %cst_8 = arith.constant dense<0.000000e+00> : vector<8x256xf32>
    %13 = tpu.matmul %11, %12, %cst_8 {dimension_numbers = #tpu.dot_dimension_numbers<[1], [0], [0], [1], [0, 0, 1, 1], [], []>} : vector<8x256xbf16>, vector<256x256xbf16>, vector<8x256xf32> -> vector<8x256xf32>
    %c0_9 = arith.constant 0 : index
    %c0_10 = arith.constant 0 : index
    %14 = vector.load %arg6[%c0_9, %c0_10] : memref<1x256xf32, #tpu.memory_space<vmem>>, vector<1x256xf32>
    %15 = vector.shape_cast %14 : vector<1x256xf32> to vector<256xf32>
    %16 = vector.shape_cast %15 : vector<256xf32> to vector<1x256xf32>
    %17 = vector.broadcast %16 : vector<1x256xf32> to vector<8x256xf32>
    %18 = arith.addf %13, %17 : vector<8x256xf32>
    %c0_11 = arith.constant 0 : index
    %c0_12 = arith.constant 0 : index
    %19 = vector.load %arg1[%c0_11, %c0_12] : memref<8x256xf32, #tpu.memory_space<vmem>>, vector<8x256xf32>
    %20 = arith.truncf %19 : vector<8x256xf32> to vector<8x256xbf16>
    %c0_13 = arith.constant 0 : index
    %c0_14 = arith.constant 0 : index
    %21 = vector.load %arg7[%c0_13, %c0_14] : memref<256x256xbf16, #tpu.memory_space<vmem>>, vector<256x256xbf16>
    %cst_15 = arith.constant dense<0.000000e+00> : vector<8x256xf32>
    %22 = tpu.matmul %20, %21, %cst_15 {dimension_numbers = #tpu.dot_dimension_numbers<[1], [0], [0], [1], [0, 0, 1, 1], [], []>} : vector<8x256xbf16>, vector<256x256xbf16>, vector<8x256xf32> -> vector<8x256xf32>
    %23 = arith.truncf %18 : vector<8x256xf32> to vector<8x256xbf16>
    %c0_16 = arith.constant 0 : index
    %c0_17 = arith.constant 0 : index
    %24 = vector.load %arg8[%c0_16, %c0_17] : memref<256x256xbf16, #tpu.memory_space<vmem>>, vector<256x256xbf16>
    %cst_18 = arith.constant dense<0.000000e+00> : vector<8x256xf32>
    %25 = tpu.matmul %23, %24, %cst_18 {dimension_numbers = #tpu.dot_dimension_numbers<[1], [0], [0], [1], [0, 0, 1, 1], [], []>} : vector<8x256xbf16>, vector<256x256xbf16>, vector<8x256xf32> -> vector<8x256xf32>
    %26 = arith.addf %22, %25 : vector<8x256xf32>
    %c0_19 = arith.constant 0 : index
    %c0_20 = arith.constant 0 : index
    %27 = vector.load %arg9[%c0_19, %c0_20] : memref<1x256xf32, #tpu.memory_space<vmem>>, vector<1x256xf32>
    %28 = vector.shape_cast %27 : vector<1x256xf32> to vector<256xf32>
    %29 = vector.shape_cast %28 : vector<256xf32> to vector<1x256xf32>
    %30 = vector.broadcast %29 : vector<1x256xf32> to vector<8x256xf32>
    %31 = arith.addf %26, %30 : vector<8x256xf32>
    %cst_21 = arith.constant 0.000000e+00 : f32
    %32 = vector.broadcast %cst_21 : f32 to vector<8x256xf32>
    %33 = arith.maximumf %31, %32 : vector<8x256xf32>
    %34 = arith.truncf %33 : vector<8x256xf32> to vector<8x256xbf16>
    %c0_22 = arith.constant 0 : index
    %c0_23 = arith.constant 0 : index
    %35 = vector.load %arg10[%c0_22, %c0_23] : memref<256x1024xbf16, #tpu.memory_space<vmem>>, vector<256x1024xbf16>
    %cst_24 = arith.constant dense<0.000000e+00> : vector<8x1024xf32>
    %36 = tpu.matmul %34, %35, %cst_24 {dimension_numbers = #tpu.dot_dimension_numbers<[1], [0], [0], [1], [0, 0, 1, 1], [], []>} : vector<8x256xbf16>, vector<256x1024xbf16>, vector<8x1024xf32> -> vector<8x1024xf32>
    %c0_25 = arith.constant 0 : index
    %c0_26 = arith.constant 0 : index
    %37 = vector.load %arg11[%c0_25, %c0_26] : memref<1x1024xf32, #tpu.memory_space<vmem>>, vector<1x1024xf32>
    %38 = vector.shape_cast %37 : vector<1x1024xf32> to vector<1024xf32>
    %39 = vector.shape_cast %38 : vector<1024xf32> to vector<1x1024xf32>
    %40 = vector.broadcast %39 : vector<1x1024xf32> to vector<8x1024xf32>
    %41 = arith.addf %36, %40 : vector<8x1024xf32>
    %c0_27 = arith.constant 0 : index
    %c0_28 = arith.constant 0 : index
    %42 = vector.load %arg12[%c0_27, %c0_28] : memref<8x1024xf32, #tpu.memory_space<vmem>>, vector<8x1024xf32>
    tpu.vector_store %arg12[%c0_27, %c0_28], %41 {strides = array<i32>} : memref<8x1024xf32, #tpu.memory_space<vmem>>, vector<8x1024xf32>,
    return
  }
  func.func @transform_0(%arg0: i32) -> (i32, i32) {
    %c0_i32 = arith.constant 0 : i32
    %c0_i32_0 = arith.constant 0 : i32
    %c0_i32_1 = arith.constant 0 : i32
    return %c0_i32, %c0_i32_0 : i32, i32
  }
  func.func @transform_1(%arg0: i32) -> (i32, i32) {
    %c0_i32 = arith.constant 0 : i32
    %c0_i32_0 = arith.constant 0 : i32
    %c0_i32_1 = arith.constant 0 : i32
    return %c0_i32, %c0_i32_0 : i32, i32
  }
  func.func @transform_2(%arg0: i32) -> (i32, i32) {
    %c0_i32 = arith.constant 0 : i32
    %c0_i32_0 = arith.constant 0 : i32
    %c0_i32_1 = arith.constant 0 : i32
    return %c0_i32, %c0_i32_0 : i32, i32
  }
  func.func @transform_3(%arg0: i32) -> (i32, i32) {
    %c0_i32 = arith.constant 0 : i32
    %c0_i32_0 = arith.constant 0 : i32
    %c0_i32_1 = arith.constant 0 : i32
    return %c0_i32, %c0_i32_0 : i32, i32
  }
  func.func @transform_4(%arg0: i32) -> (i32, i32) {
    %c0_i32 = arith.constant 0 : i32
    %c0_i32_0 = arith.constant 0 : i32
    %c0_i32_1 = arith.constant 0 : i32
    return %c0_i32, %c0_i32_0 : i32, i32
  }
  func.func @transform_5(%arg0: i32) -> (i32, i32) {
    %c0_i32 = arith.constant 0 : i32
    %c0_i32_0 = arith.constant 0 : i32
    %c0_i32_1 = arith.constant 0 : i32
    return %c0_i32, %c0_i32_0 : i32, i32
  }
  func.func @transform_6(%arg0: i32) -> (i32, i32) {
    %c0_i32 = arith.constant 0 : i32
    %c0_i32_0 = arith.constant 0 : i32
    %c0_i32_1 = arith.constant 0 : i32
    return %c0_i32, %c0_i32_0 : i32, i32
  }
  func.func @transform_7(%arg0: i32) -> (i32, i32) {
    %c0_i32 = arith.constant 0 : i32
    %c0_i32_0 = arith.constant 0 : i32
    %c0_i32_1 = arith.constant 0 : i32
    return %c0_i32, %c0_i32_0 : i32, i32
  }
  func.func @transform_8(%arg0: i32) -> (i32, i32) {
    %c0_i32 = arith.constant 0 : i32
    %c0_i32_0 = arith.constant 0 : i32
    %c0_i32_1 = arith.constant 0 : i32
    return %c0_i32, %c0_i32_0 : i32, i32
  }
  func.func @transform_9(%arg0: i32) -> (i32, i32) {
    %c0_i32 = arith.constant 0 : i32
    %c0_i32_0 = arith.constant 0 : i32
    %c0_i32_1 = arith.constant 0 : i32
    return %c0_i32, %c0_i32_0 : i32, i32
  }
  func.func @transform_10(%arg0: i32) -> (i32, i32) {
    %c0_i32 = arith.constant 0 : i32
    %c0_i32_0 = arith.constant 0 : i32
    %c0_i32_1 = arith.constant 0 : i32
    return %c0_i32, %c0_i32_0 : i32, i32
  }
  func.func @transform_11(%arg0: i32) -> (i32, i32) {
    %c0_i32 = arith.constant 0 : i32
    %c0_i32_0 = arith.constant 0 : i32
    %c0_i32_1 = arith.constant 0 : i32
    return %c0_i32, %c0_i32_0 : i32, i32
  }
}

module attributes {stable_mosaic.version = 11 : i64} {
  func.func @_sa3_pool_kernel(%arg0: i32, %arg1: memref<1x8x256xbf16, #tpu.memory_space<vmem>>, %arg2: memref<256x256xbf16, #tpu.memory_space<vmem>>, %arg3: memref<1x256xf32, #tpu.memory_space<vmem>>, %arg4: memref<256x256xbf16, #tpu.memory_space<vmem>>, %arg5: memref<1x256xf32, #tpu.memory_space<vmem>>, %arg6: memref<1x1x256xf32, #tpu.memory_space<vmem>>) attributes {dimension_semantics = [#tpu.dimension_semantics<parallel>], iteration_bounds = array<i64: 2>, scalar_prefetch = 0 : i64, scratch_operands = 0 : i64, tpu.core_type = #tpu.core_type<tc>, window_params = [{transform_indices = @transform_0, window_bounds = array<i64: 1, 8, 256>}, {pipeline_mode = #tpu.pipeline_mode<synchronous>, transform_indices = @transform_1, window_bounds = array<i64: 256, 256>}, {pipeline_mode = #tpu.pipeline_mode<synchronous>, transform_indices = @transform_2, window_bounds = array<i64: 1, 256>}, {pipeline_mode = #tpu.pipeline_mode<synchronous>, transform_indices = @transform_3, window_bounds = array<i64: 256, 256>}, {pipeline_mode = #tpu.pipeline_mode<synchronous>, transform_indices = @transform_4, window_bounds = array<i64: 1, 256>}, {transform_indices = @transform_5, window_bounds = array<i64: 1, 1, 256>}]} {
    %c0 = arith.constant 0 : index
    %c0_0 = arith.constant 0 : index
    %c0_1 = arith.constant 0 : index
    %0 = vector.load %arg1[%c0, %c0_0, %c0_1] : memref<1x8x256xbf16, #tpu.memory_space<vmem>>, vector<1x8x256xbf16>
    %1 = vector.shape_cast %0 : vector<1x8x256xbf16> to vector<8x256xbf16>
    %c0_2 = arith.constant 0 : index
    %c0_3 = arith.constant 0 : index
    %2 = vector.load %arg2[%c0_2, %c0_3] : memref<256x256xbf16, #tpu.memory_space<vmem>>, vector<256x256xbf16>
    %cst = arith.constant dense<0.000000e+00> : vector<8x256xf32>
    %3 = tpu.matmul %1, %2, %cst {dimension_numbers = #tpu.dot_dimension_numbers<[1], [0], [0], [1], [0, 0, 1, 1], [], []>} : vector<8x256xbf16>, vector<256x256xbf16>, vector<8x256xf32> -> vector<8x256xf32>
    %c0_4 = arith.constant 0 : index
    %c0_5 = arith.constant 0 : index
    %4 = vector.load %arg3[%c0_4, %c0_5] : memref<1x256xf32, #tpu.memory_space<vmem>>, vector<1x256xf32>
    %5 = vector.shape_cast %4 : vector<1x256xf32> to vector<256xf32>
    %6 = vector.shape_cast %5 : vector<256xf32> to vector<1x256xf32>
    %7 = vector.broadcast %6 : vector<1x256xf32> to vector<8x256xf32>
    %8 = arith.addf %3, %7 : vector<8x256xf32>
    %cst_6 = arith.constant 0.000000e+00 : f32
    %9 = vector.broadcast %cst_6 : f32 to vector<8x256xf32>
    %10 = arith.maximumf %8, %9 : vector<8x256xf32>
    %11 = arith.truncf %10 : vector<8x256xf32> to vector<8x256xbf16>
    %c0_7 = arith.constant 0 : index
    %c0_8 = arith.constant 0 : index
    %12 = vector.load %arg4[%c0_7, %c0_8] : memref<256x256xbf16, #tpu.memory_space<vmem>>, vector<256x256xbf16>
    %cst_9 = arith.constant dense<0.000000e+00> : vector<8x256xf32>
    %13 = tpu.matmul %11, %12, %cst_9 {dimension_numbers = #tpu.dot_dimension_numbers<[1], [0], [0], [1], [0, 0, 1, 1], [], []>} : vector<8x256xbf16>, vector<256x256xbf16>, vector<8x256xf32> -> vector<8x256xf32>
    %c0_10 = arith.constant 0 : index
    %c0_11 = arith.constant 0 : index
    %14 = vector.load %arg5[%c0_10, %c0_11] : memref<1x256xf32, #tpu.memory_space<vmem>>, vector<1x256xf32>
    %15 = vector.shape_cast %14 : vector<1x256xf32> to vector<256xf32>
    %16 = vector.shape_cast %15 : vector<256xf32> to vector<1x256xf32>
    %17 = vector.broadcast %16 : vector<1x256xf32> to vector<8x256xf32>
    %18 = arith.addf %13, %17 : vector<8x256xf32>
    %19 = tpu.iota {dimensions = array<i32: 0>} : vector<8x256xi32>
    %c4_i32 = arith.constant 4 : i32
    %20 = vector.broadcast %c4_i32 : i32 to vector<8x256xi32>
    %21 = arith.cmpi slt, %19, %20 : vector<8x256xi32>
    %cst_12 = arith.constant 0xFF800000 : f32
    %22 = vector.broadcast %cst_12 : f32 to vector<8x256xf32>
    %23 = arith.select %21, %18, %22 : vector<8x256xi1>, vector<8x256xf32>
    %cst_13 = arith.constant dense<0xFF800000> : vector<256xf32>
    %24 = vector.multi_reduction <maximumf>, %23, %cst_13 [0] : vector<8x256xf32> to vector<256xf32>
    %25 = vector.shape_cast %24 : vector<256xf32> to vector<1x256xf32>
    %c0_14 = arith.constant 0 : index
    %c0_15 = arith.constant 0 : index
    %c0_16 = arith.constant 0 : index
    %26 = vector.load %arg6[%c0_14, %c0_15, %c0_16] : memref<1x1x256xf32, #tpu.memory_space<vmem>>, vector<1x1x256xf32>
    %27 = vector.shape_cast %26 : vector<1x1x256xf32> to vector<1x256xf32>
    %28 = vector.shape_cast %25 : vector<1x256xf32> to vector<1x1x256xf32>
    tpu.vector_store %arg6[%c0_14, %c0_15, %c0_16], %28 {strides = array<i32>} : memref<1x1x256xf32, #tpu.memory_space<vmem>>, vector<1x1x256xf32>,
    return
  }
  func.func @transform_0(%arg0: i32) -> (i32, i32, i32) {
    %c0_i32 = arith.constant 0 : i32
    %c0_i32_0 = arith.constant 0 : i32
    %c0_i32_1 = arith.constant 0 : i32
    return %arg0, %c0_i32, %c0_i32_0 : i32, i32, i32
  }
  func.func @transform_1(%arg0: i32) -> (i32, i32) {
    %c0_i32 = arith.constant 0 : i32
    %c0_i32_0 = arith.constant 0 : i32
    %c0_i32_1 = arith.constant 0 : i32
    return %c0_i32, %c0_i32_0 : i32, i32
  }
  func.func @transform_2(%arg0: i32) -> (i32, i32) {
    %c0_i32 = arith.constant 0 : i32
    %c0_i32_0 = arith.constant 0 : i32
    %c0_i32_1 = arith.constant 0 : i32
    return %c0_i32, %c0_i32_0 : i32, i32
  }
  func.func @transform_3(%arg0: i32) -> (i32, i32) {
    %c0_i32 = arith.constant 0 : i32
    %c0_i32_0 = arith.constant 0 : i32
    %c0_i32_1 = arith.constant 0 : i32
    return %c0_i32, %c0_i32_0 : i32, i32
  }
  func.func @transform_4(%arg0: i32) -> (i32, i32) {
    %c0_i32 = arith.constant 0 : i32
    %c0_i32_0 = arith.constant 0 : i32
    %c0_i32_1 = arith.constant 0 : i32
    return %c0_i32, %c0_i32_0 : i32, i32
  }
  func.func @transform_5(%arg0: i32) -> (i32, i32, i32) {
    %c0_i32 = arith.constant 0 : i32
    %c0_i32_0 = arith.constant 0 : i32
    %c0_i32_1 = arith.constant 0 : i32
    return %arg0, %c0_i32, %c0_i32_0 : i32, i32, i32
  }
}

</mosaic_0001>

<llo_original>
// kernel: custom-call.16
$region0: #{custom-call.16}
  %s0 = inlined_call_operand.vmem [shape: f32[2,32], index: 0, kind: output, shape index: {}]

// kernel: custom-call.17
$region0: #{custom-call.17}
  %s0 = inlined_call_operand.vmem [shape: f32[2,16], index: 0, kind: output, shape index: {}]

// kernel: pointnet2_forward.4
$region0: #{pointnet2_forward.4}
  #allocation0 [shape = 'u32[]', space=smem, size = 0x4, offset = 0x4, fixed_abs, tag = 'smem constant byte address 0x4 - core index']
  #allocation1 [shape = 'u32[144,128]{1,0:T(1,128)}', space=vmem, size = 0x12000, scoped, tag = 'internal scratch']
  %s0 = inlined_call_operand.hbm [shape: bf16[32,32,8], index: 0, kind: input, shape index: {}]
  %s1 = inlined_call_operand.hbm [shape: bf16[8,128], index: 1, kind: input, shape index: {}]
  %s2 = inlined_call_operand.hbm [shape: f32[1,128], index: 2, kind: input, shape index: {}]
  %s3 = inlined_call_operand.hbm [shape: bf16[128,128], index: 3, kind: input, shape index: {}]
  %s4 = inlined_call_operand.hbm [shape: f32[1,128], index: 4, kind: input, shape index: {}]
  %s5 = inlined_call_operand.hbm [shape: bf16[32,128], index: 5, kind: output, shape index: {}]
  %s6 = sld [smem:[#allocation0]]
  $region73: #{pointnet2_forward.4} parent=0
    _
  %s8 = ssub.s32 1, %s6
  %s9 = scalar_select 0, %s8, %s6
  $region1: #{pointnet2_forward.4} parent=0
    #allocation2 [shape = 'u8[262144]{0}', space=vmem, size = 0x40000, scoped, tag = 'input window, operand 0']
    #allocation3 [shape = 's32[2]{0}', space=sflag, size = 0x8, scoped, tag = 'scoped memory for pointnet2_forward.4']
    #allocation4 [shape = 's32[2]{0}', space=sflag, size = 0x8, scoped, tag = 'scoped memory for pointnet2_forward.4']
    #allocation5 [shape = 'u8[2048]{0}', space=vmem, size = 0x800, scoped, tag = 'input window, operand 1, single buffered']
    #allocation6 [shape = 's32[1]{0}', space=sflag, size = 0x4, scoped, tag = 'scoped memory for pointnet2_forward.4']
    #allocation7 [shape = 'u8[512]{0}', space=vmem, size = 0x400, scoped, tag = 'input window, operand 2, single buffered']
    #allocation8 [shape = 'u8[32768]{0}', space=vmem, size = 0x8000, scoped, tag = 'input window, operand 3, single buffered']
    #allocation9 [shape = 's32[1]{0}', space=sflag, size = 0x4, scoped, tag = 'scoped memory for pointnet2_forward.4']
    #allocation10 [shape = 'u8[512]{0}', space=vmem, size = 0x400, scoped, tag = 'input window, operand 4, single buffered']
    #allocation11 [shape = 'u8[8192]{0}', space=vmem, size = 0x2000, scoped, tag = 'output window, operand 0']
    %10 = vsyncpa [#allocation3], 0
    %s11 = scalar_lea.sflag [#allocation3], 1
    %12 = vsyncpa %s11, 0
    %13 = vsyncpa [#allocation6], 0
    %14 = vsyncpa [#allocation9], 0
    %15 = vsyncpa [#allocation4], 0
    %s16 = scalar_lea.sflag [#allocation4], 1
    %17 = vsyncpa %s16, 0
    loop: start=0, step=1, limit=4
    $region2: #{pointnet2_forward.4} parent=1 // loop_pre_header
      _
    $region3: #{pointnet2_forward.4} parent=1 // loop_header
      %s19 = sphi 0, %s23
      %p20 = scmp.ge.s32.totalorder %s19, 4
      %s29 = sphi 0, %s31
      %s32 = sphi 0, %s29
      %s33 = sphi 0, %s32
      %s49 = sphi 0, %s33
      %s53 = sphi 0, %s53
      %s55 = sphi 0, %s53
      %s56 = sphi 0, %s55
      %s70 = sphi 0, %s56
      %s74 = sphi 0, %s74
      %s76 = sphi 0, %s74
      %s77 = sphi 0, %s76
      %s91 = sphi 0, %s77
      %s95 = sphi 0, %s95
      %s97 = sphi 0, %s95
      %s98 = sphi 0, %s97
      %s112 = sphi 0, %s98
      %s116 = sphi 0, %s116
      %s118 = sphi 0, %s116
      %s119 = sphi 0, %s118
      %s133 = sphi 0, %s119
      %s139 = sphi 0, %s141
      %s142 = sphi 0, %s139
      %s143 = sphi 0, %s142
      %s159 = sphi 0, %s143
    $region4: #{pointnet2_forward.4} parent=1 // loop_header_branch
      %22 = sbr.rel (%p20) target = $region8
    $region5: #{pointnet2_forward.4} parent=1 // loop_body
      %s24 = ssub.s32 %s19, 1
      %s25 = ssub.s32 %s19, 2
      %s26 = sadd.s32 %s19, 1
      %s27 = ssub.s32 %s19, %s26
      %p28 = scmp.eq.s32.totalorder %s27, 0
      %s30 = sadd.s32 %s29, 1
      %s31 = scalar_select %p28, %s29, %s30
      %p34 = pneg %p28
      %p35 = scmp.eq.s32.totalorder %s19, 1
      %p36 = por %p34, %p35
      %p37 = scmp.ne.s32.totalorder %s29, %s32
      %p38 = scmp.eq.s32.totalorder %s19, 0
      %p39 = por %p37, %p38
      %p40 = scmp.ne.s32.totalorder %s29, %s32
      %p41 = scmp.eq.s32.totalorder %s24, 1
      %p42 = por %p40, %p41
      %p43 = scmp.ne.s32.totalorder %s32, %s33
      %p44 = scmp.eq.s32.totalorder %s24, 0
      %p45 = por %p43, %p44
      %p46 = scmp.ne.s32.totalorder %s32, %s33
      %p47 = scmp.eq.s32.totalorder %s25, 1
      %p48 = por %p46, %p47
      %p50 = scmp.ne.s32.totalorder %s33, %s49
      %p51 = scmp.eq.s32.totalorder %s25, 0
      %p52 = por %p50, %p51
      %s54 = sadd.s32 %s53, 1
      %p57 = scmp.eq.s32.totalorder %s19, 1
      %p58 = scmp.ne.s32.totalorder %s53, %s55
      %p59 = scmp.eq.s32.totalorder %s19, 0
      %p60 = por %p58, %p59
      %p61 = scmp.ne.s32.totalorder %s53, %s55
      %p62 = scmp.eq.s32.totalorder %s24, 1
      %p63 = por %p61, %p62
      %p64 = scmp.ne.s32.totalorder %s55, %s56
      %p65 = scmp.eq.s32.totalorder %s24, 0
      %p66 = por %p64, %p65
      %p67 = scmp.ne.s32.totalorder %s55, %s56
      %p68 = scmp.eq.s32.totalorder %s25, 1
      %p69 = por %p67, %p68
      %p71 = scmp.ne.s32.totalorder %s56, %s70
      %p72 = scmp.eq.s32.totalorder %s25, 0
      %p73 = por %p71, %p72
      %s75 = sadd.s32 %s74, 1
      %p78 = scmp.eq.s32.totalorder %s19, 1
      %p79 = scmp.ne.s32.totalorder %s74, %s76
      %p80 = scmp.eq.s32.totalorder %s19, 0
      %p81 = por %p79, %p80
      %p82 = scmp.ne.s32.totalorder %s74, %s76
      %p83 = scmp.eq.s32.totalorder %s24, 1
      %p84 = por %p82, %p83
      %p85 = scmp.ne.s32.totalorder %s76, %s77
      %p86 = scmp.eq.s32.totalorder %s24, 0
      %p87 = por %p85, %p86
      %p88 = scmp.ne.s32.totalorder %s76, %s77
      %p89 = scmp.eq.s32.totalorder %s25, 1
      %p90 = por %p88, %p89
      %p92 = scmp.ne.s32.totalorder %s77, %s91
      %p93 = scmp.eq.s32.totalorder %s25, 0
      %p94 = por %p92, %p93
      %s96 = sadd.s32 %s95, 1
      %p99 = scmp.eq.s32.totalorder %s19, 1
      %p100 = scmp.ne.s32.totalorder %s95, %s97
      %p101 = scmp.eq.s32.totalorder %s19, 0
      %p102 = por %p100, %p101
      %p103 = scmp.ne.s32.totalorder %s95, %s97
      %p104 = scmp.eq.s32.totalorder %s24, 1
      %p105 = por %p103, %p104
      %p106 = scmp.ne.s32.totalorder %s97, %s98
      %p107 = scmp.eq.s32.totalorder %s24, 0
      %p108 = por %p106, %p107
      %p109 = scmp.ne.s32.totalorder %s97, %s98
      %p110 = scmp.eq.s32.totalorder %s25, 1
      %p111 = por %p109, %p110
      %p113 = scmp.ne.s32.totalorder %s98, %s112
      %p114 = scmp.eq.s32.totalorder %s25, 0
      %p115 = por %p113, %p114
      %s117 = sadd.s32 %s116, 1
      %p120 = scmp.eq.s32.totalorder %s19, 1
      %p121 = scmp.ne.s32.totalorder %s116, %s118
      %p122 = scmp.eq.s32.totalorder %s19, 0
      %p123 = por %p121, %p122
      %p124 = scmp.ne.s32.totalorder %s116, %s118
      %p125 = scmp.eq.s32.totalorder %s24, 1
      %p126 = por %p124, %p125
      %p127 = scmp.ne.s32.totalorder %s118, %s119
      %p128 = scmp.eq.s32.totalorder %s24, 0
      %p129 = por %p127, %p128
      %p130 = scmp.ne.s32.totalorder %s118, %s119
      %p131 = scmp.eq.s32.totalorder %s25, 1
      %p132 = por %p130, %p131
      %p134 = scmp.ne.s32.totalorder %s119, %s133
      %p135 = scmp.eq.s32.totalorder %s25, 0
      %p136 = por %p134, %p135
      %s137 = ssub.s32 %s19, %s26
      %p138 = scmp.eq.s32.totalorder %s137, 0
      %s140 = sadd.s32 %s139, 1
      %s141 = scalar_select %p138, %s139, %s140
      %p144 = pneg %p138
      %p145 = scmp.eq.s32.totalorder %s19, 1
      %p146 = por %p144, %p145
      %p147 = scmp.ne.s32.totalorder %s139, %s142
      %p148 = scmp.eq.s32.totalorder %s19, 0
      %p149 = por %p147, %p148
      %p150 = scmp.ne.s32.totalorder %s139, %s142
      %p151 = scmp.eq.s32.totalorder %s24, 1
      %p152 = por %p150, %p151
      %p153 = scmp.ne.s32.totalorder %s142, %s143
      %p154 = scmp.eq.s32.totalorder %s24, 0
      %p155 = por %p153, %p154
      %p156 = scmp.ne.s32.totalorder %s142, %s143
      %p157 = scmp.eq.s32.totalorder %s25, 1
      %p158 = por %p156, %p157
      %p160 = scmp.ne.s32.totalorder %s143, %s159
      %p161 = scmp.eq.s32.totalorder %s25, 0
      %p162 = por %p160, %p161
      %p163 = scmp.le.s32.totalorder 1, %s19
      %p164 = scmp.lt.s32.totalorder %s19, 3
      %p165 = pnand %p163, %p164
      %p166 = pneg %p165
      // Predicated region
      $region9: #{pointnet2_forward.4} parent=5 // pred_check
        _
      $region10: #{pointnet2_forward.4} parent=5 // pred_check_branch
        %168 = sbr.rel (%p165) target = $region12
      $region11: #{pointnet2_forward.4} parent=5 // pred_region
        %s169 = ssub.s32 %s19, 1
        // Predicated region
        $region13: #{pointnet2_forward.4} parent=11 // pred_check
          %p170 = pneg %p66
        $region14: #{pointnet2_forward.4} parent=11 // pred_check_branch
          %172 = sbr.rel (%p170) target = $region16
        $region15: #{pointnet2_forward.4} parent=11 // pred_region
          %s174 = ssub.s32 64, 64
          %175 = vsyncadd [#allocation6], %s174
          %s177 = sshll.u32 [#allocation5], 4
          %s178 = int_to_ptr.vmem [resolvable:$true] %s177
          %180 = dma.hbm_to_vmem [thread:$0]  %s1, 64, %s178, [#allocation6]
        $region16: #{pointnet2_forward.4} parent=11 // pred_fallthru
          _
        // Predicated region
        $region17: #{pointnet2_forward.4} parent=11 // pred_check
          %p181 = pneg %p87
        $region18: #{pointnet2_forward.4} parent=11 // pred_check_branch
          %183 = sbr.rel (%p181) target = $region20
        $region19: #{pointnet2_forward.4} parent=11 // pred_region
          %s185 = ssub.s32 16, 16
          %186 = vsyncadd [#allocation6], %s185
          %s188 = sshll.u32 [#allocation7], 4
          %s189 = int_to_ptr.vmem [resolvable:$true] %s188
          %191 = dma.hbm_to_vmem [thread:$0]  %s2, 16, %s189, [#allocation6]
        $region20: #{pointnet2_forward.4} parent=11 // pred_fallthru
          _
        // Predicated region
        $region21: #{pointnet2_forward.4} parent=11 // pred_check
          %p192 = pneg %p108
        $region22: #{pointnet2_forward.4} parent=11 // pred_check_branch
          %194 = sbr.rel (%p192) target = $region24
        $region23: #{pointnet2_forward.4} parent=11 // pred_region
          %s196 = ssub.s32 1024, 1024
          %197 = vsyncadd [#allocation9], %s196
          %s198 = sshll.u32 [#allocation8], 4
          %s199 = int_to_ptr.vmem [resolvable:$true] %s198
          %204 = dma.hbm_to_vmem [thread:$0]  %s3, 1024, %s199, [#allocation9], 64, 64, 4
        $region24: #{pointnet2_forward.4} parent=11 // pred_fallthru
          _
        // Predicated region
        $region25: #{pointnet2_forward.4} parent=11 // pred_check
          %p205 = pneg %p129
        $region26: #{pointnet2_forward.4} parent=11 // pred_check_branch
          %207 = sbr.rel (%p205) target = $region28
        $region27: #{pointnet2_forward.4} parent=11 // pred_region
          %s209 = ssub.s32 16, 16
          %210 = vsyncadd [#allocation9], %s209
          %s212 = sshll.u32 [#allocation10], 4
          %s213 = int_to_ptr.vmem [resolvable:$true] %s212
          %215 = dma.hbm_to_vmem [thread:$0]  %s4, 16, %s213, [#allocation9]
        $region28: #{pointnet2_forward.4} parent=11 // pred_fallthru
          _
      $region12: #{pointnet2_forward.4} parent=5 // pred_fallthru
        _
      %p216 = scmp.lt.s32.totalorder %s19, 2
      // Predicated region
      $region29: #{pointnet2_forward.4} parent=5 // pred_check
        %p217 = pneg %p216
      $region30: #{pointnet2_forward.4} parent=5 // pred_check_branch
        %219 = sbr.rel (%p217) target = $region32
      $region31: #{pointnet2_forward.4} parent=5 // pred_region
        // Predicated region
        $region33: #{pointnet2_forward.4} parent=31 // pred_check
          %p220 = pneg %p39
        $region34: #{pointnet2_forward.4} parent=31 // pred_check_branch
          %222 = sbr.rel (%p220) target = $region36
        $region35: #{pointnet2_forward.4} parent=31 // pred_region
          %s223 = sand.u32 %s29, 1
          %s224 = scalar_lea.sflag [#allocation3], %s223
          %s225 = sand.u32 %s29, 1
          %s226 = smul.addr %s225, 256
          %s227 = scalar_lea.vmem [#allocation2], %s226
          %s228 = smul.u32 16, %s19
          %s230 = ssub.s32 4096, 4096
          %231 = vsyncadd %s224, %s230
          %s232 = smul.addr %s228, 4
          %s233 = smul.addr %s232, 64
          %s234 = scalar_lea.hbm %s0, %s233
          %s235 = sshll.u32 %s227, 4
          %s236 = int_to_ptr.vmem [resolvable:$true] %s235
          %241 = dma.hbm_to_vmem [thread:$0]  %s234, 4096, %s236, %s224, 64, 64, 4
        $region36: #{pointnet2_forward.4} parent=31 // pred_fallthru
          _
      $region32: #{pointnet2_forward.4} parent=5 // pred_fallthru
        _
      %p242 = scmp.le.s32.totalorder 1, %s19
      %p243 = scmp.lt.s32.totalorder %s19, 3
      %p244 = pnand %p242, %p243
      %p245 = pneg %p244
      // Predicated region
      $region37: #{pointnet2_forward.4} parent=5 // pred_check
        _
      $region38: #{pointnet2_forward.4} parent=5 // pred_check_branch
        %247 = sbr.rel (%p244) target = $region40
      $region39: #{pointnet2_forward.4} parent=5 // pred_region
        %s248 = ssub.s32 %s19, 1
        %s249 = sand.u32 %s32, 1
        %s250 = scalar_lea.sflag [#allocation3], %s249
        %s251 = sand.u32 %s32, 1
        %s252 = smul.addr %s251, 256
        %s253 = scalar_lea.vmem [#allocation2], %s252
        // Predicated region
        $region41: #{pointnet2_forward.4} parent=39 // pred_check
          %p254 = pneg %p45
        $region42: #{pointnet2_forward.4} parent=39 // pred_check_branch
          %256 = sbr.rel (%p254) target = $region44
        $region43: #{pointnet2_forward.4} parent=39 // pred_region
          %257 = dma.done %s250, 4096
        $region44: #{pointnet2_forward.4} parent=39 // pred_fallthru
          _
        // Predicated region
        $region45: #{pointnet2_forward.4} parent=39 // pred_check
          %p258 = pneg %p66
        $region46: #{pointnet2_forward.4} parent=39 // pred_check_branch
          %260 = sbr.rel (%p258) target = $region48
        $region47: #{pointnet2_forward.4} parent=39 // pred_region
          %261 = dma.done [#allocation6], 64
        $region48: #{pointnet2_forward.4} parent=39 // pred_fallthru
          _
        // Predicated region
        $region49: #{pointnet2_forward.4} parent=39 // pred_check
          %p262 = pneg %p87
        $region50: #{pointnet2_forward.4} parent=39 // pred_check_branch
          %264 = sbr.rel (%p262) target = $region52
        $region51: #{pointnet2_forward.4} parent=39 // pred_region
          %265 = dma.done [#allocation6], 16
        $region52: #{pointnet2_forward.4} parent=39 // pred_fallthru
          _
        // Predicated region
        $region53: #{pointnet2_forward.4} parent=39 // pred_check
          %p266 = pneg %p108
        $region54: #{pointnet2_forward.4} parent=39 // pred_check_branch
          %268 = sbr.rel (%p266) target = $region56
        $region55: #{pointnet2_forward.4} parent=39 // pred_region
          %269 = dma.done [#allocation9], 1024
        $region56: #{pointnet2_forward.4} parent=39 // pred_fallthru
          _
        // Predicated region
        $region57: #{pointnet2_forward.4} parent=39 // pred_check
          %p270 = pneg %p129
        $region58: #{pointnet2_forward.4} parent=39 // pred_check_branch
          %272 = sbr.rel (%p270) target = $region60
        $region59: #{pointnet2_forward.4} parent=39 // pred_region
          %273 = dma.done [#allocation9], 16
        $region60: #{pointnet2_forward.4} parent=39 // pred_fallthru
          _
        %s274 = sand.u32 %s32, 1
        %s275 = scalar_lea.sflag [#allocation3], %s274
        %s276 = sand.u32 %s32, 1
        %s277 = smul.addr %s276, 256
        %s278 = scalar_lea.vmem [#allocation2], %s277
        %p279 = pneg %p45
        %p280 = pneg %p42
        %p281 = pneg %p66
        %p282 = pneg %p63
        %p283 = pneg %p87
        %p284 = pneg %p84
        %p285 = pneg %p108
        %p286 = pneg %p105
        %p287 = pneg %p129
        %p288 = pneg %p126
        %p289 = pneg %p155
        %p290 = pneg %p152
        %s291 = sand.u32 %s142, 1
        %s292 = scalar_lea.sflag [#allocation4], %s291
        %s293 = sand.u32 %s142, 1
        %s294 = smul.addr %s293, 8
        %s295 = scalar_lea.vmem [#allocation11], %s294
        %s296 = smul.u32 16, %s24
        %s297 = smul.u32 2, %s24
        %v299 = vld [vmem:[#allocation5] sm:$0xf]
        %v300 = vld [vmem:[#allocation7] sm:$0x1]
        %v301 = vld [vmem:[#allocation8] sm:$0xf]
        %v302 = vld [vmem:[#allocation8 + $0x4] sm:$0xf]
        %v303 = vld [vmem:[#allocation8 + $0x8] sm:$0xf]
        %v304 = vld [vmem:[#allocation8 + $0xc] sm:$0xf]
        %v305 = vld [vmem:[#allocation8 + $0x10] sm:$0xf]
        %v306 = vld [vmem:[#allocation8 + $0x14] sm:$0xf]
        %v307 = vld [vmem:[#allocation8 + $0x18] sm:$0xf]
        %v308 = vld [vmem:[#allocation8 + $0x1c] sm:$0xf]
        %v309 = vld [vmem:[#allocation8 + $0x20] sm:$0xf]
        %v310 = vld [vmem:[#allocation8 + $0x24] sm:$0xf]
        %v311 = vld [vmem:[#allocation8 + $0x28] sm:$0xf]
        %v312 = vld [vmem:[#allocation8 + $0x2c] sm:$0xf]
        %v313 = vld [vmem:[#allocation8 + $0x30] sm:$0xf]
        %v314 = vld [vmem:[#allocation8 + $0x34] sm:$0xf]
        %v315 = vld [vmem:[#allocation8 + $0x38] sm:$0xf]
        %v316 = vld [vmem:[#allocation8 + $0x3c] sm:$0xf]
        %v317 = vld [vmem:[#allocation10] sm:$0x1]
        %v318 = vld [vmem:[%s253] sm:$0xf]
        %v319 = vld [vmem:[%s253 + $0x4] sm:$0xf]
        %v320 = vld [vmem:[%s253 + $0x10] sm:$0xf]
        %v321 = vld [vmem:[%s253 + $0x14] sm:$0xf]
        %v322 = vld [vmem:[%s253 + $0x20] sm:$0xf]
        %v323 = vld [vmem:[%s253 + $0x24] sm:$0xf]
        %v324 = vld [vmem:[%s253 + $0x30] sm:$0xf]
        %v325 = vld [vmem:[%s253 + $0x34] sm:$0xf]
        %v326 = vld [vmem:[%s253 + $0x40] sm:$0xf]
        %v327 = vld [vmem:[%s253 + $0x44] sm:$0xf]
        %v328 = vld [vmem:[%s253 + $0x50] sm:$0xf]
        %v329 = vld [vmem:[%s253 + $0x54] sm:$0xf]
        %v330 = vld [vmem:[%s253 + $0x60] sm:$0xf]
        %v331 = vld [vmem:[%s253 + $0x64] sm:$0xf]
        %v332 = vld [vmem:[%s253 + $0x70] sm:$0xf]
        %v333 = vld [vmem:[%s253 + $0x74] sm:$0xf]
        %v334 = vld [vmem:[%s253 + $0x80] sm:$0xf]
        %v335 = vld [vmem:[%s253 + $0x84] sm:$0xf]
        %v336 = vld [vmem:[%s253 + $0x90] sm:$0xf]
        %v337 = vld [vmem:[%s253 + $0x94] sm:$0xf]
        %v338 = vld [vmem:[%s253 + $0xa0] sm:$0xf]
        %v339 = vld [vmem:[%s253 + $0xa4] sm:$0xf]
        %v340 = vld [vmem:[%s253 + $0xb0] sm:$0xf]
        %v341 = vld [vmem:[%s253 + $0xb4] sm:$0xf]
        %v342 = vld [vmem:[%s253 + $0xc0] sm:$0xf]
        %v343 = vld [vmem:[%s253 + $0xc4] sm:$0xf]
        %v344 = vld [vmem:[%s253 + $0xd0] sm:$0xf]
        %v345 = vld [vmem:[%s253 + $0xd4] sm:$0xf]
        %v346 = vld [vmem:[%s253 + $0xe0] sm:$0xf]
        %v347 = vld [vmem:[%s253 + $0xe4] sm:$0xf]
        %v348 = vld [vmem:[%s253 + $0xf0] sm:$0xf]
        %v349 = vld [vmem:[%s253 + $0xf4] sm:$0xf]
        %v351 = vlaneseq
        %v352 = vshrl.u32 %v351, 7
        %v353 = vsub.s32 0, %v352
        %v354 = vrot.slane %v300, %v353
        %v388 = vunpack.c.l.b16 %v318
        %v389 = vunpack.c.l.b16 %v319
        %v390 = vunpack.c.l.b16 %v320
        %v391 = vunpack.c.l.b16 %v321
        %v392 = vunpack.c.l.b16 %v322
        %v393 = vunpack.c.l.b16 %v323
        %v394 = vunpack.c.l.b16 %v324
        %v395 = vunpack.c.l.b16 %v325
        %v396 = vunpack.c.l.b16 %v326
        %v397 = vunpack.c.l.b16 %v327
        %v398 = vunpack.c.l.b16 %v328
        %v399 = vunpack.c.l.b16 %v329
        %v400 = vunpack.c.l.b16 %v330
        %v401 = vunpack.c.l.b16 %v331
        %v402 = vunpack.c.l.b16 %v332
        %v403 = vunpack.c.l.b16 %v333
        %v404 = vunpack.c.l.b16 %v334
        %v405 = vunpack.c.l.b16 %v335
        %v406 = vunpack.c.l.b16 %v336
        %v407 = vunpack.c.l.b16 %v337
        %v408 = vunpack.c.l.b16 %v338
        %v409 = vunpack.c.l.b16 %v339
        %v410 = vunpack.c.l.b16 %v340
        %v411 = vunpack.c.l.b16 %v341
        %v412 = vunpack.c.l.b16 %v342
        %v413 = vunpack.c.l.b16 %v343
        %v414 = vunpack.c.l.b16 %v344
        %v415 = vunpack.c.l.b16 %v345
        %v416 = vunpack.c.l.b16 %v346
        %v417 = vunpack.c.l.b16 %v347
        %v418 = vunpack.c.l.b16 %v348
        %v419 = vunpack.c.l.b16 %v349
        %v420 = vpack.c.b16 %v389, %v388
        %v421 = vpack.c.b16 %v391, %v390
        %v422 = vpack.c.b16 %v393, %v392
        %v423 = vpack.c.b16 %v395, %v394
        %v424 = vpack.c.b16 %v397, %v396
        %v425 = vpack.c.b16 %v399, %v398
        %v426 = vpack.c.b16 %v401, %v400
        %v427 = vpack.c.b16 %v403, %v402
        %v428 = vpack.c.b16 %v405, %v404
        %v429 = vpack.c.b16 %v407, %v406
        %v430 = vpack.c.b16 %v409, %v408
        %v431 = vpack.c.b16 %v411, %v410
        %v432 = vpack.c.b16 %v413, %v412
        %v433 = vpack.c.b16 %v415, %v414
        %v434 = vpack.c.b16 %v417, %v416
        %v435 = vpack.c.b16 %v419, %v418
        %vm436 = vcmask 64512
        %v438 = vsel %vm436, %v420, 0
        %v441 = vsel %vm436, %v421, 0
        %v444 = vsel %vm436, %v422, 0
        %v447 = vsel %vm436, %v423, 0
        %v450 = vsel %vm436, %v424, 0
        %v453 = vsel %vm436, %v425, 0
        %v456 = vsel %vm436, %v426, 0
        %v459 = vsel %vm436, %v427, 0
        %v462 = vsel %vm436, %v428, 0
        %v465 = vsel %vm436, %v429, 0
        %v468 = vsel %vm436, %v430, 0
        %v471 = vsel %vm436, %v431, 0
        %v474 = vsel %vm436, %v432, 0
        %v477 = vsel %vm436, %v433, 0
        %v480 = vsel %vm436, %v434, 0
        %v483 = vsel %vm436, %v435, 0
        %vm485 = vcmask 1043456
        %v487 = vsel %vm485, %v299, 0
        %489 = vmatprep.subr.bf16.mxu0 0
        %490 = vmatpush1.bf16.msra.mxu0 %v487
        %491 = vmatprep.subr.bf16.mxu0 0
        %492 = vmatpush1.bf16.msra.mxu0 0
        %493 = vmatprep.subr.bf16.mxu0 0
        %494 = vmatpush1.bf16.msra.mxu0 0
        %495 = vmatprep.subr.bf16.mxu0 0
        %496 = vmatpush1.bf16.msra.mxu0 0
        %497 = vmatprep.subr.bf16.mxu0 0
        %498 = vmatpush1.bf16.msra.mxu0 0
        %499 = vmatprep.subr.bf16.mxu0 0
        %500 = vmatpush1.bf16.msra.mxu0 0
        %501 = vmatprep.subr.bf16.mxu0 0
        %502 = vmatpush1.bf16.msra.mxu0 0
        %503 = vmatprep.subr.bf16.mxu0 0
        %504 = vmatpush1.bf16.msra.mxu0 0
        %505 = vmatprep.subr.bf16.mxu0 0
        %506 = vmatpush1.bf16.msra.mxu0 0
        %507 = vmatprep.subr.bf16.mxu0 0
        %508 = vmatpush1.bf16.msra.mxu0 0
        %509 = vmatprep.subr.bf16.mxu0 0
        %510 = vmatpush1.bf16.msra.mxu0 0
        %511 = vmatprep.subr.bf16.mxu0 0
        %512 = vmatpush1.bf16.msra.mxu0 0
        %513 = vmatprep.subr.bf16.mxu0 0
        %514 = vmatpush1.bf16.msra.mxu0 0
        %515 = vmatprep.subr.bf16.mxu0 0
        %516 = vmatpush1.bf16.msra.mxu0 0
        %517 = vmatprep.subr.bf16.mxu0 0
        %518 = vmatpush1.bf16.msra.mxu0 0
        %519 = vmatprep.subr.bf16.mxu0 0
        %520 = vmatpush1.bf16.msra.mxu0 0
        %521 = vmatprep.mubr.bf16.mxu0 0
        %522 = vmatmul.mubr.bf16.gmra.mrb[0].mxu0 %v438
        %v523 = vpop.f32.mrb[0].mxu0
        %v524 = vadd.f32 %v354, %v523
        %v525 = vpop.f32.mrb[0].mxu0
        %v526 = vpop.f32.mrb[0].mxu0
        %v527 = vadd.f32 %v354, %v526
        %v528 = vpop.f32.mrb[0].mxu0
        %529 = vmatprep.mubr.bf16.mxu0 0
        %530 = vmatmul.mubr.bf16.gmra.mrb[0].mxu0 %v441
        %v531 = vpop.f32.mrb[0].mxu0
        %v532 = vadd.f32 %v354, %v531
        %v533 = vpop.f32.mrb[0].mxu0
        %v534 = vpop.f32.mrb[0].mxu0
        %v535 = vadd.f32 %v354, %v534
        %v536 = vpop.f32.mrb[0].mxu0
        %537 = vmatprep.mubr.bf16.mxu0 0
        %538 = vmatmul.mubr.bf16.gmra.mrb[0].mxu0 %v444
        %v539 = vpop.f32.mrb[0].mxu0
        %v540 = vadd.f32 %v354, %v539
        %v541 = vpop.f32.mrb[0].mxu0
        %v542 = vpop.f32.mrb[0].mxu0
        %v543 = vadd.f32 %v354, %v542
        %v544 = vpop.f32.mrb[0].mxu0
        %545 = vmatprep.mubr.bf16.mxu0 0
        %546 = vmatmul.mubr.bf16.gmra.mrb[0].mxu0 %v447
        %v547 = vpop.f32.mrb[0].mxu0
        %v548 = vadd.f32 %v354, %v547
        %v549 = vpop.f32.mrb[0].mxu0
        %v550 = vpop.f32.mrb[0].mxu0
        %v551 = vadd.f32 %v354, %v550
        %v552 = vpop.f32.mrb[0].mxu0
        %553 = vmatprep.mubr.bf16.mxu0 0
        %554 = vmatmul.mubr.bf16.gmra.mrb[0].mxu0 %v450
        %v555 = vpop.f32.mrb[0].mxu0
        %v556 = vadd.f32 %v354, %v555
        %v557 = vpop.f32.mrb[0].mxu0
        %v558 = vpop.f32.mrb[0].mxu0
        %v559 = vadd.f32 %v354, %v558
        %v560 = vpop.f32.mrb[0].mxu0
        %561 = vmatprep.mubr.bf16.mxu0 0
        %562 = vmatmul.mubr.bf16.gmra.mrb[0].mxu0 %v453
        %v563 = vpop.f32.mrb[0].mxu0
        %v564 = vadd.f32 %v354, %v563
        %v565 = vpop.f32.mrb[0].mxu0
        %v566 = vpop.f32.mrb[0].mxu0
        %v567 = vadd.f32 %v354, %v566
        %v568 = vpop.f32.mrb[0].mxu0
        %569 = vmatprep.mubr.bf16.mxu0 0
        %570 = vmatmul.mubr.bf16.gmra.mrb[0].mxu0 %v456
        %v571 = vpop.f32.mrb[0].mxu0
        %v572 = vadd.f32 %v354, %v571
        %v573 = vpop.f32.mrb[0].mxu0
        %v574 = vpop.f32.mrb[0].mxu0
        %v575 = vadd.f32 %v354, %v574
        %v576 = vpop.f32.mrb[0].mxu0
        %577 = vmatprep.mubr.bf16.mxu0 0
        %578 = vmatmul.mubr.bf16.gmra.mrb[0].mxu0 %v459
        %v579 = vpop.f32.mrb[0].mxu0
        %v580 = vadd.f32 %v354, %v579
        %v581 = vpop.f32.mrb[0].mxu0
        %v582 = vpop.f32.mrb[0].mxu0
        %v583 = vadd.f32 %v354, %v582
        %v584 = vpop.f32.mrb[0].mxu0
        %585 = vmatprep.mubr.bf16.mxu0 0
        %586 = vmatmul.mubr.bf16.gmra.mrb[0].mxu0 %v462
        %v587 = vpop.f32.mrb[0].mxu0
        %v588 = vadd.f32 %v354, %v587
        %v589 = vpop.f32.mrb[0].mxu0
        %v590 = vpop.f32.mrb[0].mxu0
        %v591 = vadd.f32 %v354, %v590
        %v592 = vpop.f32.mrb[0].mxu0
        %593 = vmatprep.mubr.bf16.mxu0 0
        %594 = vmatmul.mubr.bf16.gmra.mrb[0].mxu0 %v465
        %v595 = vpop.f32.mrb[0].mxu0
        %v596 = vadd.f32 %v354, %v595
        %v597 = vpop.f32.mrb[0].mxu0
        %v598 = vpop.f32.mrb[0].mxu0
        %v599 = vadd.f32 %v354, %v598
        %v600 = vpop.f32.mrb[0].mxu0
        %601 = vmatprep.mubr.bf16.mxu0 0
        %602 = vmatmul.mubr.bf16.gmra.mrb[0].mxu0 %v468
        %v603 = vpop.f32.mrb[0].mxu0
        %v604 = vadd.f32 %v354, %v603
        %v605 = vpop.f32.mrb[0].mxu0
        %v606 = vpop.f32.mrb[0].mxu0
        %v607 = vadd.f32 %v354, %v606
        %v608 = vpop.f32.mrb[0].mxu0
        %609 = vmatprep.mubr.bf16.mxu0 0
        %610 = vmatmul.mubr.bf16.gmra.mrb[0].mxu0 %v471
        %v611 = vpop.f32.mrb[0].mxu0
        %v612 = vadd.f32 %v354, %v611
        %v613 = vpop.f32.mrb[0].mxu0
        %v614 = vpop.f32.mrb[0].mxu0
        %v615 = vadd.f32 %v354, %v614
        %v616 = vpop.f32.mrb[0].mxu0
        %617 = vmatprep.mubr.bf16.mxu0 0
        %618 = vmatmul.mubr.bf16.gmra.mrb[0].mxu0 %v474
        %v619 = vpop.f32.mrb[0].mxu0
        %v620 = vadd.f32 %v354, %v619
        %v621 = vpop.f32.mrb[0].mxu0
        %v622 = vpop.f32.mrb[0].mxu0
        %v623 = vadd.f32 %v354, %v622
        %v624 = vpop.f32.mrb[0].mxu0
        %625 = vmatprep.mubr.bf16.mxu0 0
        %626 = vmatmul.mubr.bf16.gmra.mrb[0].mxu0 %v477
        %v627 = vpop.f32.mrb[0].mxu0
        %v628 = vadd.f32 %v354, %v627
        %v629 = vpop.f32.mrb[0].mxu0
        %v630 = vpop.f32.mrb[0].mxu0
        %v631 = vadd.f32 %v354, %v630
        %v632 = vpop.f32.mrb[0].mxu0
        %633 = vmatprep.mubr.bf16.mxu0 0
        %634 = vmatmul.mubr.bf16.gmra.mrb[0].mxu0 %v480
        %v635 = vpop.f32.mrb[0].mxu0
        %v636 = vadd.f32 %v354, %v635
        %v637 = vpop.f32.mrb[0].mxu0
        %v638 = vpop.f32.mrb[0].mxu0
        %v639 = vadd.f32 %v354, %v638
        %v640 = vpop.f32.mrb[0].mxu0
        %641 = vmatprep.mubr.bf16.mxu0 0
        %642 = vmatmul.mubr.bf16.gmra.mrb[0].mxu0 %v483
        %v643 = vpop.f32.mrb[0].mxu0
        %v644 = vadd.f32 %v354, %v643
        %v645 = vpop.f32.mrb[0].mxu0
        %v646 = vpop.f32.mrb[0].mxu0
        %v647 = vadd.f32 %v354, %v646
        %v648 = vpop.f32.mrb[0].mxu0
        %649 = vdwg.mxu0
        %v650 = vmax.f32 %v524, 0.0
        %v651 = vmax.f32 %v527, 0.0
        %v652 = vmax.f32 %v532, 0.0
        %v653 = vmax.f32 %v535, 0.0
        %v654 = vmax.f32 %v540, 0.0
        %v655 = vmax.f32 %v543, 0.0
        %v656 = vmax.f32 %v548, 0.0
        %v657 = vmax.f32 %v551, 0.0
        %v658 = vmax.f32 %v556, 0.0
        %v659 = vmax.f32 %v559, 0.0
        %v660 = vmax.f32 %v564, 0.0
        %v661 = vmax.f32 %v567, 0.0
        %v662 = vmax.f32 %v572, 0.0
        %v663 = vmax.f32 %v575, 0.0
        %v664 = vmax.f32 %v580, 0.0
        %v665 = vmax.f32 %v583, 0.0
        %v666 = vmax.f32 %v588, 0.0
        %v667 = vmax.f32 %v591, 0.0
        %v668 = vmax.f32 %v596, 0.0
        %v669 = vmax.f32 %v599, 0.0
        %v670 = vmax.f32 %v604, 0.0
        %v671 = vmax.f32 %v607, 0.0
        %v672 = vmax.f32 %v612, 0.0
        %v673 = vmax.f32 %v615, 0.0
        %v674 = vmax.f32 %v620, 0.0
        %v675 = vmax.f32 %v623, 0.0
        %v676 = vmax.f32 %v628, 0.0
        %v677 = vmax.f32 %v631, 0.0
        %v678 = vmax.f32 %v636, 0.0
        %v679 = vmax.f32 %v639, 0.0
        %v680 = vmax.f32 %v644, 0.0
        %v681 = vmax.f32 %v647, 0.0
        %v682 = vpack.c.bf16 %v651, %v650
        %v683 = vpack.c.bf16 %v653, %v652
        %v684 = vpack.c.bf16 %v655, %v654
        %v685 = vpack.c.bf16 %v657, %v656
        %v686 = vpack.c.bf16 %v659, %v658
        %v687 = vpack.c.bf16 %v661, %v660
        %v688 = vpack.c.bf16 %v663, %v662
        %v689 = vpack.c.bf16 %v665, %v664
        %v690 = vpack.c.bf16 %v667, %v666
        %v691 = vpack.c.bf16 %v669, %v668
        %v692 = vpack.c.bf16 %v671, %v670
        %v693 = vpack.c.bf16 %v673, %v672
        %v694 = vpack.c.bf16 %v675, %v674
        %v695 = vpack.c.bf16 %v677, %v676
        %v696 = vpack.c.bf16 %v679, %v678
        %v697 = vpack.c.bf16 %v681, %v680
        %v699 = vlaneseq
        %v700 = vshrl.u32 %v699, 7
        %v701 = vsub.s32 0, %v700
        %v702 = vrot.slane %v317, %v701
        %v720 = vunpack.c.l.b16 %v301
        %v721 = vunpack.c.l.b16 %v302
        %v722 = vunpack.c.l.b16 %v303
        %v723 = vunpack.c.l.b16 %v304
        %v724 = vunpack.c.l.b16 %v305
        %v725 = vunpack.c.l.b16 %v306
        %v726 = vunpack.c.l.b16 %v307
        %v727 = vunpack.c.l.b16 %v308
        %v728 = vunpack.c.l.b16 %v309
        %v729 = vunpack.c.l.b16 %v310
        %v730 = vunpack.c.l.b16 %v311
        %v731 = vunpack.c.l.b16 %v312
        %v732 = vunpack.c.l.b16 %v313
        %v733 = vunpack.c.l.b16 %v314
        %v734 = vunpack.c.l.b16 %v315
        %v735 = vunpack.c.l.b16 %v316
        %v736 = vpack.c.b16 %v721, %v720
        %v737 = vpack.c.b16 %v723, %v722
        %v738 = vpack.c.b16 %v725, %v724
        %v739 = vpack.c.b16 %v727, %v726
        %v740 = vpack.c.b16 %v729, %v728
        %v741 = vpack.c.b16 %v731, %v730
        %v742 = vpack.c.b16 %v733, %v732
        %v743 = vpack.c.b16 %v735, %v734
        %752 = vmatprep.subr.bf16.mxu0 0
        %753 = vmatpush1.bf16.msra.mxu0 %v736
        %754 = vmatprep.subr.bf16.mxu0 0
        %755 = vmatpush1.bf16.msra.mxu0 %v737
        %756 = vmatprep.subr.bf16.mxu0 0
        %757 = vmatpush1.bf16.msra.mxu0 %v738
        %758 = vmatprep.subr.bf16.mxu0 0
        %759 = vmatpush1.bf16.msra.mxu0 %v739
        %760 = vmatprep.subr.bf16.mxu0 0
        %761 = vmatpush1.bf16.msra.mxu0 %v740
        %762 = vmatprep.subr.bf16.mxu0 0
        %763 = vmatpush1.bf16.msra.mxu0 %v741
        %764 = vmatprep.subr.bf16.mxu0 0
        %765 = vmatpush1.bf16.msra.mxu0 %v742
        %766 = vmatprep.subr.bf16.mxu0 0
        %767 = vmatpush1.bf16.msra.mxu0 %v743
        %768 = vmatprep.subr.bf16.mxu0 0
        %769 = vmatpush1.bf16.msra.mxu0 0
        %770 = vmatprep.subr.bf16.mxu0 0
        %771 = vmatpush1.bf16.msra.mxu0 0
        %772 = vmatprep.subr.bf16.mxu0 0
        %773 = vmatpush1.bf16.msra.mxu0 0
        %774 = vmatprep.subr.bf16.mxu0 0
        %775 = vmatpush1.bf16.msra.mxu0 0
        %776 = vmatprep.subr.bf16.mxu0 0
        %777 = vmatpush1.bf16.msra.mxu0 0
        %778 = vmatprep.subr.bf16.mxu0 0
        %779 = vmatpush1.bf16.msra.mxu0 0
        %780 = vmatprep.subr.bf16.mxu0 0
        %781 = vmatpush1.bf16.msra.mxu0 0
        %782 = vmatprep.subr.bf16.mxu0 0
        %783 = vmatpush1.bf16.msra.mxu0 0
        %784 = vmatprep.mubr.bf16.mxu0 0
        %785 = vmatmul.mubr.bf16.gmra.mrb[0].mxu0 %v682
        %v786 = vpop.f32.mrb[0].mxu0
        %v787 = vadd.f32 %v702, %v786
        %v788 = vpop.f32.mrb[0].mxu0
        %v789 = vpop.f32.mrb[0].mxu0
        %v790 = vadd.f32 %v702, %v789
        %v791 = vpop.f32.mrb[0].mxu0
        %792 = vmatprep.mubr.bf16.mxu0 0
        %793 = vmatmul.mubr.bf16.gmra.mrb[0].mxu0 %v683
        %v794 = vpop.f32.mrb[0].mxu0
        %v795 = vadd.f32 %v702, %v794
        %v796 = vpop.f32.mrb[0].mxu0
        %v797 = vpop.f32.mrb[0].mxu0
        %v798 = vadd.f32 %v702, %v797
        %v799 = vpop.f32.mrb[0].mxu0
        %800 = vmatprep.mubr.bf16.mxu0 0
        %801 = vmatmul.mubr.bf16.gmra.mrb[0].mxu0 %v684
        %v802 = vpop.f32.mrb[0].mxu0
        %v803 = vadd.f32 %v702, %v802
        %v804 = vpop.f32.mrb[0].mxu0
        %v805 = vpop.f32.mrb[0].mxu0
        %v806 = vadd.f32 %v702, %v805
        %v807 = vpop.f32.mrb[0].mxu0
        %808 = vmatprep.mubr.bf16.mxu0 0
        %809 = vmatmul.mubr.bf16.gmra.mrb[0].mxu0 %v685
        %v810 = vpop.f32.mrb[0].mxu0
        %v811 = vadd.f32 %v702, %v810
        %v812 = vpop.f32.mrb[0].mxu0
        %v813 = vpop.f32.mrb[0].mxu0
        %v814 = vadd.f32 %v702, %v813
        %v815 = vpop.f32.mrb[0].mxu0
        %816 = vmatprep.mubr.bf16.mxu0 0
        %817 = vmatmul.mubr.bf16.gmra.mrb[0].mxu0 %v686
        %v818 = vpop.f32.mrb[0].mxu0
        %v819 = vadd.f32 %v702, %v818
        %v820 = vpop.f32.mrb[0].mxu0
        %v821 = vpop.f32.mrb[0].mxu0
        %v822 = vadd.f32 %v702, %v821
        %v823 = vpop.f32.mrb[0].mxu0
        %824 = vmatprep.mubr.bf16.mxu0 0
        %825 = vmatmul.mubr.bf16.gmra.mrb[0].mxu0 %v687
        %v826 = vpop.f32.mrb[0].mxu0
        %v827 = vadd.f32 %v702, %v826
        %v828 = vpop.f32.mrb[0].mxu0
        %v829 = vpop.f32.mrb[0].mxu0
        %v830 = vadd.f32 %v702, %v829
        %v831 = vpop.f32.mrb[0].mxu0
        %832 = vmatprep.mubr.bf16.mxu0 0
        %833 = vmatmul.mubr.bf16.gmra.mrb[0].mxu0 %v688
        %v834 = vpop.f32.mrb[0].mxu0
        %v835 = vadd.f32 %v702, %v834
        %v836 = vpop.f32.mrb[0].mxu0
        %v837 = vpop.f32.mrb[0].mxu0
        %v838 = vadd.f32 %v702, %v837
        %v839 = vpop.f32.mrb[0].mxu0
        %840 = vmatprep.mubr.bf16.mxu0 0
        %841 = vmatmul.mubr.bf16.gmra.mrb[0].mxu0 %v689
        %v842 = vpop.f32.mrb[0].mxu0
        %v843 = vadd.f32 %v702, %v842
        %v844 = vpop.f32.mrb[0].mxu0
        %v845 = vpop.f32.mrb[0].mxu0
        %v846 = vadd.f32 %v702, %v845
        %v847 = vpop.f32.mrb[0].mxu0
        %848 = vmatprep.mubr.bf16.mxu0 0
        %849 = vmatmul.mubr.bf16.gmra.mrb[0].mxu0 %v690
        %v850 = vpop.f32.mrb[0].mxu0
        %v851 = vadd.f32 %v702, %v850
        %v852 = vpop.f32.mrb[0].mxu0
        %v853 = vpop.f32.mrb[0].mxu0
        %v854 = vadd.f32 %v702, %v853
        %v855 = vpop.f32.mrb[0].mxu0
        %856 = vmatprep.mubr.bf16.mxu0 0
        %857 = vmatmul.mubr.bf16.gmra.mrb[0].mxu0 %v691
        %v858 = vpop.f32.mrb[0].mxu0
        %v859 = vadd.f32 %v702, %v858
        %v860 = vpop.f32.mrb[0].mxu0
        %v861 = vpop.f32.mrb[0].mxu0
        %v862 = vadd.f32 %v702, %v861
        %v863 = vpop.f32.mrb[0].mxu0
        %864 = vmatprep.mubr.bf16.mxu0 0
        %865 = vmatmul.mubr.bf16.gmra.mrb[0].mxu0 %v692
        %v866 = vpop.f32.mrb[0].mxu0
        %v867 = vadd.f32 %v702, %v866
        %v868 = vpop.f32.mrb[0].mxu0
        %v869 = vpop.f32.mrb[0].mxu0
        %v870 = vadd.f32 %v702, %v869
        %v871 = vpop.f32.mrb[0].mxu0
        %872 = vmatprep.mubr.bf16.mxu0 0
        %873 = vmatmul.mubr.bf16.gmra.mrb[0].mxu0 %v693
        %v874 = vpop.f32.mrb[0].mxu0
        %v875 = vadd.f32 %v702, %v874
        %v876 = vpop.f32.mrb[0].mxu0
        %v877 = vpop.f32.mrb[0].mxu0
        %v878 = vadd.f32 %v702, %v877
        %v879 = vpop.f32.mrb[0].mxu0
        %880 = vmatprep.mubr.bf16.mxu0 0
        %881 = vmatmul.mubr.bf16.gmra.mrb[0].mxu0 %v694
        %v882 = vpop.f32.mrb[0].mxu0
        %v883 = vadd.f32 %v702, %v882
        %v884 = vpop.f32.mrb[0].mxu0
        %v885 = vpop.f32.mrb[0].mxu0
        %v886 = vadd.f32 %v702, %v885
        %v887 = vpop.f32.mrb[0].mxu0
        %888 = vmatprep.mubr.bf16.mxu0 0
        %889 = vmatmul.mubr.bf16.gmra.mrb[0].mxu0 %v695
        %v890 = vpop.f32.mrb[0].mxu0
        %v891 = vadd.f32 %v702, %v890
        %v892 = vpop.f32.mrb[0].mxu0
        %v893 = vpop.f32.mrb[0].mxu0
        %v894 = vadd.f32 %v702, %v893
        %v895 = vpop.f32.mrb[0].mxu0
        %896 = vmatprep.mubr.bf16.mxu0 0
        %897 = vmatmul.mubr.bf16.gmra.mrb[0].mxu0 %v696
        %v898 = vpop.f32.mrb[0].mxu0
        %v899 = vadd.f32 %v702, %v898
        %v900 = vpop.f32.mrb[0].mxu0
        %v901 = vpop.f32.mrb[0].mxu0
        %v902 = vadd.f32 %v702, %v901
        %v903 = vpop.f32.mrb[0].mxu0
        %904 = vmatprep.mubr.bf16.mxu0 0
        %905 = vmatmul.mubr.bf16.gmra.mrb[0].mxu0 %v697
        %v906 = vpop.f32.mrb[0].mxu0
        %v907 = vadd.f32 %v702, %v906
        %v908 = vpop.f32.mrb[0].mxu0
        %v909 = vpop.f32.mrb[0].mxu0
        %v910 = vadd.f32 %v702, %v909
        %v911 = vpop.f32.mrb[0].mxu0
        %912 = vdwg.mxu0
        %v913 = vmax.f32 %v787, %v790
        %v914 = vrot.slane %v913, 4
        %v915 = vmax.f32 %v913, %v914
        %v916 = vrot.slane %v915, 2
        %v917 = vmax.f32 %v915, %v916
        %v918 = vrot.slane %v917, 1
        %v919 = vmax.f32 %v917, %v918
        %v920 = vmax.f32 %v795, %v798
        %v921 = vrot.slane %v920, 4
        %v922 = vmax.f32 %v920, %v921
        %v923 = vrot.slane %v922, 2
        %v924 = vmax.f32 %v922, %v923
        %v925 = vrot.slane %v924, 1
        %v926 = vmax.f32 %v924, %v925
        %v927 = vmax.f32 %v803, %v806
        %v928 = vrot.slane %v927, 4
        %v929 = vmax.f32 %v927, %v928
        %v930 = vrot.slane %v929, 2
        %v931 = vmax.f32 %v929, %v930
        %v932 = vrot.slane %v931, 1
        %v933 = vmax.f32 %v931, %v932
        %v934 = vmax.f32 %v811, %v814
        %v935 = vrot.slane %v934, 4
        %v936 = vmax.f32 %v934, %v935
        %v937 = vrot.slane %v936, 2
        %v938 = vmax.f32 %v936, %v937
        %v939 = vrot.slane %v938, 1
        %v940 = vmax.f32 %v938, %v939
        %v941 = vmax.f32 %v819, %v822
        %v942 = vrot.slane %v941, 4
        %v943 = vmax.f32 %v941, %v942
        %v944 = vrot.slane %v943, 2
        %v945 = vmax.f32 %v943, %v944
        %v946 = vrot.slane %v945, 1
        %v947 = vmax.f32 %v945, %v946
        %v948 = vmax.f32 %v827, %v830
        %v949 = vrot.slane %v948, 4
        %v950 = vmax.f32 %v948, %v949
        %v951 = vrot.slane %v950, 2
        %v952 = vmax.f32 %v950, %v951
        %v953 = vrot.slane %v952, 1
        %v954 = vmax.f32 %v952, %v953
        %v955 = vmax.f32 %v835, %v838
        %v956 = vrot.slane %v955, 4
        %v957 = vmax.f32 %v955, %v956
        %v958 = vrot.slane %v957, 2
        %v959 = vmax.f32 %v957, %v958
        %v960 = vrot.slane %v959, 1
        %v961 = vmax.f32 %v959, %v960
        %v962 = vmax.f32 %v843, %v846
        %v963 = vrot.slane %v962, 4
        %v964 = vmax.f32 %v962, %v963
        %v965 = vrot.slane %v964, 2
        %v966 = vmax.f32 %v964, %v965
        %v967 = vrot.slane %v966, 1
        %v968 = vmax.f32 %v966, %v967
        %v969 = vmax.f32 %v851, %v854
        %v970 = vrot.slane %v969, 4
        %v971 = vmax.f32 %v969, %v970
        %v972 = vrot.slane %v971, 2
        %v973 = vmax.f32 %v971, %v972
        %v974 = vrot.slane %v973, 1
        %v975 = vmax.f32 %v973, %v974
        %v976 = vmax.f32 %v859, %v862
        %v977 = vrot.slane %v976, 4
        %v978 = vmax.f32 %v976, %v977
        %v979 = vrot.slane %v978, 2
        %v980 = vmax.f32 %v978, %v979
        %v981 = vrot.slane %v980, 1
        %v982 = vmax.f32 %v980, %v981
        %v983 = vmax.f32 %v867, %v870
        %v984 = vrot.slane %v983, 4
        %v985 = vmax.f32 %v983, %v984
        %v986 = vrot.slane %v985, 2
        %v987 = vmax.f32 %v985, %v986
        %v988 = vrot.slane %v987, 1
        %v989 = vmax.f32 %v987, %v988
        %v990 = vmax.f32 %v875, %v878
        %v991 = vrot.slane %v990, 4
        %v992 = vmax.f32 %v990, %v991
        %v993 = vrot.slane %v992, 2
        %v994 = vmax.f32 %v992, %v993
        %v995 = vrot.slane %v994, 1
        %v996 = vmax.f32 %v994, %v995
        %v997 = vmax.f32 %v883, %v886
        %v998 = vrot.slane %v997, 4
        %v999 = vmax.f32 %v997, %v998
        %v1000 = vrot.slane %v999, 2
        %v1001 = vmax.f32 %v999, %v1000
        %v1002 = vrot.slane %v1001, 1
        %v1003 = vmax.f32 %v1001, %v1002
        %v1004 = vmax.f32 %v891, %v894
        %v1005 = vrot.slane %v1004, 4
        %v1006 = vmax.f32 %v1004, %v1005
        %v1007 = vrot.slane %v1006, 2
        %v1008 = vmax.f32 %v1006, %v1007
        %v1009 = vrot.slane %v1008, 1
        %v1010 = vmax.f32 %v1008, %v1009
        %v1011 = vmax.f32 %v899, %v902
        %v1012 = vrot.slane %v1011, 4
        %v1013 = vmax.f32 %v1011, %v1012
        %v1014 = vrot.slane %v1013, 2
        %v1015 = vmax.f32 %v1013, %v1014
        %v1016 = vrot.slane %v1015, 1
        %v1017 = vmax.f32 %v1015, %v1016
        %v1018 = vmax.f32 %v907, %v910
        %v1019 = vrot.slane %v1018, 4
        %v1020 = vmax.f32 %v1018, %v1019
        %v1021 = vrot.slane %v1020, 2
        %v1022 = vmax.f32 %v1020, %v1021
        %v1023 = vrot.slane %v1022, 1
        %v1024 = vmax.f32 %v1022, %v1023
        %s1025 = scalar_lea.vmem %s253, 8 [#allocation2]
        %v1026 = vld [vmem:[%s1025] sm:$0xf]
        %v1027 = vld [vmem:[%s1025 + $0x4] sm:$0xf]
        %v1028 = vld [vmem:[%s1025 + $0x10] sm:$0xf]
        %v1029 = vld [vmem:[%s1025 + $0x14] sm:$0xf]
        %v1030 = vld [vmem:[%s1025 + $0x20] sm:$0xf]
        %v1031 = vld [vmem:[%s1025 + $0x24] sm:$0xf]
        %v1032 = vld [vmem:[%s1025 + $0x30] sm:$0xf]
        %v1033 = vld [vmem:[%s1025 + $0x34] sm:$0xf]
        %v1034 = vld [vmem:[%s1025 + $0x40] sm:$0xf]
        %v1035 = vld [vmem:[%s1025 + $0x44] sm:$0xf]
        %v1036 = vld [vmem:[%s1025 + $0x50] sm:$0xf]
        %v1037 = vld [vmem:[%s1025 + $0x54] sm:$0xf]
        %v1038 = vld [vmem:[%s1025 + $0x60] sm:$0xf]
        %v1039 = vld [vmem:[%s1025 + $0x64] sm:$0xf]
        %v1040 = vld [vmem:[%s1025 + $0x70] sm:$0xf]
        %v1041 = vld [vmem:[%s1025 + $0x74] sm:$0xf]
        %v1042 = vld [vmem:[%s1025 + $0x80] sm:$0xf]
        %v1043 = vld [vmem:[%s1025 + $0x84] sm:$0xf]
        %v1044 = vld [vmem:[%s1025 + $0x90] sm:$0xf]
        %v1045 = vld [vmem:[%s1025 + $0x94] sm:$0xf]
        %v1046 = vld [vmem:[%s1025 + $0xa0] sm:$0xf]
        %v1047 = vld [vmem:[%s1025 + $0xa4] sm:$0xf]
        %v1048 = vld [vmem:[%s1025 + $0xb0] sm:$0xf]
        %v1049 = vld [vmem:[%s1025 + $0xb4] sm:$0xf]
        %v1050 = vld [vmem:[%s1025 + $0xc0] sm:$0xf]
        %v1051 = vld [vmem:[%s1025 + $0xc4] sm:$0xf]
        %v1052 = vld [vmem:[%s1025 + $0xd0] sm:$0xf]
        %v1053 = vld [vmem:[%s1025 + $0xd4] sm:$0xf]
        %v1054 = vld [vmem:[%s1025 + $0xe0] sm:$0xf]
        %v1055 = vld [vmem:[%s1025 + $0xe4] sm:$0xf]
        %v1056 = vld [vmem:[%s1025 + $0xf0] sm:$0xf]
        %v1057 = vld [vmem:[%s1025 + $0xf4] sm:$0xf]
        %v1090 = vunpack.c.l.b16 %v1026
        %v1091 = vunpack.c.l.b16 %v1027
        %v1092 = vunpack.c.l.b16 %v1028
        %v1093 = vunpack.c.l.b16 %v1029
        %v1094 = vunpack.c.l.b16 %v1030
        %v1095 = vunpack.c.l.b16 %v1031
        %v1096 = vunpack.c.l.b16 %v1032
        %v1097 = vunpack.c.l.b16 %v1033
        %v1098 = vunpack.c.l.b16 %v1034
        %v1099 = vunpack.c.l.b16 %v1035
        %v1100 = vunpack.c.l.b16 %v1036
        %v1101 = vunpack.c.l.b16 %v1037
        %v1102 = vunpack.c.l.b16 %v1038
        %v1103 = vunpack.c.l.b16 %v1039
        %v1104 = vunpack.c.l.b16 %v1040
        %v1105 = vunpack.c.l.b16 %v1041
        %v1106 = vunpack.c.l.b16 %v1042
        %v1107 = vunpack.c.l.b16 %v1043
        %v1108 = vunpack.c.l.b16 %v1044
        %v1109 = vunpack.c.l.b16 %v1045
        %v1110 = vunpack.c.l.b16 %v1046
        %v1111 = vunpack.c.l.b16 %v1047
        %v1112 = vunpack.c.l.b16 %v1048
        %v1113 = vunpack.c.l.b16 %v1049
        %v1114 = vunpack.c.l.b16 %v1050
        %v1115 = vunpack.c.l.b16 %v1051
        %v1116 = vunpack.c.l.b16 %v1052
        %v1117 = vunpack.c.l.b16 %v1053
        %v1118 = vunpack.c.l.b16 %v1054
        %v1119 = vunpack.c.l.b16 %v1055
        %v1120 = vunpack.c.l.b16 %v1056
        %v1121 = vunpack.c.l.b16 %v1057
        %v1122 = vpack.c.b16 %v1091, %v1090
        %v1123 = vpack.c.b16 %v1093, %v1092
        %v1124 = vpack.c.b16 %v1095, %v1094
        %v1125 = vpack.c.b16 %v1097, %v1096
        %v1126 = vpack.c.b16 %v1099, %v1098
        %v1127 = vpack.c.b16 %v1101, %v1100
        %v1128 = vpack.c.b16 %v1103, %v1102
        %v1129 = vpack.c.b16 %v1105, %v1104
        %v1130 = vpack.c.b16 %v1107, %v1106
        %v1131 = vpack.c.b16 %v1109, %v1108
        %v1132 = vpack.c.b16 %v1111, %v1110
        %v1133 = vpack.c.b16 %v1113, %v1112
        %v1134 = vpack.c.b16 %v1115, %v1114
        %v1135 = vpack.c.b16 %v1117, %v1116
        %v1136 = vpack.c.b16 %v1119, %v1118
        %v1137 = vpack.c.b16 %v1121, %v1120
        %v1139 = vsel %vm436, %v1122, 0
        %v1142 = vsel %vm436, %v1123, 0
        %v1145 = vsel %vm436, %v1124, 0
        %v1148 = vsel %vm436, %v1125, 0
        %v1151 = vsel %vm436, %v1126, 0
        %v1154 = vsel %vm436, %v1127, 0
        %v1157 = vsel %vm436, %v1128, 0
        %v1160 = vsel %vm436, %v1129, 0
        %v1163 = vsel %vm436, %v1130, 0
        %v1166 = vsel %vm436, %v1131, 0
        %v1169 = vsel %vm436, %v1132, 0
        %v1172 = vsel %vm436, %v1133, 0
        %v1175 = vsel %vm436, %v1134, 0
        %v1178 = vsel %vm436, %v1135, 0
        %v1181 = vsel %vm436, %v1136, 0
        %v1184 = vsel %vm436, %v1137, 0
        %1186 = vmatprep.subr.bf16.mxu0 0
        %1187 = vmatpush1.bf16.msra.mxu0 %v487
        %1188 = vmatprep.subr.bf16.mxu0 0
        %1189 = vmatpush1.bf16.msra.mxu0 0
        %1190 = vmatprep.subr.bf16.mxu0 0
        %1191 = vmatpush1.bf16.msra.mxu0 0
        %1192 = vmatprep.subr.bf16.mxu0 0
        %1193 = vmatpush1.bf16.msra.mxu0 0
        %1194 = vmatprep.subr.bf16.mxu0 0
        %1195 = vmatpush1.bf16.msra.mxu0 0
        %1196 = vmatprep.subr.bf16.mxu0 0
        %1197 = vmatpush1.bf16.msra.mxu0 0
        %1198 = vmatprep.subr.bf16.mxu0 0
        %1199 = vmatpush1.bf16.msra.mxu0 0
        %1200 = vmatprep.subr.bf16.mxu0 0
        %1201 = vmatpush1.bf16.msra.mxu0 0
        %1202 = vmatprep.subr.bf16.mxu0 0
        %1203 = vmatpush1.bf16.msra.mxu0 0
        %1204 = vmatprep.subr.bf16.mxu0 0
        %1205 = vmatpush1.bf16.msra.mxu0 0
        %1206 = vmatprep.subr.bf16.mxu0 0
        %1207 = vmatpush1.bf16.msra.mxu0 0
        %1208 = vmatprep.subr.bf16.mxu0 0
        %1209 = vmatpush1.bf16.msra.mxu0 0
        %1210 = vmatprep.subr.bf16.mxu0 0
        %1211 = vmatpush1.bf16.msra.mxu0 0
        %1212 = vmatprep.subr.bf16.mxu0 0
        %1213 = vmatpush1.bf16.msra.mxu0 0
        %1214 = vmatprep.subr.bf16.mxu0 0
        %1215 = vmatpush1.bf16.msra.mxu0 0
        %1216 = vmatprep.subr.bf16.mxu0 0
        %1217 = vmatpush1.bf16.msra.mxu0 0
        %1218 = vmatprep.mubr.bf16.mxu0 0
        %1219 = vmatmul.mubr.bf16.gmra.mrb[0].mxu0 %v1139
        %v1220 = vpop.f32.mrb[0].mxu0
        %v1221 = vadd.f32 %v354, %v1220
        %v1222 = vpop.f32.mrb[0].mxu0
        %v1223 = vpop.f32.mrb[0].mxu0
        %v1224 = vadd.f32 %v354, %v1223
        %v1225 = vpop.f32.mrb[0].mxu0
        %1226 = vmatprep.mubr.bf16.mxu0 0
        %1227 = vmatmul.mubr.bf16.gmra.mrb[0].mxu0 %v1142
        %v1228 = vpop.f32.mrb[0].mxu0
        %v1229 = vadd.f32 %v354, %v1228
        %v1230 = vpop.f32.mrb[0].mxu0
        %v1231 = vpop.f32.mrb[0].mxu0
        %v1232 = vadd.f32 %v354, %v1231
        %v1233 = vpop.f32.mrb[0].mxu0
        %1234 = vmatprep.mubr.bf16.mxu0 0
        %1235 = vmatmul.mubr.bf16.gmra.mrb[0].mxu0 %v1145
        %v1236 = vpop.f32.mrb[0].mxu0
        %v1237 = vadd.f32 %v354, %v1236
        %v1238 = vpop.f32.mrb[0].mxu0
        %v1239 = vpop.f32.mrb[0].mxu0
        %v1240 = vadd.f32 %v354, %v1239
        %v1241 = vpop.f32.mrb[0].mxu0
        %1242 = vmatprep.mubr.bf16.mxu0 0
        %1243 = vmatmul.mubr.bf16.gmra.mrb[0].mxu0 %v1148
        %v1244 = vpop.f32.mrb[0].mxu0
        %v1245 = vadd.f32 %v354, %v1244
        %v1246 = vpop.f32.mrb[0].mxu0
        %v1247 = vpop.f32.mrb[0].mxu0
        %v1248 = vadd.f32 %v354, %v1247
        %v1249 = vpop.f32.mrb[0].mxu0
        %1250 = vmatprep.mubr.bf16.mxu0 0
        %1251 = vmatmul.mubr.bf16.gmra.mrb[0].mxu0 %v1151
        %v1252 = vpop.f32.mrb[0].mxu0
        %v1253 = vadd.f32 %v354, %v1252
        %v1254 = vpop.f32.mrb[0].mxu0
        %v1255 = vpop.f32.mrb[0].mxu0
        %v1256 = vadd.f32 %v354, %v1255
        %v1257 = vpop.f32.mrb[0].mxu0
        %1258 = vmatprep.mubr.bf16.mxu0 0
        %1259 = vmatmul.mubr.bf16.gmra.mrb[0].mxu0 %v1154
        %v1260 = vpop.f32.mrb[0].mxu0
        %v1261 = vadd.f32 %v354, %v1260
        %v1262 = vpop.f32.mrb[0].mxu0
        %v1263 = vpop.f32.mrb[0].mxu0
        %v1264 = vadd.f32 %v354, %v1263
        %v1265 = vpop.f32.mrb[0].mxu0
        %1266 = vmatprep.mubr.bf16.mxu0 0
        %1267 = vmatmul.mubr.bf16.gmra.mrb[0].mxu0 %v1157
        %v1268 = vpop.f32.mrb[0].mxu0
        %v1269 = vadd.f32 %v354, %v1268
        %v1270 = vpop.f32.mrb[0].mxu0
        %v1271 = vpop.f32.mrb[0].mxu0
        %v1272 = vadd.f32 %v354, %v1271
        %v1273 = vpop.f32.mrb[0].mxu0
        %1274 = vmatprep.mubr.bf16.mxu0 0
        %1275 = vmatmul.mubr.bf16.gmra.mrb[0].mxu0 %v1160
        %v1276 = vpop.f32.mrb[0].mxu0
        %v1277 = vadd.f32 %v354, %v1276
        %v1278 = vpop.f32.mrb[0].mxu0
        %v1279 = vpop.f32.mrb[0].mxu0
        %v1280 = vadd.f32 %v354, %v1279
        %v1281 = vpop.f32.mrb[0].mxu0
        %1282 = vmatprep.mubr.bf16.mxu0 0
        %1283 = vmatmul.mubr.bf16.gmra.mrb[0].mxu0 %v1163
        %v1284 = vpop.f32.mrb[0].mxu0
        %v1285 = vadd.f32 %v354, %v1284
        %v1286 = vpop.f32.mrb[0].mxu0
        %v1287 = vpop.f32.mrb[0].mxu0
        %v1288 = vadd.f32 %v354, %v1287
        %v1289 = vpop.f32.mrb[0].mxu0
        %1290 = vmatprep.mubr.bf16.mxu0 0
        %1291 = vmatmul.mubr.bf16.gmra.mrb[0].mxu0 %v1166
        %v1292 = vpop.f32.mrb[0].mxu0
        %v1293 = vadd.f32 %v354, %v1292
        %v1294 = vpop.f32.mrb[0].mxu0
        %v1295 = vpop.f32.mrb[0].mxu0
        %v1296 = vadd.f32 %v354, %v1295
        %v1297 = vpop.f32.mrb[0].mxu0
        %1298 = vmatprep.mubr.bf16.mxu0 0
        %1299 = vmatmul.mubr.bf16.gmra.mrb[0].mxu0 %v1169
        %v1300 = vpop.f32.mrb[0].mxu0
        %v1301 = vadd.f32 %v354, %v1300
        %v1302 = vpop.f32.mrb[0].mxu0
        %v1303 = vpop.f32.mrb[0].mxu0
        %v1304 = vadd.f32 %v354, %v1303
        %v1305 = vpop.f32.mrb[0].mxu0
        %1306 = vmatprep.mubr.bf16.mxu0 0
        %1307 = vmatmul.mubr.bf16.gmra.mrb[0].mxu0 %v1172
        %v1308 = vpop.f32.mrb[0].mxu0
        %v1309 = vadd.f32 %v354, %v1308
        %v1310 = vpop.f32.mrb[0].mxu0
        %v1311 = vpop.f32.mrb[0].mxu0
        %v1312 = vadd.f32 %v354, %v1311
        %v1313 = vpop.f32.mrb[0].mxu0
        %1314 = vmatprep.mubr.bf16.mxu0 0
        %1315 = vmatmul.mubr.bf16.gmra.mrb[0].mxu0 %v1175
        %v1316 = vpop.f32.mrb[0].mxu0
        %v1317 = vadd.f32 %v354, %v1316
        %v1318 = vpop.f32.mrb[0].mxu0
        %v1319 = vpop.f32.mrb[0].mxu0
        %v1320 = vadd.f32 %v354, %v1319
        %v1321 = vpop.f32.mrb[0].mxu0
        %1322 = vmatprep.mubr.bf16.mxu0 0
        %1323 = vmatmul.mubr.bf16.gmra.mrb[0].mxu0 %v1178
        %v1324 = vpop.f32.mrb[0].mxu0
        %v1325 = vadd.f32 %v354, %v1324
        %v1326 = vpop.f32.mrb[0].mxu0
        %v1327 = vpop.f32.mrb[0].mxu0
        %v1328 = vadd.f32 %v354, %v1327
        %v1329 = vpop.f32.mrb[0].mxu0
        %1330 = vmatprep.mubr.bf16.mxu0 0
        %1331 = vmatmul.mubr.bf16.gmra.mrb[0].mxu0 %v1181
        %v1332 = vpop.f32.mrb[0].mxu0
        %v1333 = vadd.f32 %v354, %v1332
        %v1334 = vpop.f32.mrb[0].mxu0
        %v1335 = vpop.f32.mrb[0].mxu0
        %v1336 = vadd.f32 %v354, %v1335
        %v1337 = vpop.f32.mrb[0].mxu0
        %1338 = vmatprep.mubr.bf16.mxu0 0
        %1339 = vmatmul.mubr.bf16.gmra.mrb[0].mxu0 %v1184
        %v1340 = vpop.f32.mrb[0].mxu0
        %v1341 = vadd.f32 %v354, %v1340
        %v1342 = vpop.f32.mrb[0].mxu0
        %v1343 = vpop.f32.mrb[0].mxu0
        %v1344 = vadd.f32 %v354, %v1343
        %v1345 = vpop.f32.mrb[0].mxu0
        %1346 = vdwg.mxu0
        %v1347 = vmax.f32 %v1221, 0.0
        %v1348 = vmax.f32 %v1224, 0.0
        %v1349 = vmax.f32 %v1229, 0.0
        %v1350 = vmax.f32 %v1232, 0.0
        %v1351 = vmax.f32 %v1237, 0.0
        %v1352 = vmax.f32 %v1240, 0.0
        %v1353 = vmax.f32 %v1245, 0.0
        %v1354 = vmax.f32 %v1248, 0.0
        %v1355 = vmax.f32 %v1253, 0.0
        %v1356 = vmax.f32 %v1256, 0.0
        %v1357 = vmax.f32 %v1261, 0.0
        %v1358 = vmax.f32 %v1264, 0.0
        %v1359 = vmax.f32 %v1269, 0.0
        %v1360 = vmax.f32 %v1272, 0.0
        %v1361 = vmax.f32 %v1277, 0.0
        %v1362 = vmax.f32 %v1280, 0.0
        %v1363 = vmax.f32 %v1285, 0.0
        %v1364 = vmax.f32 %v1288, 0.0
        %v1365 = vmax.f32 %v1293, 0.0
        %v1366 = vmax.f32 %v1296, 0.0
        %v1367 = vmax.f32 %v1301, 0.0
        %v1368 = vmax.f32 %v1304, 0.0
        %v1369 = vmax.f32 %v1309, 0.0
        %v1370 = vmax.f32 %v1312, 0.0
        %v1371 = vmax.f32 %v1317, 0.0
        %v1372 = vmax.f32 %v1320, 0.0
        %v1373 = vmax.f32 %v1325, 0.0
        %v1374 = vmax.f32 %v1328, 0.0
        %v1375 = vmax.f32 %v1333, 0.0
        %v1376 = vmax.f32 %v1336, 0.0
        %v1377 = vmax.f32 %v1341, 0.0
        %v1378 = vmax.f32 %v1344, 0.0
        %v1379 = vpack.c.bf16 %v1348, %v1347
        %v1380 = vpack.c.bf16 %v1350, %v1349
        %v1381 = vpack.c.bf16 %v1352, %v1351
        %v1382 = vpack.c.bf16 %v1354, %v1353
        %v1383 = vpack.c.bf16 %v1356, %v1355
        %v1384 = vpack.c.bf16 %v1358, %v1357
        %v1385 = vpack.c.bf16 %v1360, %v1359
        %v1386 = vpack.c.bf16 %v1362, %v1361
        %v1387 = vpack.c.bf16 %v1364, %v1363
        %v1388 = vpack.c.bf16 %v1366, %v1365
        %v1389 = vpack.c.bf16 %v1368, %v1367
        %v1390 = vpack.c.bf16 %v1370, %v1369
        %v1391 = vpack.c.bf16 %v1372, %v1371
        %v1392 = vpack.c.bf16 %v1374, %v1373
        %v1393 = vpack.c.bf16 %v1376, %v1375
        %v1394 = vpack.c.bf16 %v1378, %v1377
        %1395 = vmatprep.subr.bf16.mxu0 0
        %1396 = vmatpush1.bf16.msra.mxu0 %v736
        %1397 = vmatprep.subr.bf16.mxu0 0
        %1398 = vmatpush1.bf16.msra.mxu0 %v737
        %1399 = vmatprep.subr.bf16.mxu0 0
        %1400 = vmatpush1.bf16.msra.mxu0 %v738
        %1401 = vmatprep.subr.bf16.mxu0 0
        %1402 = vmatpush1.bf16.msra.mxu0 %v739
        %1403 = vmatprep.subr.bf16.mxu0 0
        %1404 = vmatpush1.bf16.msra.mxu0 %v740
        %1405 = vmatprep.subr.bf16.mxu0 0
        %1406 = vmatpush1.bf16.msra.mxu0 %v741
        %1407 = vmatprep.subr.bf16.mxu0 0
        %1408 = vmatpush1.bf16.msra.mxu0 %v742
        %1409 = vmatprep.subr.bf16.mxu0 0
        %1410 = vmatpush1.bf16.msra.mxu0 %v743
        %1411 = vmatprep.subr.bf16.mxu0 0
        %1412 = vmatpush1.bf16.msra.mxu0 0
        %1413 = vmatprep.subr.bf16.mxu0 0
        %1414 = vmatpush1.bf16.msra.mxu0 0
        %1415 = vmatprep.subr.bf16.mxu0 0
        %1416 = vmatpush1.bf16.msra.mxu0 0
        %1417 = vmatprep.subr.bf16.mxu0 0
        %1418 = vmatpush1.bf16.msra.mxu0 0
        %1419 = vmatprep.subr.bf16.mxu0 0
        %1420 = vmatpush1.bf16.msra.mxu0 0
        %1421 = vmatprep.subr.bf16.mxu0 0
        %1422 = vmatpush1.bf16.msra.mxu0 0
        %1423 = vmatprep.subr.bf16.mxu0 0
        %1424 = vmatpush1.bf16.msra.mxu0 0
        %1425 = vmatprep.subr.bf16.mxu0 0
        %1426 = vmatpush1.bf16.msra.mxu0 0
        %1427 = vmatprep.mubr.bf16.mxu0 0
        %1428 = vmatmul.mubr.bf16.gmra.mrb[0].mxu0 %v1379
        %v1429 = vpop.f32.mrb[0].mxu0
        %v1430 = vadd.f32 %v702, %v1429
        %v1431 = vpop.f32.mrb[0].mxu0
        %v1432 = vpop.f32.mrb[0].mxu0
        %v1433 = vadd.f32 %v702, %v1432
        %v1434 = vpop.f32.mrb[0].mxu0
        %1435 = vmatprep.mubr.bf16.mxu0 0
        %1436 = vmatmul.mubr.bf16.gmra.mrb[0].mxu0 %v1380
        %v1437 = vpop.f32.mrb[0].mxu0
        %v1438 = vadd.f32 %v702, %v1437
        %v1439 = vpop.f32.mrb[0].mxu0
        %v1440 = vpop.f32.mrb[0].mxu0
        %v1441 = vadd.f32 %v702, %v1440
        %v1442 = vpop.f32.mrb[0].mxu0
        %1443 = vmatprep.mubr.bf16.mxu0 0
        %1444 = vmatmul.mubr.bf16.gmra.mrb[0].mxu0 %v1381
        %v1445 = vpop.f32.mrb[0].mxu0
        %v1446 = vadd.f32 %v702, %v1445
        %v1447 = vpop.f32.mrb[0].mxu0
        %v1448 = vpop.f32.mrb[0].mxu0
        %v1449 = vadd.f32 %v702, %v1448
        %v1450 = vpop.f32.mrb[0].mxu0
        %1451 = vmatprep.mubr.bf16.mxu0 0
        %1452 = vmatmul.mubr.bf16.gmra.mrb[0].mxu0 %v1382
        %v1453 = vpop.f32.mrb[0].mxu0
        %v1454 = vadd.f32 %v702, %v1453
        %v1455 = vpop.f32.mrb[0].mxu0
        %v1456 = vpop.f32.mrb[0].mxu0
        %v1457 = vadd.f32 %v702, %v1456
        %v1458 = vpop.f32.mrb[0].mxu0
        %1459 = vmatprep.mubr.bf16.mxu0 0
        %1460 = vmatmul.mubr.bf16.gmra.mrb[0].mxu0 %v1383
        %v1461 = vpop.f32.mrb[0].mxu0
        %v1462 = vadd.f32 %v702, %v1461
        %v1463 = vpop.f32.mrb[0].mxu0
        %v1464 = vpop.f32.mrb[0].mxu0
        %v1465 = vadd.f32 %v702, %v1464
        %v1466 = vpop.f32.mrb[0].mxu0
        %1467 = vmatprep.mubr.bf16.mxu0 0
        %1468 = vmatmul.mubr.bf16.gmra.mrb[0].mxu0 %v1384
        %v1469 = vpop.f32.mrb[0].mxu0
        %v1470 = vadd.f32 %v702, %v1469
        %v1471 = vpop.f32.mrb[0].mxu0
        %v1472 = vpop.f32.mrb[0].mxu0
        %v1473 = vadd.f32 %v702, %v1472
        %v1474 = vpop.f32.mrb[0].mxu0
        %1475 = vmatprep.mubr.bf16.mxu0 0
        %1476 = vmatmul.mubr.bf16.gmra.mrb[0].mxu0 %v1385
        %v1477 = vpop.f32.mrb[0].mxu0
        %v1478 = vadd.f32 %v702, %v1477
        %v1479 = vpop.f32.mrb[0].mxu0
        %v1480 = vpop.f32.mrb[0].mxu0
        %v1481 = vadd.f32 %v702, %v1480
        %v1482 = vpop.f32.mrb[0].mxu0
        %1483 = vmatprep.mubr.bf16.mxu0 0
        %1484 = vmatmul.mubr.bf16.gmra.mrb[0].mxu0 %v1386
        %v1485 = vpop.f32.mrb[0].mxu0
        %v1486 = vadd.f32 %v702, %v1485
        %v1487 = vpop.f32.mrb[0].mxu0
        %v1488 = vpop.f32.mrb[0].mxu0
        %v1489 = vadd.f32 %v702, %v1488
        %v1490 = vpop.f32.mrb[0].mxu0
        %1491 = vmatprep.mubr.bf16.mxu0 0
        %1492 = vmatmul.mubr.bf16.gmra.mrb[0].mxu0 %v1387
        %v1493 = vpop.f32.mrb[0].mxu0
        %v1494 = vadd.f32 %v702, %v1493
        %v1495 = vpop.f32.mrb[0].mxu0
        %v1496 = vpop.f32.mrb[0].mxu0
        %v1497 = vadd.f32 %v702, %v1496
        %v1498 = vpop.f32.mrb[0].mxu0
        %1499 = vmatprep.mubr.bf16.mxu0 0
        %1500 = vmatmul.mubr.bf16.gmra.mrb[0].mxu0 %v1388
        %v1501 = vpop.f32.mrb[0].mxu0
        %v1502 = vadd.f32 %v702, %v1501
        %v1503 = vpop.f32.mrb[0].mxu0
        %v1504 = vpop.f32.mrb[0].mxu0
        %v1505 = vadd.f32 %v702, %v1504
        %v1506 = vpop.f32.mrb[0].mxu0
        %1507 = vmatprep.mubr.bf16.mxu0 0
        %1508 = vmatmul.mubr.bf16.gmra.mrb[0].mxu0 %v1389
        %v1509 = vpop.f32.mrb[0].mxu0
        %v1510 = vadd.f32 %v702, %v1509
        %v1511 = vpop.f32.mrb[0].mxu0
        %v1512 = vpop.f32.mrb[0].mxu0
        %v1513 = vadd.f32 %v702, %v1512
        %v1514 = vpop.f32.mrb[0].mxu0
        %1515 = vmatprep.mubr.bf16.mxu0 0
        %1516 = vmatmul.mubr.bf16.gmra.mrb[0].mxu0 %v1390
        %v1517 = vpop.f32.mrb[0].mxu0
        %v1518 = vadd.f32 %v702, %v1517
        %v1519 = vpop.f32.mrb[0].mxu0
        %v1520 = vpop.f32.mrb[0].mxu0
        %v1521 = vadd.f32 %v702, %v1520
        %v1522 = vpop.f32.mrb[0].mxu0
        %1523 = vmatprep.mubr.bf16.mxu0 0
        %1524 = vmatmul.mubr.bf16.gmra.mrb[0].mxu0 %v1391
        %v1525 = vpop.f32.mrb[0].mxu0
        %v1526 = vadd.f32 %v702, %v1525
        %v1527 = vpop.f32.mrb[0].mxu0
        %v1528 = vpop.f32.mrb[0].mxu0
        %v1529 = vadd.f32 %v702, %v1528
        %v1530 = vpop.f32.mrb[0].mxu0
        %1531 = vmatprep.mubr.bf16.mxu0 0
        %1532 = vmatmul.mubr.bf16.gmra.mrb[0].mxu0 %v1392
        %v1533 = vpop.f32.mrb[0].mxu0
        %v1534 = vadd.f32 %v702, %v1533
        %v1535 = vpop.f32.mrb[0].mxu0
        %v1536 = vpop.f32.mrb[0].mxu0
        %v1537 = vadd.f32 %v702, %v1536
        %v1538 = vpop.f32.mrb[0].mxu0
        %1539 = vmatprep.mubr.bf16.mxu0 0
        %1540 = vmatmul.mubr.bf16.gmra.mrb[0].mxu0 %v1393
        %v1541 = vpop.f32.mrb[0].mxu0
        %v1542 = vadd.f32 %v702, %v1541
        %v1543 = vpop.f32.mrb[0].mxu0
        %v1544 = vpop.f32.mrb[0].mxu0
        %v1545 = vadd.f32 %v702, %v1544
        %v1546 = vpop.f32.mrb[0].mxu0
        %1547 = vmatprep.mubr.bf16.mxu0 0
        %1548 = vmatmul.mubr.bf16.gmra.mrb[0].mxu0 %v1394
        %v1549 = vpop.f32.mrb[0].mxu0
        %v1550 = vadd.f32 %v702, %v1549
        %v1551 = vpop.f32.mrb[0].mxu0
        %v1552 = vpop.f32.mrb[0].mxu0
        %v1553 = vadd.f32 %v702, %v1552
        %v1554 = vpop.f32.mrb[0].mxu0
        %1555 = vdwg.mxu0
        %v1556 = vmax.f32 %v1430, %v1433
        %v1557 = vrot.slane %v1556, 4
        %v1558 = vmax.f32 %v1556, %v1557
        %v1559 = vrot.slane %v1558, 2
        %v1560 = vmax.f32 %v1558, %v1559
        %v1561 = vrot.slane %v1560, 1
        %v1562 = vmax.f32 %v1560, %v1561
        %v1563 = vmax.f32 %v1438, %v1441
        %v1564 = vrot.slane %v1563, 4
        %v1565 = vmax.f32 %v1563, %v1564
        %v1566 = vrot.slane %v1565, 2
        %v1567 = vmax.f32 %v1565, %v1566
        %v1568 = vrot.slane %v1567, 1
        %v1569 = vmax.f32 %v1567, %v1568
        %v1570 = vmax.f32 %v1446, %v1449
        %v1571 = vrot.slane %v1570, 4
        %v1572 = vmax.f32 %v1570, %v1571
        %v1573 = vrot.slane %v1572, 2
        %v1574 = vmax.f32 %v1572, %v1573
        %v1575 = vrot.slane %v1574, 1
        %v1576 = vmax.f32 %v1574, %v1575
        %v1577 = vmax.f32 %v1454, %v1457
        %v1578 = vrot.slane %v1577, 4
        %v1579 = vmax.f32 %v1577, %v1578
        %v1580 = vrot.slane %v1579, 2
        %v1581 = vmax.f32 %v1579, %v1580
        %v1582 = vrot.slane %v1581, 1
        %v1583 = vmax.f32 %v1581, %v1582
        %v1584 = vmax.f32 %v1462, %v1465
        %v1585 = vrot.slane %v1584, 4
        %v1586 = vmax.f32 %v1584, %v1585
        %v1587 = vrot.slane %v1586, 2
        %v1588 = vmax.f32 %v1586, %v1587
        %v1589 = vrot.slane %v1588, 1
        %v1590 = vmax.f32 %v1588, %v1589
        %v1591 = vmax.f32 %v1470, %v1473
        %v1592 = vrot.slane %v1591, 4
        %v1593 = vmax.f32 %v1591, %v1592
        %v1594 = vrot.slane %v1593, 2
        %v1595 = vmax.f32 %v1593, %v1594
        %v1596 = vrot.slane %v1595, 1
        %v1597 = vmax.f32 %v1595, %v1596
        %v1598 = vmax.f32 %v1478, %v1481
        %v1599 = vrot.slane %v1598, 4
        %v1600 = vmax.f32 %v1598, %v1599
        %v1601 = vrot.slane %v1600, 2
        %v1602 = vmax.f32 %v1600, %v1601
        %v1603 = vrot.slane %v1602, 1
        %v1604 = vmax.f32 %v1602, %v1603
        %v1605 = vmax.f32 %v1486, %v1489
        %v1606 = vrot.slane %v1605, 4
        %v1607 = vmax.f32 %v1605, %v1606
        %v1608 = vrot.slane %v1607, 2
        %v1609 = vmax.f32 %v1607, %v1608
        %v1610 = vrot.slane %v1609, 1
        %v1611 = vmax.f32 %v1609, %v1610
        %v1612 = vmax.f32 %v1494, %v1497
        %v1613 = vrot.slane %v1612, 4
        %v1614 = vmax.f32 %v1612, %v1613
        %v1615 = vrot.slane %v1614, 2
        %v1616 = vmax.f32 %v1614, %v1615
        %v1617 = vrot.slane %v1616, 1
        %v1618 = vmax.f32 %v1616, %v1617
        %v1619 = vmax.f32 %v1502, %v1505
        %v1620 = vrot.slane %v1619, 4
        %v1621 = vmax.f32 %v1619, %v1620
        %v1622 = vrot.slane %v1621, 2
        %v1623 = vmax.f32 %v1621, %v1622
        %v1624 = vrot.slane %v1623, 1
        %v1625 = vmax.f32 %v1623, %v1624
        %v1626 = vmax.f32 %v1510, %v1513
        %v1627 = vrot.slane %v1626, 4
        %v1628 = vmax.f32 %v1626, %v1627
        %v1629 = vrot.slane %v1628, 2
        %v1630 = vmax.f32 %v1628, %v1629
        %v1631 = vrot.slane %v1630, 1
        %v1632 = vmax.f32 %v1630, %v1631
        %v1633 = vmax.f32 %v1518, %v1521
        %v1634 = vrot.slane %v1633, 4
        %v1635 = vmax.f32 %v1633, %v1634
        %v1636 = vrot.slane %v1635, 2
        %v1637 = vmax.f32 %v1635, %v1636
        %v1638 = vrot.slane %v1637, 1
        %v1639 = vmax.f32 %v1637, %v1638
        %v1640 = vmax.f32 %v1526, %v1529
        %v1641 = vrot.slane %v1640, 4
        %v1642 = vmax.f32 %v1640, %v1641
        %v1643 = vrot.slane %v1642, 2
        %v1644 = vmax.f32 %v1642, %v1643
        %v1645 = vrot.slane %v1644, 1
        %v1646 = vmax.f32 %v1644, %v1645
        %v1647 = vmax.f32 %v1534, %v1537
        %v1648 = vrot.slane %v1647, 4
        %v1649 = vmax.f32 %v1647, %v1648
        %v1650 = vrot.slane %v1649, 2
        %v1651 = vmax.f32 %v1649, %v1650
        %v1652 = vrot.slane %v1651, 1
        %v1653 = vmax.f32 %v1651, %v1652
        %v1654 = vmax.f32 %v1542, %v1545
        %v1655 = vrot.slane %v1654, 4
        %v1656 = vmax.f32 %v1654, %v1655
        %v1657 = vrot.slane %v1656, 2
        %v1658 = vmax.f32 %v1656, %v1657
        %v1659 = vrot.slane %v1658, 1
        %v1660 = vmax.f32 %v1658, %v1659
        %v1661 = vmax.f32 %v1550, %v1553
        %v1662 = vrot.slane %v1661, 4
        %v1663 = vmax.f32 %v1661, %v1662
        %v1664 = vrot.slane %v1663, 2
        %v1665 = vmax.f32 %v1663, %v1664
        %v1666 = vrot.slane %v1665, 1
        %v1667 = vmax.f32 %v1665, %v1666
        %v1668 = vmax.f32 %v919, %v1562
        %v1669 = vmax.f32 %v926, %v1569
        %v1670 = vmax.f32 %v933, %v1576
        %v1671 = vmax.f32 %v940, %v1583
        %v1672 = vmax.f32 %v947, %v1590
        %v1673 = vmax.f32 %v954, %v1597
        %v1674 = vmax.f32 %v961, %v1604
        %v1675 = vmax.f32 %v968, %v1611
        %v1676 = vmax.f32 %v975, %v1618
        %v1677 = vmax.f32 %v982, %v1625
        %v1678 = vmax.f32 %v989, %v1632
        %v1679 = vmax.f32 %v996, %v1639
        %v1680 = vmax.f32 %v1003, %v1646
        %v1681 = vmax.f32 %v1010, %v1653
        %v1682 = vmax.f32 %v1017, %v1660
        %v1683 = vmax.f32 %v1024, %v1667
        %v1684 = vpack.c.bf16 %v1668, %v1668
        %v1685 = vpack.c.bf16 %v1669, %v1669
        %v1686 = vpack.c.bf16 %v1670, %v1670
        %v1687 = vpack.c.bf16 %v1671, %v1671
        %v1688 = vpack.c.bf16 %v1672, %v1672
        %v1689 = vpack.c.bf16 %v1673, %v1673
        %v1690 = vpack.c.bf16 %v1674, %v1674
        %v1691 = vpack.c.bf16 %v1675, %v1675
        %v1692 = vpack.c.bf16 %v1676, %v1676
        %v1693 = vpack.c.bf16 %v1677, %v1677
        %v1694 = vpack.c.bf16 %v1678, %v1678
        %v1695 = vpack.c.bf16 %v1679, %v1679
        %v1696 = vpack.c.bf16 %v1680, %v1680
        %v1697 = vpack.c.bf16 %v1681, %v1681
        %v1698 = vpack.c.bf16 %v1682, %v1682
        %v1699 = vpack.c.bf16 %v1683, %v1683
        %v1716 = vunpack.c.l.b16 %v1684
        %v1717 = vunpack.c.l.b16 %v1685
        %v1718 = vunpack.c.l.b16 %v1686
        %v1719 = vunpack.c.l.b16 %v1687
        %v1720 = vunpack.c.l.b16 %v1688
        %v1721 = vunpack.c.l.b16 %v1689
        %v1722 = vunpack.c.l.b16 %v1690
        %v1723 = vunpack.c.l.b16 %v1691
        %v1724 = vunpack.c.l.b16 %v1692
        %v1725 = vunpack.c.l.b16 %v1693
        %v1726 = vunpack.c.l.b16 %v1694
        %v1727 = vunpack.c.l.b16 %v1695
        %v1728 = vunpack.c.l.b16 %v1696
        %v1729 = vunpack.c.l.b16 %v1697
        %v1730 = vunpack.c.l.b16 %v1698
        %v1731 = vunpack.c.l.b16 %v1699
        %v1732 = vpack.c.b16 %v1716, %v1716
        %v1733 = vpack.c.b16 %v1717, %v1717
        %v1734 = vpack.c.b16 %v1718, %v1718
        %v1735 = vpack.c.b16 %v1719, %v1719
        %v1736 = vpack.c.b16 %v1720, %v1720
        %v1737 = vpack.c.b16 %v1721, %v1721
        %v1738 = vpack.c.b16 %v1722, %v1722
        %v1739 = vpack.c.b16 %v1723, %v1723
        %v1740 = vpack.c.b16 %v1724, %v1724
        %v1741 = vpack.c.b16 %v1725, %v1725
        %v1742 = vpack.c.b16 %v1726, %v1726
        %v1743 = vpack.c.b16 %v1727, %v1727
        %v1744 = vpack.c.b16 %v1728, %v1728
        %v1745 = vpack.c.b16 %v1729, %v1729
        %v1746 = vpack.c.b16 %v1730, %v1730
        %v1747 = vpack.c.b16 %v1731, %v1731
        %v1748 = vunpack.c.l.b16 %v1732
        %v1749 = vunpack.c.l.b16 %v1733
        %v1750 = vunpack.c.l.b16 %v1734
        %v1751 = vunpack.c.l.b16 %v1735
        %v1752 = vunpack.c.l.b16 %v1736
        %v1753 = vunpack.c.l.b16 %v1737
        %v1754 = vunpack.c.l.b16 %v1738
        %v1755 = vunpack.c.l.b16 %v1739
        %v1756 = vunpack.c.l.b16 %v1740
        %v1757 = vunpack.c.l.b16 %v1741
        %v1758 = vunpack.c.l.b16 %v1742
        %v1759 = vunpack.c.l.b16 %v1743
        %v1760 = vunpack.c.l.b16 %v1744
        %v1761 = vunpack.c.l.b16 %v1745
        %v1762 = vunpack.c.l.b16 %v1746
        %v1763 = vunpack.c.l.b16 %v1747
        %vm1764 = vcmask 1041409
        %v1765 = vsel %vm1764, %v1749, %v1748
        %vm1766 = vcmask 1042434
        %v1767 = vsel %vm1766, %v1750, %v1765
        %vm1768 = vcmask 1043459
        %v1769 = vsel %vm1768, %v1751, %v1767
        %vm1770 = vcmask 1044484
        %v1771 = vsel %vm1770, %v1752, %v1769
        %vm1772 = vcmask 1045509
        %v1773 = vsel %vm1772, %v1753, %v1771
        %vm1774 = vcmask 1046534
        %v1775 = vsel %vm1774, %v1754, %v1773
        %vm1776 = vcmask 1047559
        %v1777 = vsel %vm1776, %v1755, %v1775
        %v1778 = vsel %vm1764, %v1757, %v1756
        %v1779 = vsel %vm1766, %v1758, %v1778
        %v1780 = vsel %vm1768, %v1759, %v1779
        %v1781 = vsel %vm1770, %v1760, %v1780
        %v1782 = vsel %vm1772, %v1761, %v1781
        %v1783 = vsel %vm1774, %v1762, %v1782
        %v1784 = vsel %vm1776, %v1763, %v1783
        %v1785 = vpack.c.b16 %v1777, %v1777
        %v1786 = vpack.c.b16 %v1784, %v1784
        %1789 = vst [vmem:[%s295] sm:$0xf] %v1785
        %1790 = vst [vmem:[%s295 + $0x4] sm:$0xf] %v1786
        %s1791 = sand.u32 %s142, 1
        %s1792 = scalar_lea.sflag [#allocation4], %s1791
        %s1793 = sand.u32 %s142, 1
        %s1794 = smul.addr %s1793, 8
        %s1795 = scalar_lea.vmem [#allocation11], %s1794
        // Predicated region
        $region61: #{pointnet2_forward.4} parent=39 // pred_check
          %p1796 = pneg %p152
        $region62: #{pointnet2_forward.4} parent=39 // pred_check_branch
          %1798 = sbr.rel (%p1796) target = $region64
        $region63: #{pointnet2_forward.4} parent=39 // pred_region
          %s1799 = smul.u32 2, %s24
          %s1801 = ssub.s32 128, 128
          %1802 = vsyncadd %s1792, %s1801
          %s1803 = smul.addr %s1799, 64
          %s1804 = scalar_lea.hbm %s5, %s1803
          %s1805 = sshll.u32 %s1795, 4
          %s1806 = int_to_ptr.vmem [resolvable:$true] %s1805
          %1811 = dma.vmem_to_hbm [thread:$0]  %s1806, 128, %s1804, %s1792, 64, 64, 4
        $region64: #{pointnet2_forward.4} parent=39 // pred_fallthru
          _
      $region40: #{pointnet2_forward.4} parent=5 // pred_fallthru
        _
      %p1812 = scmp.le.s32.totalorder 2, %s19
      // Predicated region
      $region65: #{pointnet2_forward.4} parent=5 // pred_check
        %p1813 = pneg %p1812
      $region66: #{pointnet2_forward.4} parent=5 // pred_check_branch
        %1815 = sbr.rel (%p1813) target = $region68
      $region67: #{pointnet2_forward.4} parent=5 // pred_region
        %s1816 = ssub.s32 %s19, 2
        // Predicated region
        $region69: #{pointnet2_forward.4} parent=67 // pred_check
          %p1817 = pneg %p158
        $region70: #{pointnet2_forward.4} parent=67 // pred_check_branch
          %1819 = sbr.rel (%p1817) target = $region72
        $region71: #{pointnet2_forward.4} parent=67 // pred_region
          %s1820 = sand.u32 %s143, 1
          %s1821 = scalar_lea.sflag [#allocation4], %s1820
          %s1822 = sand.u32 %s143, 1
          %s1823 = smul.addr %s1822, 8
          %s1824 = scalar_lea.vmem [#allocation11], %s1823
          %1825 = dma.done %s1821, 128
        $region72: #{pointnet2_forward.4} parent=67 // pred_fallthru
          _
      $region68: #{pointnet2_forward.4} parent=5 // pred_fallthru
        _
    $region6: #{pointnet2_forward.4} parent=1 // loop_footer
      %s23 = sadd.s32 1, %s19
    $region7: #{pointnet2_forward.4} parent=1 // loop_footer_branch
      %18 = sbr.rel target = $region3
    $region8: #{pointnet2_forward.4} parent=1 // loop_exit
      _
    %1826 = vsyncpa [#allocation3], 1
    %s1827 = scalar_lea.sflag [#allocation3], 1
    %1828 = vsyncpa %s1827, 1
    %1829 = vsyncpa [#allocation6], 1
    %1830 = vsyncpa [#allocation9], 1
    %1831 = vsyncpa [#allocation4], 1
    %s1832 = scalar_lea.sflag [#allocation4], 1
    %1833 = vsyncpa %s1832, 1

// kernel: pointnet2_forward.5
$region0: #{pointnet2_forward.5}
  #allocation0 [shape = 'u32[]', space=smem, size = 0x4, offset = 0x4, fixed_abs, tag = 'smem constant byte address 0x4 - core index']
  #allocation1 [shape = 'u32[144,128]{1,0:T(1,128)}', space=vmem, size = 0x12000, scoped, tag = 'internal scratch']
  %s0 = inlined_call_operand.hbm [shape: bf16[8,16,72], index: 0, kind: input, shape index: {}]
  %s1 = inlined_call_operand.hbm [shape: bf16[72,128], index: 1, kind: input, shape index: {}]
  %s2 = inlined_call_operand.hbm [shape: f32[1,128], index: 2, kind: input, shape index: {}]
  %s3 = inlined_call_operand.hbm [shape: bf16[128,128], index: 3, kind: input, shape index: {}]
  %s4 = inlined_call_operand.hbm [shape: f32[1,128], index: 4, kind: input, shape index: {}]
  %s5 = inlined_call_operand.hbm [shape: bf16[8,128], index: 5, kind: output, shape index: {}]
  %s6 = sld [smem:[#allocation0]]
  $region50: #{pointnet2_forward.5} parent=0
    _
  %s8 = ssub.s32 1, %s6
  %s9 = scalar_select 0, %s8, %s6
  $region1: #{pointnet2_forward.5} parent=0
    #allocation2 [shape = 'u8[32768]{0}', space=vmem, size = 0x8000, scoped, tag = 'input window, operand 0, single buffered']
    #allocation3 [shape = 's32[1]{0}', space=sflag, size = 0x4, scoped, tag = 'scoped memory for pointnet2_forward.5']
    #allocation4 [shape = 's32[1]{0}', space=sflag, size = 0x4, scoped, tag = 'scoped memory for pointnet2_forward.5']
    #allocation5 [shape = 'u8[18432]{0}', space=vmem, size = 0x4800, scoped, tag = 'input window, operand 1, single buffered']
    #allocation6 [shape = 's32[1]{0}', space=sflag, size = 0x4, scoped, tag = 'scoped memory for pointnet2_forward.5']
    #allocation7 [shape = 'u8[512]{0}', space=vmem, size = 0x400, scoped, tag = 'input window, operand 2, single buffered']
    #allocation8 [shape = 'u8[32768]{0}', space=vmem, size = 0x8000, scoped, tag = 'input window, operand 3, single buffered']
    #allocation9 [shape = 's32[1]{0}', space=sflag, size = 0x4, scoped, tag = 'scoped memory for pointnet2_forward.5']
    #allocation10 [shape = 'u8[512]{0}', space=vmem, size = 0x400, scoped, tag = 'input window, operand 4, single buffered']
    #allocation11 [shape = 'u8[2048]{0}', space=vmem, size = 0x800, scoped, tag = 'output window, operand 0, single buffered']
    %10 = vsyncpa [#allocation3], 0
    %11 = vsyncpa [#allocation6], 0
    %12 = vsyncpa [#allocation9], 0
    %13 = vsyncpa [#allocation4], 0
    // Predicated region
    $region2: #{pointnet2_forward.5} parent=1 // pred_check
      _
    $region3: #{pointnet2_forward.5} parent=1 // pred_check_branch
      %15 = sbr.rel (0) target = $region5
    $region4: #{pointnet2_forward.5} parent=1 // pred_region
      %s17 = ssub.s32 1024, 1024
      %18 = vsyncadd [#allocation3], %s17
      %s19 = sshll.u32 [#allocation2], 4
      %s20 = int_to_ptr.vmem [resolvable:$true] %s19
      %25 = dma.hbm_to_vmem [thread:$0]  %s0, 1024, %s20, [#allocation3], 64, 64, 4
    $region5: #{pointnet2_forward.5} parent=1 // pred_fallthru
      _
    // Predicated region
    $region6: #{pointnet2_forward.5} parent=1 // pred_check
      _
    $region7: #{pointnet2_forward.5} parent=1 // pred_check_branch
      %27 = sbr.rel (0) target = $region9
    $region8: #{pointnet2_forward.5} parent=1 // pred_region
      %s29 = ssub.s32 576, 576
      %30 = vsyncadd [#allocation6], %s29
      %s31 = sshll.u32 [#allocation5], 4
      %s32 = int_to_ptr.vmem [resolvable:$true] %s31
      %37 = dma.hbm_to_vmem [thread:$0]  %s1, 576, %s32, [#allocation6], 64, 64, 4
    $region9: #{pointnet2_forward.5} parent=1 // pred_fallthru
      _
    // Predicated region
    $region10: #{pointnet2_forward.5} parent=1 // pred_check
      _
    $region11: #{pointnet2_forward.5} parent=1 // pred_check_branch
      %39 = sbr.rel (0) target = $region13
    $region12: #{pointnet2_forward.5} parent=1 // pred_region
      %s41 = ssub.s32 16, 16
      %42 = vsyncadd [#allocation6], %s41
      %s44 = sshll.u32 [#allocation7], 4
      %s45 = int_to_ptr.vmem [resolvable:$true] %s44
      %47 = dma.hbm_to_vmem [thread:$0]  %s2, 16, %s45, [#allocation6]
    $region13: #{pointnet2_forward.5} parent=1 // pred_fallthru
      _
    // Predicated region
    $region14: #{pointnet2_forward.5} parent=1 // pred_check
      _
    $region15: #{pointnet2_forward.5} parent=1 // pred_check_branch
      %49 = sbr.rel (0) target = $region17
    $region16: #{pointnet2_forward.5} parent=1 // pred_region
      %s51 = ssub.s32 1024, 1024
      %52 = vsyncadd [#allocation9], %s51
      %s53 = sshll.u32 [#allocation8], 4
      %s54 = int_to_ptr.vmem [resolvable:$true] %s53
      %59 = dma.hbm_to_vmem [thread:$0]  %s3, 1024, %s54, [#allocation9], 64, 64, 4
    $region17: #{pointnet2_forward.5} parent=1 // pred_fallthru
      _
    // Predicated region
    $region18: #{pointnet2_forward.5} parent=1 // pred_check
      _
    $region19: #{pointnet2_forward.5} parent=1 // pred_check_branch
      %61 = sbr.rel (0) target = $region21
    $region20: #{pointnet2_forward.5} parent=1 // pred_region
      %s63 = ssub.s32 16, 16
      %64 = vsyncadd [#allocation9], %s63
      %s66 = sshll.u32 [#allocation10], 4
      %s67 = int_to_ptr.vmem [resolvable:$true] %s66
      %69 = dma.hbm_to_vmem [thread:$0]  %s4, 16, %s67, [#allocation9]
    $region21: #{pointnet2_forward.5} parent=1 // pred_fallthru
      _
    // Predicated region
    $region22: #{pointnet2_forward.5} parent=1 // pred_check
      _
    $region23: #{pointnet2_forward.5} parent=1 // pred_check_branch
      %71 = sbr.rel (0) target = $region25
    $region24: #{pointnet2_forward.5} parent=1 // pred_region
      %72 = dma.done [#allocation3], 1024
    $region25: #{pointnet2_forward.5} parent=1 // pred_fallthru
      _
    // Predicated region
    $region26: #{pointnet2_forward.5} parent=1 // pred_check
      _
    $region27: #{pointnet2_forward.5} parent=1 // pred_check_branch
      %74 = sbr.rel (0) target = $region29
    $region28: #{pointnet2_forward.5} parent=1 // pred_region
      %75 = dma.done [#allocation6], 576
    $region29: #{pointnet2_forward.5} parent=1 // pred_fallthru
      _
    // Predicated region
    $region30: #{pointnet2_forward.5} parent=1 // pred_check
      _
    $region31: #{pointnet2_forward.5} parent=1 // pred_check_branch
      %77 = sbr.rel (0) target = $region33
    $region32: #{pointnet2_forward.5} parent=1 // pred_region
      %78 = dma.done [#allocation6], 16
    $region33: #{pointnet2_forward.5} parent=1 // pred_fallthru
      _
    // Predicated region
    $region34: #{pointnet2_forward.5} parent=1 // pred_check
      _
    $region35: #{pointnet2_forward.5} parent=1 // pred_check_branch
      %80 = sbr.rel (0) target = $region37
    $region36: #{pointnet2_forward.5} parent=1 // pred_region
      %81 = dma.done [#allocation9], 1024
    $region37: #{pointnet2_forward.5} parent=1 // pred_fallthru
      _
    // Predicated region
    $region38: #{pointnet2_forward.5} parent=1 // pred_check
      _
    $region39: #{pointnet2_forward.5} parent=1 // pred_check_branch
      %83 = sbr.rel (0) target = $region41
    $region40: #{pointnet2_forward.5} parent=1 // pred_region
      %84 = dma.done [#allocation9], 16
    $region41: #{pointnet2_forward.5} parent=1 // pred_fallthru
      _
    %v86 = vld [vmem:[#allocation5] sm:$0xf]
    %v87 = vld [vmem:[#allocation5 + $0x4] sm:$0xf]
    %v88 = vld [vmem:[#allocation5 + $0x8] sm:$0xf]
    %v89 = vld [vmem:[#allocation5 + $0xc] sm:$0xf]
    %v90 = vld [vmem:[#allocation5 + $0x10] sm:$0xf]
    %v91 = vld [vmem:[#allocation5 + $0x14] sm:$0xf]
    %v92 = vld [vmem:[#allocation5 + $0x18] sm:$0xf]
    %v93 = vld [vmem:[#allocation5 + $0x1c] sm:$0xf]
    %v94 = vld [vmem:[#allocation5 + $0x20] sm:$0xf]
    %v95 = vld [vmem:[#allocation7] sm:$0x1]
    %v96 = vld [vmem:[#allocation8] sm:$0xf]
    %v97 = vld [vmem:[#allocation8 + $0x4] sm:$0xf]
    %v98 = vld [vmem:[#allocation8 + $0x8] sm:$0xf]
    %v99 = vld [vmem:[#allocation8 + $0xc] sm:$0xf]
    %v100 = vld [vmem:[#allocation8 + $0x10] sm:$0xf]
    %v101 = vld [vmem:[#allocation8 + $0x14] sm:$0xf]
    %v102 = vld [vmem:[#allocation8 + $0x18] sm:$0xf]
    %v103 = vld [vmem:[#allocation8 + $0x1c] sm:$0xf]
    %v104 = vld [vmem:[#allocation8 + $0x20] sm:$0xf]
    %v105 = vld [vmem:[#allocation8 + $0x24] sm:$0xf]
    %v106 = vld [vmem:[#allocation8 + $0x28] sm:$0xf]
    %v107 = vld [vmem:[#allocation8 + $0x2c] sm:$0xf]
    %v108 = vld [vmem:[#allocation8 + $0x30] sm:$0xf]
    %v109 = vld [vmem:[#allocation8 + $0x34] sm:$0xf]
    %v110 = vld [vmem:[#allocation8 + $0x38] sm:$0xf]
    %v111 = vld [vmem:[#allocation8 + $0x3c] sm:$0xf]
    %v112 = vld [vmem:[#allocation10] sm:$0x1]
    %v113 = vld [vmem:[#allocation2] sm:$0xf]
    %v114 = vld [vmem:[#allocation2 + $0x4] sm:$0xf]
    %v115 = vld [vmem:[#allocation2 + $0x8] sm:$0xf]
    %v116 = vld [vmem:[#allocation2 + $0xc] sm:$0xf]
    %v117 = vld [vmem:[#allocation2 + $0x10] sm:$0xf]
    %v118 = vld [vmem:[#allocation2 + $0x14] sm:$0xf]
    %v119 = vld [vmem:[#allocation2 + $0x18] sm:$0xf]
    %v120 = vld [vmem:[#allocation2 + $0x1c] sm:$0xf]
    %v121 = vld [vmem:[#allocation2 + $0x20] sm:$0xf]
    %v122 = vld [vmem:[#allocation2 + $0x24] sm:$0xf]
    %v123 = vld [vmem:[#allocation2 + $0x28] sm:$0xf]
    %v124 = vld [vmem:[#allocation2 + $0x2c] sm:$0xf]
    %v125 = vld [vmem:[#allocation2 + $0x30] sm:$0xf]
    %v126 = vld [vmem:[#allocation2 + $0x34] sm:$0xf]
    %v127 = vld [vmem:[#allocation2 + $0x38] sm:$0xf]
    %v128 = vld [vmem:[#allocation2 + $0x3c] sm:$0xf]
    %v130 = vlaneseq
    %v131 = vshrl.u32 %v130, 7
    %v132 = vsub.s32 0, %v131
    %v133 = vrot.slane %v95, %v132
    %v151 = vunpack.c.l.b16 %v113
    %v152 = vunpack.c.l.b16 %v114
    %v153 = vunpack.c.l.b16 %v115
    %v154 = vunpack.c.l.b16 %v116
    %v155 = vunpack.c.l.b16 %v117
    %v156 = vunpack.c.l.b16 %v118
    %v157 = vunpack.c.l.b16 %v119
    %v158 = vunpack.c.l.b16 %v120
    %v159 = vunpack.c.l.b16 %v121
    %v160 = vunpack.c.l.b16 %v122
    %v161 = vunpack.c.l.b16 %v123
    %v162 = vunpack.c.l.b16 %v124
    %v163 = vunpack.c.l.b16 %v125
    %v164 = vunpack.c.l.b16 %v126
    %v165 = vunpack.c.l.b16 %v127
    %v166 = vunpack.c.l.b16 %v128
    %v167 = vpack.c.b16 %v152, %v151
    %v168 = vpack.c.b16 %v154, %v153
    %v169 = vpack.c.b16 %v156, %v155
    %v170 = vpack.c.b16 %v158, %v157
    %v171 = vpack.c.b16 %v160, %v159
    %v172 = vpack.c.b16 %v162, %v161
    %v173 = vpack.c.b16 %v164, %v163
    %v174 = vpack.c.b16 %v166, %v165
    %v184 = vunpack.c.l.b16 %v86
    %v185 = vunpack.c.l.b16 %v87
    %v186 = vunpack.c.l.b16 %v88
    %v187 = vunpack.c.l.b16 %v89
    %v188 = vunpack.c.l.b16 %v90
    %v189 = vunpack.c.l.b16 %v91
    %v190 = vunpack.c.l.b16 %v92
    %v191 = vunpack.c.l.b16 %v93
    %v192 = vunpack.c.l.b16 %v94
    %v193 = vpack.c.b16 %v185, %v184
    %v194 = vpack.c.b16 %v187, %v186
    %v195 = vpack.c.b16 %v189, %v188
    %v196 = vpack.c.b16 %v191, %v190
    %v197 = vpack.c.b16 %v192, %v192
    %vm202 = vcmask 588800
    %v204 = vsel %vm202, %v167, 0
    %v207 = vsel %vm202, %v168, 0
    %v210 = vsel %vm202, %v169, 0
    %v213 = vsel %vm202, %v170, 0
    %v216 = vsel %vm202, %v171, 0
    %v219 = vsel %vm202, %v172, 0
    %v222 = vsel %vm202, %v173, 0
    %v225 = vsel %vm202, %v174, 0
    %vm227 = vcmask 1043456
    %v229 = vsel %vm227, %v197, 0
    %231 = vmatprep.subr.bf16.mxu0 0
    %232 = vmatpush1.bf16.msra.mxu0 %v193
    %233 = vmatprep.subr.bf16.mxu0 0
    %234 = vmatpush1.bf16.msra.mxu0 %v194
    %235 = vmatprep.subr.bf16.mxu0 0
    %236 = vmatpush1.bf16.msra.mxu0 %v195
    %237 = vmatprep.subr.bf16.mxu0 0
    %238 = vmatpush1.bf16.msra.mxu0 %v196
    %239 = vmatprep.subr.bf16.mxu0 0
    %240 = vmatpush1.bf16.msra.mxu0 %v229
    %241 = vmatprep.subr.bf16.mxu0 0
    %242 = vmatpush1.bf16.msra.mxu0 0
    %243 = vmatprep.subr.bf16.mxu0 0
    %244 = vmatpush1.bf16.msra.mxu0 0
    %245 = vmatprep.subr.bf16.mxu0 0
    %246 = vmatpush1.bf16.msra.mxu0 0
    %247 = vmatprep.subr.bf16.mxu0 0
    %248 = vmatpush1.bf16.msra.mxu0 0
    %249 = vmatprep.subr.bf16.mxu0 0
    %250 = vmatpush1.bf16.msra.mxu0 0
    %251 = vmatprep.subr.bf16.mxu0 0
    %252 = vmatpush1.bf16.msra.mxu0 0
    %253 = vmatprep.subr.bf16.mxu0 0
    %254 = vmatpush1.bf16.msra.mxu0 0
    %255 = vmatprep.subr.bf16.mxu0 0
    %256 = vmatpush1.bf16.msra.mxu0 0
    %257 = vmatprep.subr.bf16.mxu0 0
    %258 = vmatpush1.bf16.msra.mxu0 0
    %259 = vmatprep.subr.bf16.mxu0 0
    %260 = vmatpush1.bf16.msra.mxu0 0
    %261 = vmatprep.subr.bf16.mxu0 0
    %262 = vmatpush1.bf16.msra.mxu0 0
    %263 = vmatprep.mubr.bf16.mxu0 0
    %264 = vmatmul.mubr.bf16.gmra.mrb[0].mxu0 %v204
    %v265 = vpop.f32.mrb[0].mxu0
    %v266 = vadd.f32 %v133, %v265
    %v267 = vpop.f32.mrb[0].mxu0
    %v268 = vpop.f32.mrb[0].mxu0
    %v269 = vadd.f32 %v133, %v268
    %v270 = vpop.f32.mrb[0].mxu0
    %271 = vmatprep.mubr.bf16.mxu0 0
    %272 = vmatmul.mubr.bf16.gmra.mrb[0].mxu0 %v207
    %v273 = vpop.f32.mrb[0].mxu0
    %v274 = vadd.f32 %v133, %v273
    %v275 = vpop.f32.mrb[0].mxu0
    %v276 = vpop.f32.mrb[0].mxu0
    %v277 = vadd.f32 %v133, %v276
    %v278 = vpop.f32.mrb[0].mxu0
    %279 = vmatprep.mubr.bf16.mxu0 0
    %280 = vmatmul.mubr.bf16.gmra.mrb[0].mxu0 %v210
    %v281 = vpop.f32.mrb[0].mxu0
    %v282 = vadd.f32 %v133, %v281
    %v283 = vpop.f32.mrb[0].mxu0
    %v284 = vpop.f32.mrb[0].mxu0
    %v285 = vadd.f32 %v133, %v284
    %v286 = vpop.f32.mrb[0].mxu0
    %287 = vmatprep.mubr.bf16.mxu0 0
    %288 = vmatmul.mubr.bf16.gmra.mrb[0].mxu0 %v213
    %v289 = vpop.f32.mrb[0].mxu0
    %v290 = vadd.f32 %v133, %v289
    %v291 = vpop.f32.mrb[0].mxu0
    %v292 = vpop.f32.mrb[0].mxu0
    %v293 = vadd.f32 %v133, %v292
    %v294 = vpop.f32.mrb[0].mxu0
    %295 = vmatprep.mubr.bf16.mxu0 0
    %296 = vmatmul.mubr.bf16.gmra.mrb[0].mxu0 %v216
    %v297 = vpop.f32.mrb[0].mxu0
    %v298 = vadd.f32 %v133, %v297
    %v299 = vpop.f32.mrb[0].mxu0
    %v300 = vpop.f32.mrb[0].mxu0
    %v301 = vadd.f32 %v133, %v300
    %v302 = vpop.f32.mrb[0].mxu0
    %303 = vmatprep.mubr.bf16.mxu0 0
    %304 = vmatmul.mubr.bf16.gmra.mrb[0].mxu0 %v219
    %v305 = vpop.f32.mrb[0].mxu0
    %v306 = vadd.f32 %v133, %v305
    %v307 = vpop.f32.mrb[0].mxu0
    %v308 = vpop.f32.mrb[0].mxu0
    %v309 = vadd.f32 %v133, %v308
    %v310 = vpop.f32.mrb[0].mxu0
    %311 = vmatprep.mubr.bf16.mxu0 0
    %312 = vmatmul.mubr.bf16.gmra.mrb[0].mxu0 %v222
    %v313 = vpop.f32.mrb[0].mxu0
    %v314 = vadd.f32 %v133, %v313
    %v315 = vpop.f32.mrb[0].mxu0
    %v316 = vpop.f32.mrb[0].mxu0
    %v317 = vadd.f32 %v133, %v316
    %v318 = vpop.f32.mrb[0].mxu0
    %319 = vmatprep.mubr.bf16.mxu0 0
    %320 = vmatmul.mubr.bf16.gmra.mrb[0].mxu0 %v225
    %v321 = vpop.f32.mrb[0].mxu0
    %v322 = vadd.f32 %v133, %v321
    %v323 = vpop.f32.mrb[0].mxu0
    %v324 = vpop.f32.mrb[0].mxu0
    %v325 = vadd.f32 %v133, %v324
    %v326 = vpop.f32.mrb[0].mxu0
    %327 = vdwg.mxu0
    %v328 = vmax.f32 %v266, 0.0
    %v329 = vmax.f32 %v269, 0.0
    %v330 = vmax.f32 %v274, 0.0
    %v331 = vmax.f32 %v277, 0.0
    %v332 = vmax.f32 %v282, 0.0
    %v333 = vmax.f32 %v285, 0.0
    %v334 = vmax.f32 %v290, 0.0
    %v335 = vmax.f32 %v293, 0.0
    %v336 = vmax.f32 %v298, 0.0
    %v337 = vmax.f32 %v301, 0.0
    %v338 = vmax.f32 %v306, 0.0
    %v339 = vmax.f32 %v309, 0.0
    %v340 = vmax.f32 %v314, 0.0
    %v341 = vmax.f32 %v317, 0.0
    %v342 = vmax.f32 %v322, 0.0
    %v343 = vmax.f32 %v325, 0.0
    %v344 = vpack.c.bf16 %v329, %v328
    %v345 = vpack.c.bf16 %v331, %v330
    %v346 = vpack.c.bf16 %v333, %v332
    %v347 = vpack.c.bf16 %v335, %v334
    %v348 = vpack.c.bf16 %v337, %v336
    %v349 = vpack.c.bf16 %v339, %v338
    %v350 = vpack.c.bf16 %v341, %v340
    %v351 = vpack.c.bf16 %v343, %v342
    %v353 = vlaneseq
    %v354 = vshrl.u32 %v353, 7
    %v355 = vsub.s32 0, %v354
    %v356 = vrot.slane %v112, %v355
    %v374 = vunpack.c.l.b16 %v96
    %v375 = vunpack.c.l.b16 %v97
    %v376 = vunpack.c.l.b16 %v98
    %v377 = vunpack.c.l.b16 %v99
    %v378 = vunpack.c.l.b16 %v100
    %v379 = vunpack.c.l.b16 %v101
    %v380 = vunpack.c.l.b16 %v102
    %v381 = vunpack.c.l.b16 %v103
    %v382 = vunpack.c.l.b16 %v104
    %v383 = vunpack.c.l.b16 %v105
    %v384 = vunpack.c.l.b16 %v106
    %v385 = vunpack.c.l.b16 %v107
    %v386 = vunpack.c.l.b16 %v108
    %v387 = vunpack.c.l.b16 %v109
    %v388 = vunpack.c.l.b16 %v110
    %v389 = vunpack.c.l.b16 %v111
    %v390 = vpack.c.b16 %v375, %v374
    %v391 = vpack.c.b16 %v377, %v376
    %v392 = vpack.c.b16 %v379, %v378
    %v393 = vpack.c.b16 %v381, %v380
    %v394 = vpack.c.b16 %v383, %v382
    %v395 = vpack.c.b16 %v385, %v384
    %v396 = vpack.c.b16 %v387, %v386
    %v397 = vpack.c.b16 %v389, %v388
    %406 = vmatprep.subr.bf16.mxu0 0
    %407 = vmatpush1.bf16.msra.mxu0 %v390
    %408 = vmatprep.subr.bf16.mxu0 0
    %409 = vmatpush1.bf16.msra.mxu0 %v391
    %410 = vmatprep.subr.bf16.mxu0 0
    %411 = vmatpush1.bf16.msra.mxu0 %v392
    %412 = vmatprep.subr.bf16.mxu0 0
    %413 = vmatpush1.bf16.msra.mxu0 %v393
    %414 = vmatprep.subr.bf16.mxu0 0
    %415 = vmatpush1.bf16.msra.mxu0 %v394
    %416 = vmatprep.subr.bf16.mxu0 0
    %417 = vmatpush1.bf16.msra.mxu0 %v395
    %418 = vmatprep.subr.bf16.mxu0 0
    %419 = vmatpush1.bf16.msra.mxu0 %v396
    %420 = vmatprep.subr.bf16.mxu0 0
    %421 = vmatpush1.bf16.msra.mxu0 %v397
    %422 = vmatprep.subr.bf16.mxu0 0
    %423 = vmatpush1.bf16.msra.mxu0 0
    %424 = vmatprep.subr.bf16.mxu0 0
    %425 = vmatpush1.bf16.msra.mxu0 0
    %426 = vmatprep.subr.bf16.mxu0 0
    %427 = vmatpush1.bf16.msra.mxu0 0
    %428 = vmatprep.subr.bf16.mxu0 0
    %429 = vmatpush1.bf16.msra.mxu0 0
    %430 = vmatprep.subr.bf16.mxu0 0
    %431 = vmatpush1.bf16.msra.mxu0 0
    %432 = vmatprep.subr.bf16.mxu0 0
    %433 = vmatpush1.bf16.msra.mxu0 0
    %434 = vmatprep.subr.bf16.mxu0 0
    %435 = vmatpush1.bf16.msra.mxu0 0
    %436 = vmatprep.subr.bf16.mxu0 0
    %437 = vmatpush1.bf16.msra.mxu0 0
    %438 = vmatprep.mubr.bf16.mxu0 0
    %439 = vmatmul.mubr.bf16.gmra.mrb[0].mxu0 %v344
    %v440 = vpop.f32.mrb[0].mxu0
    %v441 = vadd.f32 %v356, %v440
    %v442 = vpop.f32.mrb[0].mxu0
    %v443 = vpop.f32.mrb[0].mxu0
    %v444 = vadd.f32 %v356, %v443
    %v445 = vpop.f32.mrb[0].mxu0
    %446 = vmatprep.mubr.bf16.mxu0 0
    %447 = vmatmul.mubr.bf16.gmra.mrb[0].mxu0 %v345
    %v448 = vpop.f32.mrb[0].mxu0
    %v449 = vadd.f32 %v356, %v448
    %v450 = vpop.f32.mrb[0].mxu0
    %v451 = vpop.f32.mrb[0].mxu0
    %v452 = vadd.f32 %v356, %v451
    %v453 = vpop.f32.mrb[0].mxu0
    %454 = vmatprep.mubr.bf16.mxu0 0
    %455 = vmatmul.mubr.bf16.gmra.mrb[0].mxu0 %v346
    %v456 = vpop.f32.mrb[0].mxu0
    %v457 = vadd.f32 %v356, %v456
    %v458 = vpop.f32.mrb[0].mxu0
    %v459 = vpop.f32.mrb[0].mxu0
    %v460 = vadd.f32 %v356, %v459
    %v461 = vpop.f32.mrb[0].mxu0
    %462 = vmatprep.mubr.bf16.mxu0 0
    %463 = vmatmul.mubr.bf16.gmra.mrb[0].mxu0 %v347
    %v464 = vpop.f32.mrb[0].mxu0
    %v465 = vadd.f32 %v356, %v464
    %v466 = vpop.f32.mrb[0].mxu0
    %v467 = vpop.f32.mrb[0].mxu0
    %v468 = vadd.f32 %v356, %v467
    %v469 = vpop.f32.mrb[0].mxu0
    %470 = vmatprep.mubr.bf16.mxu0 0
    %471 = vmatmul.mubr.bf16.gmra.mrb[0].mxu0 %v348
    %v472 = vpop.f32.mrb[0].mxu0
    %v473 = vadd.f32 %v356, %v472
    %v474 = vpop.f32.mrb[0].mxu0
    %v475 = vpop.f32.mrb[0].mxu0
    %v476 = vadd.f32 %v356, %v475
    %v477 = vpop.f32.mrb[0].mxu0
    %478 = vmatprep.mubr.bf16.mxu0 0
    %479 = vmatmul.mubr.bf16.gmra.mrb[0].mxu0 %v349
    %v480 = vpop.f32.mrb[0].mxu0
    %v481 = vadd.f32 %v356, %v480
    %v482 = vpop.f32.mrb[0].mxu0
    %v483 = vpop.f32.mrb[0].mxu0
    %v484 = vadd.f32 %v356, %v483
    %v485 = vpop.f32.mrb[0].mxu0
    %486 = vmatprep.mubr.bf16.mxu0 0
    %487 = vmatmul.mubr.bf16.gmra.mrb[0].mxu0 %v350
    %v488 = vpop.f32.mrb[0].mxu0
    %v489 = vadd.f32 %v356, %v488
    %v490 = vpop.f32.mrb[0].mxu0
    %v491 = vpop.f32.mrb[0].mxu0
    %v492 = vadd.f32 %v356, %v491
    %v493 = vpop.f32.mrb[0].mxu0
    %494 = vmatprep.mubr.bf16.mxu0 0
    %495 = vmatmul.mubr.bf16.gmra.mrb[0].mxu0 %v351
    %v496 = vpop.f32.mrb[0].mxu0
    %v497 = vadd.f32 %v356, %v496
    %v498 = vpop.f32.mrb[0].mxu0
    %v499 = vpop.f32.mrb[0].mxu0
    %v500 = vadd.f32 %v356, %v499
    %v501 = vpop.f32.mrb[0].mxu0
    %502 = vdwg.mxu0
    %v503 = vmax.f32 %v441, %v444
    %v504 = vrot.slane %v503, 4
    %v505 = vmax.f32 %v503, %v504
    %v506 = vrot.slane %v505, 2
    %v507 = vmax.f32 %v505, %v506
    %v508 = vrot.slane %v507, 1
    %v509 = vmax.f32 %v507, %v508
    %v510 = vmax.f32 %v449, %v452
    %v511 = vrot.slane %v510, 4
    %v512 = vmax.f32 %v510, %v511
    %v513 = vrot.slane %v512, 2
    %v514 = vmax.f32 %v512, %v513
    %v515 = vrot.slane %v514, 1
    %v516 = vmax.f32 %v514, %v515
    %v517 = vmax.f32 %v457, %v460
    %v518 = vrot.slane %v517, 4
    %v519 = vmax.f32 %v517, %v518
    %v520 = vrot.slane %v519, 2
    %v521 = vmax.f32 %v519, %v520
    %v522 = vrot.slane %v521, 1
    %v523 = vmax.f32 %v521, %v522
    %v524 = vmax.f32 %v465, %v468
    %v525 = vrot.slane %v524, 4
    %v526 = vmax.f32 %v524, %v525
    %v527 = vrot.slane %v526, 2
    %v528 = vmax.f32 %v526, %v527
    %v529 = vrot.slane %v528, 1
    %v530 = vmax.f32 %v528, %v529
    %v531 = vmax.f32 %v473, %v476
    %v532 = vrot.slane %v531, 4
    %v533 = vmax.f32 %v531, %v532
    %v534 = vrot.slane %v533, 2
    %v535 = vmax.f32 %v533, %v534
    %v536 = vrot.slane %v535, 1
    %v537 = vmax.f32 %v535, %v536
    %v538 = vmax.f32 %v481, %v484
    %v539 = vrot.slane %v538, 4
    %v540 = vmax.f32 %v538, %v539
    %v541 = vrot.slane %v540, 2
    %v542 = vmax.f32 %v540, %v541
    %v543 = vrot.slane %v542, 1
    %v544 = vmax.f32 %v542, %v543
    %v545 = vmax.f32 %v489, %v492
    %v546 = vrot.slane %v545, 4
    %v547 = vmax.f32 %v545, %v546
    %v548 = vrot.slane %v547, 2
    %v549 = vmax.f32 %v547, %v548
    %v550 = vrot.slane %v549, 1
    %v551 = vmax.f32 %v549, %v550
    %v552 = vmax.f32 %v497, %v500
    %v553 = vrot.slane %v552, 4
    %v554 = vmax.f32 %v552, %v553
    %v555 = vrot.slane %v554, 2
    %v556 = vmax.f32 %v554, %v555
    %v557 = vrot.slane %v556, 1
    %v558 = vmax.f32 %v556, %v557
    %v559 = vpack.c.bf16 %v509, %v509
    %v560 = vpack.c.bf16 %v516, %v516
    %v561 = vpack.c.bf16 %v523, %v523
    %v562 = vpack.c.bf16 %v530, %v530
    %v563 = vpack.c.bf16 %v537, %v537
    %v564 = vpack.c.bf16 %v544, %v544
    %v565 = vpack.c.bf16 %v551, %v551
    %v566 = vpack.c.bf16 %v558, %v558
    %v575 = vunpack.c.l.b16 %v559
    %v576 = vunpack.c.l.b16 %v560
    %v577 = vunpack.c.l.b16 %v561
    %v578 = vunpack.c.l.b16 %v562
    %v579 = vunpack.c.l.b16 %v563
    %v580 = vunpack.c.l.b16 %v564
    %v581 = vunpack.c.l.b16 %v565
    %v582 = vunpack.c.l.b16 %v566
    %v583 = vpack.c.b16 %v575, %v575
    %v584 = vpack.c.b16 %v576, %v576
    %v585 = vpack.c.b16 %v577, %v577
    %v586 = vpack.c.b16 %v578, %v578
    %v587 = vpack.c.b16 %v579, %v579
    %v588 = vpack.c.b16 %v580, %v580
    %v589 = vpack.c.b16 %v581, %v581
    %v590 = vpack.c.b16 %v582, %v582
    %v591 = vunpack.c.l.b16 %v583
    %v592 = vunpack.c.l.b16 %v584
    %v593 = vunpack.c.l.b16 %v585
    %v594 = vunpack.c.l.b16 %v586
    %v595 = vunpack.c.l.b16 %v587
    %v596 = vunpack.c.l.b16 %v588
    %v597 = vunpack.c.l.b16 %v589
    %v598 = vunpack.c.l.b16 %v590
    %vm599 = vcmask 1041409
    %v600 = vsel %vm599, %v592, %v591
    %vm601 = vcmask 1042434
    %v602 = vsel %vm601, %v593, %v600
    %vm603 = vcmask 1043459
    %v604 = vsel %vm603, %v594, %v602
    %vm605 = vcmask 1044484
    %v606 = vsel %vm605, %v595, %v604
    %vm607 = vcmask 1045509
    %v608 = vsel %vm607, %v596, %v606
    %vm609 = vcmask 1046534
    %v610 = vsel %vm609, %v597, %v608
    %vm611 = vcmask 1047559
    %v612 = vsel %vm611, %v598, %v610
    %v613 = vpack.c.b16 %v612, %v612
    %615 = vst [vmem:[#allocation11] sm:$0xf] %v613
    // Predicated region
    $region42: #{pointnet2_forward.5} parent=1 // pred_check
      _
    $region43: #{pointnet2_forward.5} parent=1 // pred_check_branch
      %617 = sbr.rel (0) target = $region45
    $region44: #{pointnet2_forward.5} parent=1 // pred_region
      %s619 = ssub.s32 64, 64
      %620 = vsyncadd [#allocation4], %s619
      %s622 = sshll.u32 [#allocation11], 4
      %s623 = int_to_ptr.vmem [resolvable:$true] %s622
      %625 = dma.vmem_to_hbm [thread:$0]  %s623, 64, %s5, [#allocation4]
    $region45: #{pointnet2_forward.5} parent=1 // pred_fallthru
      _
    // Predicated region
    $region46: #{pointnet2_forward.5} parent=1 // pred_check
      _
    $region47: #{pointnet2_forward.5} parent=1 // pred_check_branch
      %627 = sbr.rel (0) target = $region49
    $region48: #{pointnet2_forward.5} parent=1 // pred_region
      %628 = dma.done [#allocation4], 64
    $region49: #{pointnet2_forward.5} parent=1 // pred_fallthru
      _
    %629 = vsyncpa [#allocation3], 1
    %630 = vsyncpa [#allocation6], 1
    %631 = vsyncpa [#allocation9], 1
    %632 = vsyncpa [#allocation4], 1

// kernel: pointnet2_forward.6
$region0: #{pointnet2_forward.6}
  #allocation0 [shape = 'u32[]', space=smem, size = 0x4, offset = 0x4, fixed_abs, tag = 'smem constant byte address 0x4 - core index']
  #allocation1 [shape = 'u32[144,128]{1,0:T(1,128)}', space=vmem, size = 0x12000, scoped, tag = 'internal scratch']
  %s0 = inlined_call_operand.hbm [shape: bf16[2,8,256], index: 0, kind: input, shape index: {}]
  %s1 = inlined_call_operand.hbm [shape: bf16[256,256], index: 1, kind: input, shape index: {}]
  %s2 = inlined_call_operand.hbm [shape: f32[1,256], index: 2, kind: input, shape index: {}]
  %s3 = inlined_call_operand.hbm [shape: bf16[256,256], index: 3, kind: input, shape index: {}]
  %s4 = inlined_call_operand.hbm [shape: f32[1,256], index: 4, kind: input, shape index: {}]
  %s5 = inlined_call_operand.hbm [shape: f32[2,1,256], index: 5, kind: output, shape index: {}]
  %s6 = sld [smem:[#allocation0]]
  $region73: #{pointnet2_forward.6} parent=0
    _
  %s8 = ssub.s32 1, %s6
  %s9 = scalar_select 0, %s8, %s6
  $region1: #{pointnet2_forward.6} parent=0
    #allocation2 [shape = 'u8[8192]{0}', space=vmem, size = 0x2000, scoped, tag = 'input window, operand 0']
    #allocation3 [shape = 's32[2]{0}', space=sflag, size = 0x8, scoped, tag = 'scoped memory for pointnet2_forward.6']
    #allocation4 [shape = 's32[2]{0}', space=sflag, size = 0x8, scoped, tag = 'scoped memory for pointnet2_forward.6']
    #allocation5 [shape = 'u8[131072]{0}', space=vmem, size = 0x20000, scoped, tag = 'input window, operand 1, single buffered']
    #allocation6 [shape = 's32[1]{0}', space=sflag, size = 0x4, scoped, tag = 'scoped memory for pointnet2_forward.6']
    #allocation7 [shape = 'u8[1024]{0}', space=vmem, size = 0x400, scoped, tag = 'input window, operand 2, single buffered']
    #allocation8 [shape = 'u8[131072]{0}', space=vmem, size = 0x20000, scoped, tag = 'input window, operand 3, single buffered']
    #allocation9 [shape = 's32[1]{0}', space=sflag, size = 0x4, scoped, tag = 'scoped memory for pointnet2_forward.6']
    #allocation10 [shape = 'u8[1024]{0}', space=vmem, size = 0x400, scoped, tag = 'input window, operand 4, single buffered']
    #allocation11 [shape = 'u8[2048]{0}', space=vmem, size = 0x800, scoped, tag = 'output window, operand 0']
    %10 = vsyncpa [#allocation3], 0
    %s11 = scalar_lea.sflag [#allocation3], 1
    %12 = vsyncpa %s11, 0
    %13 = vsyncpa [#allocation6], 0
    %14 = vsyncpa [#allocation9], 0
    %15 = vsyncpa [#allocation4], 0
    %s16 = scalar_lea.sflag [#allocation4], 1
    %17 = vsyncpa %s16, 0
    loop: start=0, step=1, limit=4
    $region2: #{pointnet2_forward.6} parent=1 // loop_pre_header
      _
    $region3: #{pointnet2_forward.6} parent=1 // loop_header
      %s19 = sphi 0, %s23
      %p20 = scmp.ge.s32.totalorder %s19, 4
      %s29 = sphi 0, %s31
      %s32 = sphi 0, %s29
      %s33 = sphi 0, %s32
      %s49 = sphi 0, %s33
      %s53 = sphi 0, %s53
      %s55 = sphi 0, %s53
      %s56 = sphi 0, %s55
      %s70 = sphi 0, %s56
      %s74 = sphi 0, %s74
      %s76 = sphi 0, %s74
      %s77 = sphi 0, %s76
      %s91 = sphi 0, %s77
      %s95 = sphi 0, %s95
      %s97 = sphi 0, %s95
      %s98 = sphi 0, %s97
      %s112 = sphi 0, %s98
      %s116 = sphi 0, %s116
      %s118 = sphi 0, %s116
      %s119 = sphi 0, %s118
      %s133 = sphi 0, %s119
      %s139 = sphi 0, %s141
      %s142 = sphi 0, %s139
      %s143 = sphi 0, %s142
      %s159 = sphi 0, %s143
    $region4: #{pointnet2_forward.6} parent=1 // loop_header_branch
      %22 = sbr.rel (%p20) target = $region8
    $region5: #{pointnet2_forward.6} parent=1 // loop_body
      %s24 = ssub.s32 %s19, 1
      %s25 = ssub.s32 %s19, 2
      %s26 = sadd.s32 %s19, 1
      %s27 = ssub.s32 %s19, %s26
      %p28 = scmp.eq.s32.totalorder %s27, 0
      %s30 = sadd.s32 %s29, 1
      %s31 = scalar_select %p28, %s29, %s30
      %p34 = pneg %p28
      %p35 = scmp.eq.s32.totalorder %s19, 1
      %p36 = por %p34, %p35
      %p37 = scmp.ne.s32.totalorder %s29, %s32
      %p38 = scmp.eq.s32.totalorder %s19, 0
      %p39 = por %p37, %p38
      %p40 = scmp.ne.s32.totalorder %s29, %s32
      %p41 = scmp.eq.s32.totalorder %s24, 1
      %p42 = por %p40, %p41
      %p43 = scmp.ne.s32.totalorder %s32, %s33
      %p44 = scmp.eq.s32.totalorder %s24, 0
      %p45 = por %p43, %p44
      %p46 = scmp.ne.s32.totalorder %s32, %s33
      %p47 = scmp.eq.s32.totalorder %s25, 1
      %p48 = por %p46, %p47
      %p50 = scmp.ne.s32.totalorder %s33, %s49
      %p51 = scmp.eq.s32.totalorder %s25, 0
      %p52 = por %p50, %p51
      %s54 = sadd.s32 %s53, 1
      %p57 = scmp.eq.s32.totalorder %s19, 1
      %p58 = scmp.ne.s32.totalorder %s53, %s55
      %p59 = scmp.eq.s32.totalorder %s19, 0
      %p60 = por %p58, %p59
      %p61 = scmp.ne.s32.totalorder %s53, %s55
      %p62 = scmp.eq.s32.totalorder %s24, 1
      %p63 = por %p61, %p62
      %p64 = scmp.ne.s32.totalorder %s55, %s56
      %p65 = scmp.eq.s32.totalorder %s24, 0
      %p66 = por %p64, %p65
      %p67 = scmp.ne.s32.totalorder %s55, %s56
      %p68 = scmp.eq.s32.totalorder %s25, 1
      %p69 = por %p67, %p68
      %p71 = scmp.ne.s32.totalorder %s56, %s70
      %p72 = scmp.eq.s32.totalorder %s25, 0
      %p73 = por %p71, %p72
      %s75 = sadd.s32 %s74, 1
      %p78 = scmp.eq.s32.totalorder %s19, 1
      %p79 = scmp.ne.s32.totalorder %s74, %s76
      %p80 = scmp.eq.s32.totalorder %s19, 0
      %p81 = por %p79, %p80
      %p82 = scmp.ne.s32.totalorder %s74, %s76
      %p83 = scmp.eq.s32.totalorder %s24, 1
      %p84 = por %p82, %p83
      %p85 = scmp.ne.s32.totalorder %s76, %s77
      %p86 = scmp.eq.s32.totalorder %s24, 0
      %p87 = por %p85, %p86
      %p88 = scmp.ne.s32.totalorder %s76, %s77
      %p89 = scmp.eq.s32.totalorder %s25, 1
      %p90 = por %p88, %p89
      %p92 = scmp.ne.s32.totalorder %s77, %s91
      %p93 = scmp.eq.s32.totalorder %s25, 0
      %p94 = por %p92, %p93
      %s96 = sadd.s32 %s95, 1
      %p99 = scmp.eq.s32.totalorder %s19, 1
      %p100 = scmp.ne.s32.totalorder %s95, %s97
      %p101 = scmp.eq.s32.totalorder %s19, 0
      %p102 = por %p100, %p101
      %p103 = scmp.ne.s32.totalorder %s95, %s97
      %p104 = scmp.eq.s32.totalorder %s24, 1
      %p105 = por %p103, %p104
      %p106 = scmp.ne.s32.totalorder %s97, %s98
      %p107 = scmp.eq.s32.totalorder %s24, 0
      %p108 = por %p106, %p107
      %p109 = scmp.ne.s32.totalorder %s97, %s98
      %p110 = scmp.eq.s32.totalorder %s25, 1
      %p111 = por %p109, %p110
      %p113 = scmp.ne.s32.totalorder %s98, %s112
      %p114 = scmp.eq.s32.totalorder %s25, 0
      %p115 = por %p113, %p114
      %s117 = sadd.s32 %s116, 1
      %p120 = scmp.eq.s32.totalorder %s19, 1
      %p121 = scmp.ne.s32.totalorder %s116, %s118
      %p122 = scmp.eq.s32.totalorder %s19, 0
      %p123 = por %p121, %p122
      %p124 = scmp.ne.s32.totalorder %s116, %s118
      %p125 = scmp.eq.s32.totalorder %s24, 1
      %p126 = por %p124, %p125
      %p127 = scmp.ne.s32.totalorder %s118, %s119
      %p128 = scmp.eq.s32.totalorder %s24, 0
      %p129 = por %p127, %p128
      %p130 = scmp.ne.s32.totalorder %s118, %s119
      %p131 = scmp.eq.s32.totalorder %s25, 1
      %p132 = por %p130, %p131
      %p134 = scmp.ne.s32.totalorder %s119, %s133
      %p135 = scmp.eq.s32.totalorder %s25, 0
      %p136 = por %p134, %p135
      %s137 = ssub.s32 %s19, %s26
      %p138 = scmp.eq.s32.totalorder %s137, 0
      %s140 = sadd.s32 %s139, 1
      %s141 = scalar_select %p138, %s139, %s140
      %p144 = pneg %p138
      %p145 = scmp.eq.s32.totalorder %s19, 1
      %p146 = por %p144, %p145
      %p147 = scmp.ne.s32.totalorder %s139, %s142
      %p148 = scmp.eq.s32.totalorder %s19, 0
      %p149 = por %p147, %p148
      %p150 = scmp.ne.s32.totalorder %s139, %s142
      %p151 = scmp.eq.s32.totalorder %s24, 1
      %p152 = por %p150, %p151
      %p153 = scmp.ne.s32.totalorder %s142, %s143
      %p154 = scmp.eq.s32.totalorder %s24, 0
      %p155 = por %p153, %p154
      %p156 = scmp.ne.s32.totalorder %s142, %s143
      %p157 = scmp.eq.s32.totalorder %s25, 1
      %p158 = por %p156, %p157
      %p160 = scmp.ne.s32.totalorder %s143, %s159
      %p161 = scmp.eq.s32.totalorder %s25, 0
      %p162 = por %p160, %p161
      %p163 = scmp.le.s32.totalorder 1, %s19
      %p164 = scmp.lt.s32.totalorder %s19, 3
      %p165 = pnand %p163, %p164
      %p166 = pneg %p165
      // Predicated region
      $region9: #{pointnet2_forward.6} parent=5 // pred_check
        _
      $region10: #{pointnet2_forward.6} parent=5 // pred_check_branch
        %168 = sbr.rel (%p165) target = $region12
      $region11: #{pointnet2_forward.6} parent=5 // pred_region
        %s169 = ssub.s32 %s19, 1
        // Predicated region
        $region13: #{pointnet2_forward.6} parent=11 // pred_check
          %p170 = pneg %p66
        $region14: #{pointnet2_forward.6} parent=11 // pred_check_branch
          %172 = sbr.rel (%p170) target = $region16
        $region15: #{pointnet2_forward.6} parent=11 // pred_region
          %s174 = ssub.s32 4096, 4096
          %175 = vsyncadd [#allocation6], %s174
          %s176 = sshll.u32 [#allocation5], 4
          %s177 = int_to_ptr.vmem [resolvable:$true] %s176
          %182 = dma.hbm_to_vmem [thread:$0]  %s1, 4096, %s177, [#allocation6], 128, 128, 8
        $region16: #{pointnet2_forward.6} parent=11 // pred_fallthru
          _
        // Predicated region
        $region17: #{pointnet2_forward.6} parent=11 // pred_check
          %p183 = pneg %p87
        $region18: #{pointnet2_forward.6} parent=11 // pred_check_branch
          %185 = sbr.rel (%p183) target = $region20
        $region19: #{pointnet2_forward.6} parent=11 // pred_region
          %s187 = ssub.s32 32, 32
          %188 = vsyncadd [#allocation6], %s187
          %s190 = sshll.u32 [#allocation7], 4
          %s191 = int_to_ptr.vmem [resolvable:$true] %s190
          %193 = dma.hbm_to_vmem [thread:$0]  %s2, 32, %s191, [#allocation6]
        $region20: #{pointnet2_forward.6} parent=11 // pred_fallthru
          _
        // Predicated region
        $region21: #{pointnet2_forward.6} parent=11 // pred_check
          %p194 = pneg %p108
        $region22: #{pointnet2_forward.6} parent=11 // pred_check_branch
          %196 = sbr.rel (%p194) target = $region24
        $region23: #{pointnet2_forward.6} parent=11 // pred_region
          %s198 = ssub.s32 4096, 4096
          %199 = vsyncadd [#allocation9], %s198
          %s200 = sshll.u32 [#allocation8], 4
          %s201 = int_to_ptr.vmem [resolvable:$true] %s200
          %206 = dma.hbm_to_vmem [thread:$0]  %s3, 4096, %s201, [#allocation9], 128, 128, 8
        $region24: #{pointnet2_forward.6} parent=11 // pred_fallthru
          _
        // Predicated region
        $region25: #{pointnet2_forward.6} parent=11 // pred_check
          %p207 = pneg %p129
        $region26: #{pointnet2_forward.6} parent=11 // pred_check_branch
          %209 = sbr.rel (%p207) target = $region28
        $region27: #{pointnet2_forward.6} parent=11 // pred_region
          %s211 = ssub.s32 32, 32
          %212 = vsyncadd [#allocation9], %s211
          %s214 = sshll.u32 [#allocation10], 4
          %s215 = int_to_ptr.vmem [resolvable:$true] %s214
          %217 = dma.hbm_to_vmem [thread:$0]  %s4, 32, %s215, [#allocation9]
        $region28: #{pointnet2_forward.6} parent=11 // pred_fallthru
          _
      $region12: #{pointnet2_forward.6} parent=5 // pred_fallthru
        _
      %p218 = scmp.lt.s32.totalorder %s19, 2
      // Predicated region
      $region29: #{pointnet2_forward.6} parent=5 // pred_check
        %p219 = pneg %p218
      $region30: #{pointnet2_forward.6} parent=5 // pred_check_branch
        %221 = sbr.rel (%p219) target = $region32
      $region31: #{pointnet2_forward.6} parent=5 // pred_region
        // Predicated region
        $region33: #{pointnet2_forward.6} parent=31 // pred_check
          %p222 = pneg %p39
        $region34: #{pointnet2_forward.6} parent=31 // pred_check_branch
          %224 = sbr.rel (%p222) target = $region36
        $region35: #{pointnet2_forward.6} parent=31 // pred_region
          %s225 = sand.u32 %s29, 1
          %s226 = scalar_lea.sflag [#allocation3], %s225
          %s227 = sand.u32 %s29, 1
          %s228 = smul.addr %s227, 8
          %s229 = scalar_lea.vmem [#allocation2], %s228
          %s231 = ssub.s32 128, 128
          %232 = vsyncadd %s226, %s231
          %s233 = smul.addr %s19, 2
          %s234 = smul.addr %s233, 64
          %s235 = scalar_lea.hbm %s0, %s234
          %s237 = sshll.u32 %s229, 4
          %s238 = int_to_ptr.vmem [resolvable:$true] %s237
          %240 = dma.hbm_to_vmem [thread:$0]  %s235, 128, %s238, %s226
        $region36: #{pointnet2_forward.6} parent=31 // pred_fallthru
          _
      $region32: #{pointnet2_forward.6} parent=5 // pred_fallthru
        _
      %p241 = scmp.le.s32.totalorder 1, %s19
      %p242 = scmp.lt.s32.totalorder %s19, 3
      %p243 = pnand %p241, %p242
      %p244 = pneg %p243
      // Predicated region
      $region37: #{pointnet2_forward.6} parent=5 // pred_check
        _
      $region38: #{pointnet2_forward.6} parent=5 // pred_check_branch
        %246 = sbr.rel (%p243) target = $region40
      $region39: #{pointnet2_forward.6} parent=5 // pred_region
        %s247 = ssub.s32 %s19, 1
        %s248 = sand.u32 %s32, 1
        %s249 = scalar_lea.sflag [#allocation3], %s248
        %s250 = sand.u32 %s32, 1
        %s251 = smul.addr %s250, 8
        %s252 = scalar_lea.vmem [#allocation2], %s251
        // Predicated region
        $region41: #{pointnet2_forward.6} parent=39 // pred_check
          %p253 = pneg %p45
        $region42: #{pointnet2_forward.6} parent=39 // pred_check_branch
          %255 = sbr.rel (%p253) target = $region44
        $region43: #{pointnet2_forward.6} parent=39 // pred_region
          %256 = dma.done %s249, 128
        $region44: #{pointnet2_forward.6} parent=39 // pred_fallthru
          _
        // Predicated region
        $region45: #{pointnet2_forward.6} parent=39 // pred_check
          %p257 = pneg %p66
        $region46: #{pointnet2_forward.6} parent=39 // pred_check_branch
          %259 = sbr.rel (%p257) target = $region48
        $region47: #{pointnet2_forward.6} parent=39 // pred_region
          %260 = dma.done [#allocation6], 4096
        $region48: #{pointnet2_forward.6} parent=39 // pred_fallthru
          _
        // Predicated region
        $region49: #{pointnet2_forward.6} parent=39 // pred_check
          %p261 = pneg %p87
        $region50: #{pointnet2_forward.6} parent=39 // pred_check_branch
          %263 = sbr.rel (%p261) target = $region52
        $region51: #{pointnet2_forward.6} parent=39 // pred_region
          %264 = dma.done [#allocation6], 32
        $region52: #{pointnet2_forward.6} parent=39 // pred_fallthru
          _
        // Predicated region
        $region53: #{pointnet2_forward.6} parent=39 // pred_check
          %p265 = pneg %p108
        $region54: #{pointnet2_forward.6} parent=39 // pred_check_branch
          %267 = sbr.rel (%p265) target = $region56
        $region55: #{pointnet2_forward.6} parent=39 // pred_region
          %268 = dma.done [#allocation9], 4096
        $region56: #{pointnet2_forward.6} parent=39 // pred_fallthru
          _
        // Predicated region
        $region57: #{pointnet2_forward.6} parent=39 // pred_check
          %p269 = pneg %p129
        $region58: #{pointnet2_forward.6} parent=39 // pred_check_branch
          %271 = sbr.rel (%p269) target = $region60
        $region59: #{pointnet2_forward.6} parent=39 // pred_region
          %272 = dma.done [#allocation9], 32
        $region60: #{pointnet2_forward.6} parent=39 // pred_fallthru
          _
        %s273 = sand.u32 %s32, 1
        %s274 = scalar_lea.sflag [#allocation3], %s273
        %s275 = sand.u32 %s32, 1
        %s276 = smul.addr %s275, 8
        %s277 = scalar_lea.vmem [#allocation2], %s276
        %p278 = pneg %p45
        %p279 = pneg %p42
        %p280 = pneg %p66
        %p281 = pneg %p63
        %p282 = pneg %p87
        %p283 = pneg %p84
        %p284 = pneg %p108
        %p285 = pneg %p105
        %p286 = pneg %p129
        %p287 = pneg %p126
        %p288 = pneg %p155
        %p289 = pneg %p152
        %s290 = sand.u32 %s142, 1
        %s291 = scalar_lea.sflag [#allocation4], %s290
        %s292 = sand.u32 %s142, 1
        %s293 = smul.addr %s292, 2
        %s294 = scalar_lea.vmem [#allocation11], %s293
        %v295 = vld [vmem:[%s252] sm:$0xff]
        %v296 = vld [vmem:[#allocation5] sm:$0xff]
        %v297 = vld [vmem:[#allocation5 + $0x8] sm:$0xff]
        %v298 = vld [vmem:[#allocation5 + $0x10] sm:$0xff]
        %v299 = vld [vmem:[#allocation5 + $0x18] sm:$0xff]
        %v300 = vld [vmem:[#allocation5 + $0x20] sm:$0xff]
        %v301 = vld [vmem:[#allocation5 + $0x28] sm:$0xff]
        %v302 = vld [vmem:[#allocation5 + $0x30] sm:$0xff]
        %v303 = vld [vmem:[#allocation5 + $0x38] sm:$0xff]
        %v304 = vld [vmem:[#allocation5 + $0x40] sm:$0xff]
        %v305 = vld [vmem:[#allocation5 + $0x48] sm:$0xff]
        %v306 = vld [vmem:[#allocation5 + $0x50] sm:$0xff]
        %v307 = vld [vmem:[#allocation5 + $0x58] sm:$0xff]
        %v308 = vld [vmem:[#allocation5 + $0x60] sm:$0xff]
        %v309 = vld [vmem:[#allocation5 + $0x68] sm:$0xff]
        %v310 = vld [vmem:[#allocation5 + $0x70] sm:$0xff]
        %v311 = vld [vmem:[#allocation5 + $0x78] sm:$0xff]
        %v312 = vld [vmem:[#allocation5 + $0x80] sm:$0xff]
        %v313 = vld [vmem:[#allocation5 + $0x88] sm:$0xff]
        %v314 = vld [vmem:[#allocation5 + $0x90] sm:$0xff]
        %v315 = vld [vmem:[#allocation5 + $0x98] sm:$0xff]
        %v316 = vld [vmem:[#allocation5 + $0xa0] sm:$0xff]
        %v317 = vld [vmem:[#allocation5 + $0xa8] sm:$0xff]
        %v318 = vld [vmem:[#allocation5 + $0xb0] sm:$0xff]
        %v319 = vld [vmem:[#allocation5 + $0xb8] sm:$0xff]
        %v320 = vld [vmem:[#allocation5 + $0xc0] sm:$0xff]
        %v321 = vld [vmem:[#allocation5 + $0xc8] sm:$0xff]
        %v322 = vld [vmem:[#allocation5 + $0xd0] sm:$0xff]
        %v323 = vld [vmem:[#allocation5 + $0xd8] sm:$0xff]
        %v324 = vld [vmem:[#allocation5 + $0xe0] sm:$0xff]
        %v325 = vld [vmem:[#allocation5 + $0xe8] sm:$0xff]
        %v326 = vld [vmem:[#allocation5 + $0xf0] sm:$0xff]
        %v327 = vld [vmem:[#allocation5 + $0xf8] sm:$0xff]
        %v328 = vld [vmem:[#allocation7] sm:$0x3]
        %v330 = vlaneseq
        %v331 = vshrl.u32 %v330, 7
        %v332 = vsub.s32 0, %v331
        %v333 = vrot.slane %v328, %v332
        %v334 = vlaneseq
        %v335 = vshrl.u32 %v334, 7
        %v336 = vsub.s32 1, %v335
        %v337 = vrot.slane %v328, %v336
        %v341 = vunpack.c.l.b16 %v295
        %v342 = vunpack.c.h.b16 %v295
        %v343 = vpack.c.b16 %v341, %v341
        %v344 = vpack.c.b16 %v342, %v342
        %v379 = vunpack.c.l.b16 %v296
        %v380 = vunpack.c.h.b16 %v296
        %v381 = vunpack.c.l.b16 %v297
        %v382 = vunpack.c.h.b16 %v297
        %v383 = vunpack.c.l.b16 %v298
        %v384 = vunpack.c.h.b16 %v298
        %v385 = vunpack.c.l.b16 %v299
        %v386 = vunpack.c.h.b16 %v299
        %v387 = vunpack.c.l.b16 %v300
        %v388 = vunpack.c.h.b16 %v300
        %v389 = vunpack.c.l.b16 %v301
        %v390 = vunpack.c.h.b16 %v301
        %v391 = vunpack.c.l.b16 %v302
        %v392 = vunpack.c.h.b16 %v302
        %v393 = vunpack.c.l.b16 %v303
        %v394 = vunpack.c.h.b16 %v303
        %v395 = vunpack.c.l.b16 %v304
        %v396 = vunpack.c.h.b16 %v304
        %v397 = vunpack.c.l.b16 %v305
        %v398 = vunpack.c.h.b16 %v305
        %v399 = vunpack.c.l.b16 %v306
        %v400 = vunpack.c.h.b16 %v306
        %v401 = vunpack.c.l.b16 %v307
        %v402 = vunpack.c.h.b16 %v307
        %v403 = vunpack.c.l.b16 %v308
        %v404 = vunpack.c.h.b16 %v308
        %v405 = vunpack.c.l.b16 %v309
        %v406 = vunpack.c.h.b16 %v309
        %v407 = vunpack.c.l.b16 %v310
        %v408 = vunpack.c.h.b16 %v310
        %v409 = vunpack.c.l.b16 %v311
        %v410 = vunpack.c.h.b16 %v311
        %v411 = vunpack.c.l.b16 %v312
        %v412 = vunpack.c.h.b16 %v312
        %v413 = vunpack.c.l.b16 %v313
        %v414 = vunpack.c.h.b16 %v313
        %v415 = vunpack.c.l.b16 %v314
        %v416 = vunpack.c.h.b16 %v314
        %v417 = vunpack.c.l.b16 %v315
        %v418 = vunpack.c.h.b16 %v315
        %v419 = vunpack.c.l.b16 %v316
        %v420 = vunpack.c.h.b16 %v316
        %v421 = vunpack.c.l.b16 %v317
        %v422 = vunpack.c.h.b16 %v317
        %v423 = vunpack.c.l.b16 %v318
        %v424 = vunpack.c.h.b16 %v318
        %v425 = vunpack.c.l.b16 %v319
        %v426 = vunpack.c.h.b16 %v319
        %v427 = vunpack.c.l.b16 %v320
        %v428 = vunpack.c.h.b16 %v320
        %v429 = vunpack.c.l.b16 %v321
        %v430 = vunpack.c.h.b16 %v321
        %v431 = vunpack.c.l.b16 %v322
        %v432 = vunpack.c.h.b16 %v322
        %v433 = vunpack.c.l.b16 %v323
        %v434 = vunpack.c.h.b16 %v323
        %v435 = vunpack.c.l.b16 %v324
        %v436 = vunpack.c.h.b16 %v324
        %v437 = vunpack.c.l.b16 %v325
        %v438 = vunpack.c.h.b16 %v325
        %v439 = vunpack.c.l.b16 %v326
        %v440 = vunpack.c.h.b16 %v326
        %v441 = vunpack.c.l.b16 %v327
        %v442 = vunpack.c.h.b16 %v327
        %v443 = vpack.c.b16 %v381, %v379
        %v444 = vpack.c.b16 %v382, %v380
        %v445 = vpack.c.b16 %v385, %v383
        %v446 = vpack.c.b16 %v386, %v384
        %v447 = vpack.c.b16 %v389, %v387
        %v448 = vpack.c.b16 %v390, %v388
        %v449 = vpack.c.b16 %v393, %v391
        %v450 = vpack.c.b16 %v394, %v392
        %v451 = vpack.c.b16 %v397, %v395
        %v452 = vpack.c.b16 %v398, %v396
        %v453 = vpack.c.b16 %v401, %v399
        %v454 = vpack.c.b16 %v402, %v400
        %v455 = vpack.c.b16 %v405, %v403
        %v456 = vpack.c.b16 %v406, %v404
        %v457 = vpack.c.b16 %v409, %v407
        %v458 = vpack.c.b16 %v410, %v408
        %v459 = vpack.c.b16 %v413, %v411
        %v460 = vpack.c.b16 %v414, %v412
        %v461 = vpack.c.b16 %v417, %v415
        %v462 = vpack.c.b16 %v418, %v416
        %v463 = vpack.c.b16 %v421, %v419
        %v464 = vpack.c.b16 %v422, %v420
        %v465 = vpack.c.b16 %v425, %v423
        %v466 = vpack.c.b16 %v426, %v424
        %v467 = vpack.c.b16 %v429, %v427
        %v468 = vpack.c.b16 %v430, %v428
        %v469 = vpack.c.b16 %v433, %v431
        %v470 = vpack.c.b16 %v434, %v432
        %v471 = vpack.c.b16 %v437, %v435
        %v472 = vpack.c.b16 %v438, %v436
        %v473 = vpack.c.b16 %v441, %v439
        %v474 = vpack.c.b16 %v442, %v440
        %507 = vmatprep.subr.bf16.mxu0 %v444
        %508 = vmatpush1.bf16.msra.mxu0 %v443
        %509 = vmatprep.subr.bf16.mxu0 %v446
        %510 = vmatpush1.bf16.msra.mxu0 %v445
        %511 = vmatprep.subr.bf16.mxu0 %v448
        %512 = vmatpush1.bf16.msra.mxu0 %v447
        %513 = vmatprep.subr.bf16.mxu0 %v450
        %514 = vmatpush1.bf16.msra.mxu0 %v449
        %515 = vmatprep.subr.bf16.mxu0 %v452
        %516 = vmatpush1.bf16.msra.mxu0 %v451
        %517 = vmatprep.subr.bf16.mxu0 %v454
        %518 = vmatpush1.bf16.msra.mxu0 %v453
        %519 = vmatprep.subr.bf16.mxu0 %v456
        %520 = vmatpush1.bf16.msra.mxu0 %v455
        %521 = vmatprep.subr.bf16.mxu0 %v458
        %522 = vmatpush1.bf16.msra.mxu0 %v457
        %523 = vmatprep.subr.bf16.mxu0 %v460
        %524 = vmatpush1.bf16.msra.mxu0 %v459
        %525 = vmatprep.subr.bf16.mxu0 %v462
        %526 = vmatpush1.bf16.msra.mxu0 %v461
        %527 = vmatprep.subr.bf16.mxu0 %v464
        %528 = vmatpush1.bf16.msra.mxu0 %v463
        %529 = vmatprep.subr.bf16.mxu0 %v466
        %530 = vmatpush1.bf16.msra.mxu0 %v465
        %531 = vmatprep.subr.bf16.mxu0 %v468
        %532 = vmatpush1.bf16.msra.mxu0 %v467
        %533 = vmatprep.subr.bf16.mxu0 %v470
        %534 = vmatpush1.bf16.msra.mxu0 %v469
        %535 = vmatprep.subr.bf16.mxu0 %v472
        %536 = vmatpush1.bf16.msra.mxu0 %v471
        %537 = vmatprep.subr.bf16.mxu0 %v474
        %538 = vmatpush1.bf16.msra.mxu0 %v473
        %539 = vmatprep.mubr.bf16.mxu0 %v344
        %540 = vmatmul.mubr.bf16.gmra.mrb[0].mxu0 %v343
        %v541 = vpop.f32.mrb[0].mxu0
        %v542 = vadd.f32 %v333, %v541
        %v543 = vpop.f32.mrb[0].mxu0
        %v544 = vadd.f32 %v337, %v543
        %v545 = vpop.f32.mrb[0].mxu0
        %v546 = vpop.f32.mrb[0].mxu0
        %547 = vdwg.mxu0
        %v548 = vmax.f32 %v542, 0.0
        %v549 = vmax.f32 %v544, 0.0
        %v550 = vpack.c.bf16 %v548, %v548
        %v551 = vpack.c.bf16 %v549, %v549
        %v552 = vld [vmem:[#allocation8] sm:$0xff]
        %v553 = vld [vmem:[#allocation8 + $0x8] sm:$0xff]
        %v554 = vld [vmem:[#allocation8 + $0x10] sm:$0xff]
        %v555 = vld [vmem:[#allocation8 + $0x18] sm:$0xff]
        %v556 = vld [vmem:[#allocation8 + $0x20] sm:$0xff]
        %v557 = vld [vmem:[#allocation8 + $0x28] sm:$0xff]
        %v558 = vld [vmem:[#allocation8 + $0x30] sm:$0xff]
        %v559 = vld [vmem:[#allocation8 + $0x38] sm:$0xff]
        %v560 = vld [vmem:[#allocation8 + $0x40] sm:$0xff]
        %v561 = vld [vmem:[#allocation8 + $0x48] sm:$0xff]
        %v562 = vld [vmem:[#allocation8 + $0x50] sm:$0xff]
        %v563 = vld [vmem:[#allocation8 + $0x58] sm:$0xff]
        %v564 = vld [vmem:[#allocation8 + $0x60] sm:$0xff]
        %v565 = vld [vmem:[#allocation8 + $0x68] sm:$0xff]
        %v566 = vld [vmem:[#allocation8 + $0x70] sm:$0xff]
        %v567 = vld [vmem:[#allocation8 + $0x78] sm:$0xff]
        %v568 = vld [vmem:[#allocation8 + $0x80] sm:$0xff]
        %v569 = vld [vmem:[#allocation8 + $0x88] sm:$0xff]
        %v570 = vld [vmem:[#allocation8 + $0x90] sm:$0xff]
        %v571 = vld [vmem:[#allocation8 + $0x98] sm:$0xff]
        %v572 = vld [vmem:[#allocation8 + $0xa0] sm:$0xff]
        %v573 = vld [vmem:[#allocation8 + $0xa8] sm:$0xff]
        %v574 = vld [vmem:[#allocation8 + $0xb0] sm:$0xff]
        %v575 = vld [vmem:[#allocation8 + $0xb8] sm:$0xff]
        %v576 = vld [vmem:[#allocation8 + $0xc0] sm:$0xff]
        %v577 = vld [vmem:[#allocation8 + $0xc8] sm:$0xff]
        %v578 = vld [vmem:[#allocation8 + $0xd0] sm:$0xff]
        %v579 = vld [vmem:[#allocation8 + $0xd8] sm:$0xff]
        %v580 = vld [vmem:[#allocation8 + $0xe0] sm:$0xff]
        %v581 = vld [vmem:[#allocation8 + $0xe8] sm:$0xff]
        %v582 = vld [vmem:[#allocation8 + $0xf0] sm:$0xff]
        %v583 = vld [vmem:[#allocation8 + $0xf8] sm:$0xff]
        %v584 = vld [vmem:[#allocation10] sm:$0x3]
        %v586 = vlaneseq
        %v587 = vshrl.u32 %v586, 7
        %v588 = vsub.s32 0, %v587
        %v589 = vrot.slane %v584, %v588
        %v590 = vlaneseq
        %v591 = vshrl.u32 %v590, 7
        %v592 = vsub.s32 1, %v591
        %v593 = vrot.slane %v584, %v592
        %v628 = vunpack.c.l.b16 %v552
        %v629 = vunpack.c.h.b16 %v552
        %v630 = vunpack.c.l.b16 %v553
        %v631 = vunpack.c.h.b16 %v553
        %v632 = vunpack.c.l.b16 %v554
        %v633 = vunpack.c.h.b16 %v554
        %v634 = vunpack.c.l.b16 %v555
        %v635 = vunpack.c.h.b16 %v555
        %v636 = vunpack.c.l.b16 %v556
        %v637 = vunpack.c.h.b16 %v556
        %v638 = vunpack.c.l.b16 %v557
        %v639 = vunpack.c.h.b16 %v557
        %v640 = vunpack.c.l.b16 %v558
        %v641 = vunpack.c.h.b16 %v558
        %v642 = vunpack.c.l.b16 %v559
        %v643 = vunpack.c.h.b16 %v559
        %v644 = vunpack.c.l.b16 %v560
        %v645 = vunpack.c.h.b16 %v560
        %v646 = vunpack.c.l.b16 %v561
        %v647 = vunpack.c.h.b16 %v561
        %v648 = vunpack.c.l.b16 %v562
        %v649 = vunpack.c.h.b16 %v562
        %v650 = vunpack.c.l.b16 %v563
        %v651 = vunpack.c.h.b16 %v563
        %v652 = vunpack.c.l.b16 %v564
        %v653 = vunpack.c.h.b16 %v564
        %v654 = vunpack.c.l.b16 %v565
        %v655 = vunpack.c.h.b16 %v565
        %v656 = vunpack.c.l.b16 %v566
        %v657 = vunpack.c.h.b16 %v566
        %v658 = vunpack.c.l.b16 %v567
        %v659 = vunpack.c.h.b16 %v567
        %v660 = vunpack.c.l.b16 %v568
        %v661 = vunpack.c.h.b16 %v568
        %v662 = vunpack.c.l.b16 %v569
        %v663 = vunpack.c.h.b16 %v569
        %v664 = vunpack.c.l.b16 %v570
        %v665 = vunpack.c.h.b16 %v570
        %v666 = vunpack.c.l.b16 %v571
        %v667 = vunpack.c.h.b16 %v571
        %v668 = vunpack.c.l.b16 %v572
        %v669 = vunpack.c.h.b16 %v572
        %v670 = vunpack.c.l.b16 %v573
        %v671 = vunpack.c.h.b16 %v573
        %v672 = vunpack.c.l.b16 %v574
        %v673 = vunpack.c.h.b16 %v574
        %v674 = vunpack.c.l.b16 %v575
        %v675 = vunpack.c.h.b16 %v575
        %v676 = vunpack.c.l.b16 %v576
        %v677 = vunpack.c.h.b16 %v576
        %v678 = vunpack.c.l.b16 %v577
        %v679 = vunpack.c.h.b16 %v577
        %v680 = vunpack.c.l.b16 %v578
        %v681 = vunpack.c.h.b16 %v578
        %v682 = vunpack.c.l.b16 %v579
        %v683 = vunpack.c.h.b16 %v579
        %v684 = vunpack.c.l.b16 %v580
        %v685 = vunpack.c.h.b16 %v580
        %v686 = vunpack.c.l.b16 %v581
        %v687 = vunpack.c.h.b16 %v581
        %v688 = vunpack.c.l.b16 %v582
        %v689 = vunpack.c.h.b16 %v582
        %v690 = vunpack.c.l.b16 %v583
        %v691 = vunpack.c.h.b16 %v583
        %v692 = vpack.c.b16 %v630, %v628
        %v693 = vpack.c.b16 %v631, %v629
        %v694 = vpack.c.b16 %v634, %v632
        %v695 = vpack.c.b16 %v635, %v633
        %v696 = vpack.c.b16 %v638, %v636
        %v697 = vpack.c.b16 %v639, %v637
        %v698 = vpack.c.b16 %v642, %v640
        %v699 = vpack.c.b16 %v643, %v641
        %v700 = vpack.c.b16 %v646, %v644
        %v701 = vpack.c.b16 %v647, %v645
        %v702 = vpack.c.b16 %v650, %v648
        %v703 = vpack.c.b16 %v651, %v649
        %v704 = vpack.c.b16 %v654, %v652
        %v705 = vpack.c.b16 %v655, %v653
        %v706 = vpack.c.b16 %v658, %v656
        %v707 = vpack.c.b16 %v659, %v657
        %v708 = vpack.c.b16 %v662, %v660
        %v709 = vpack.c.b16 %v663, %v661
        %v710 = vpack.c.b16 %v666, %v664
        %v711 = vpack.c.b16 %v667, %v665
        %v712 = vpack.c.b16 %v670, %v668
        %v713 = vpack.c.b16 %v671, %v669
        %v714 = vpack.c.b16 %v674, %v672
        %v715 = vpack.c.b16 %v675, %v673
        %v716 = vpack.c.b16 %v678, %v676
        %v717 = vpack.c.b16 %v679, %v677
        %v718 = vpack.c.b16 %v682, %v680
        %v719 = vpack.c.b16 %v683, %v681
        %v720 = vpack.c.b16 %v686, %v684
        %v721 = vpack.c.b16 %v687, %v685
        %v722 = vpack.c.b16 %v690, %v688
        %v723 = vpack.c.b16 %v691, %v689
        %756 = vmatprep.subr.bf16.mxu0 %v693
        %757 = vmatpush1.bf16.msra.mxu0 %v692
        %758 = vmatprep.subr.bf16.mxu0 %v695
        %759 = vmatpush1.bf16.msra.mxu0 %v694
        %760 = vmatprep.subr.bf16.mxu0 %v697
        %761 = vmatpush1.bf16.msra.mxu0 %v696
        %762 = vmatprep.subr.bf16.mxu0 %v699
        %763 = vmatpush1.bf16.msra.mxu0 %v698
        %764 = vmatprep.subr.bf16.mxu0 %v701
        %765 = vmatpush1.bf16.msra.mxu0 %v700
        %766 = vmatprep.subr.bf16.mxu0 %v703
        %767 = vmatpush1.bf16.msra.mxu0 %v702
        %768 = vmatprep.subr.bf16.mxu0 %v705
        %769 = vmatpush1.bf16.msra.mxu0 %v704
        %770 = vmatprep.subr.bf16.mxu0 %v707
        %771 = vmatpush1.bf16.msra.mxu0 %v706
        %772 = vmatprep.subr.bf16.mxu0 %v709
        %773 = vmatpush1.bf16.msra.mxu0 %v708
        %774 = vmatprep.subr.bf16.mxu0 %v711
        %775 = vmatpush1.bf16.msra.mxu0 %v710
        %776 = vmatprep.subr.bf16.mxu0 %v713
        %777 = vmatpush1.bf16.msra.mxu0 %v712
        %778 = vmatprep.subr.bf16.mxu0 %v715
        %779 = vmatpush1.bf16.msra.mxu0 %v714
        %780 = vmatprep.subr.bf16.mxu0 %v717
        %781 = vmatpush1.bf16.msra.mxu0 %v716
        %782 = vmatprep.subr.bf16.mxu0 %v719
        %783 = vmatpush1.bf16.msra.mxu0 %v718
        %784 = vmatprep.subr.bf16.mxu0 %v721
        %785 = vmatpush1.bf16.msra.mxu0 %v720
        %786 = vmatprep.subr.bf16.mxu0 %v723
        %787 = vmatpush1.bf16.msra.mxu0 %v722
        %788 = vmatprep.mubr.bf16.mxu0 %v551
        %789 = vmatmul.mubr.bf16.gmra.mrb[0].mxu0 %v550
        %v790 = vpop.f32.mrb[0].mxu0
        %v791 = vadd.f32 %v589, %v790
        %v792 = vpop.f32.mrb[0].mxu0
        %v793 = vadd.f32 %v593, %v792
        %v794 = vpop.f32.mrb[0].mxu0
        %v795 = vpop.f32.mrb[0].mxu0
        %796 = vdwg.mxu0
        %v797 = vlaneseq
        %v798 = vshrl.u32 %v797, 7
        %vm799 = vcmp.lt.s32.totalorder %v798, 4
        %v800 = vsel %vm799, %v791, -inf
        %v801 = vsel %vm799, %v793, -inf
        %v802 = vrot.slane %v800, 4
        %v803 = vmax.f32 %v800, %v802
        %v804 = vrot.slane %v803, 2
        %v805 = vmax.f32 %v803, %v804
        %v806 = vrot.slane %v805, 1
        %v807 = vmax.f32 %v805, %v806
        %v808 = vrot.slane %v801, 4
        %v809 = vmax.f32 %v801, %v808
        %v810 = vrot.slane %v809, 2
        %v811 = vmax.f32 %v809, %v810
        %v812 = vrot.slane %v811, 1
        %v813 = vmax.f32 %v811, %v812
        %v816 = vcombine.low %v807, %v813
        %v818 = vunpack.c.l.s4 1966171168
        %v819 = vunpack.c.0.s8 %v818
        %v820 = vlaneseq
        %v821 = vshrl.u32 %v820, 7
        %v822 = vsub.s32 %v819, %v821
        %v823 = vrot.slane %v816, %v822
        %v825 = vunpack.c.l.s4 1966171168
        %v826 = vunpack.c.0.s8 %v825
        %v827 = vlaneseq
        %v828 = vshrl.u32 %v827, 7
        %v829 = vsub.s32 %v826, %v828
        %v830 = vrot.slane %v823, %v829
        %v832 = vlaneseq
        %vm833 = vcmp.ge.s32.totalorder %v832, 0
        %vm834 = vcmp.lt.s32.totalorder %v832, 256
        %vm835 = vmand %vm833, %vm834
        %836 = vst.msk [vmem:[%s294] sm:$0x3] %vm835, %v830
        %s837 = sand.u32 %s142, 1
        %s838 = scalar_lea.sflag [#allocation4], %s837
        %s839 = sand.u32 %s142, 1
        %s840 = smul.addr %s839, 2
        %s841 = scalar_lea.vmem [#allocation11], %s840
        // Predicated region
        $region61: #{pointnet2_forward.6} parent=39 // pred_check
          %p842 = pneg %p152
        $region62: #{pointnet2_forward.6} parent=39 // pred_check_branch
          %844 = sbr.rel (%p842) target = $region64
        $region63: #{pointnet2_forward.6} parent=39 // pred_region
          %s846 = ssub.s32 32, 32
          %847 = vsyncadd %s838, %s846
          %s848 = smul.addr %s24, 2
          %s849 = smul.addr %s848, 16
          %s850 = scalar_lea.hbm %s5, %s849
          %s852 = sshll.u32 %s841, 4
          %s853 = int_to_ptr.vmem [resolvable:$true] %s852
          %855 = dma.vmem_to_hbm [thread:$0]  %s853, 32, %s850, %s838
        $region64: #{pointnet2_forward.6} parent=39 // pred_fallthru
          _
      $region40: #{pointnet2_forward.6} parent=5 // pred_fallthru
        _
      %p856 = scmp.le.s32.totalorder 2, %s19
      // Predicated region
      $region65: #{pointnet2_forward.6} parent=5 // pred_check
        %p857 = pneg %p856
      $region66: #{pointnet2_forward.6} parent=5 // pred_check_branch
        %859 = sbr.rel (%p857) target = $region68
      $region67: #{pointnet2_forward.6} parent=5 // pred_region
        %s860 = ssub.s32 %s19, 2
        // Predicated region
        $region69: #{pointnet2_forward.6} parent=67 // pred_check
          %p861 = pneg %p158
        $region70: #{pointnet2_forward.6} parent=67 // pred_check_branch
          %863 = sbr.rel (%p861) target = $region72
        $region71: #{pointnet2_forward.6} parent=67 // pred_region
          %s864 = sand.u32 %s143, 1
          %s865 = scalar_lea.sflag [#allocation4], %s864
          %s866 = sand.u32 %s143, 1
          %s867 = smul.addr %s866, 2
          %s868 = scalar_lea.vmem [#allocation11], %s867
          %869 = dma.done %s865, 32
        $region72: #{pointnet2_forward.6} parent=67 // pred_fallthru
          _
      $region68: #{pointnet2_forward.6} parent=5 // pred_fallthru
        _
    $region6: #{pointnet2_forward.6} parent=1 // loop_footer
      %s23 = sadd.s32 1, %s19
    $region7: #{pointnet2_forward.6} parent=1 // loop_footer_branch
      %18 = sbr.rel target = $region3
    $region8: #{pointnet2_forward.6} parent=1 // loop_exit
      _
    %870 = vsyncpa [#allocation3], 1
    %s871 = scalar_lea.sflag [#allocation3], 1
    %872 = vsyncpa %s871, 1
    %873 = vsyncpa [#allocation6], 1
    %874 = vsyncpa [#allocation9], 1
    %875 = vsyncpa [#allocation4], 1
    %s876 = scalar_lea.sflag [#allocation4], 1
    %877 = vsyncpa %s876, 1

// kernel: pointnet2_forward.7
$region0: #{pointnet2_forward.7}
  #allocation0 [shape = 'u32[]', space=smem, size = 0x4, offset = 0x4, fixed_abs, tag = 'smem constant byte address 0x4 - core index']
  #allocation1 [shape = 'u32[144,128]{1,0:T(1,128)}', space=vmem, size = 0x12000, scoped, tag = 'internal scratch']
  %s0 = inlined_call_operand.hbm [shape: f32[8,256], index: 0, kind: input, shape index: {}]
  %s1 = inlined_call_operand.hbm [shape: f32[8,256], index: 1, kind: input, shape index: {}]
  %s2 = inlined_call_operand.hbm [shape: bf16[256,256], index: 2, kind: input, shape index: {}]
  %s3 = inlined_call_operand.hbm [shape: f32[1,256], index: 3, kind: input, shape index: {}]
  %s4 = inlined_call_operand.hbm [shape: bf16[256,256], index: 4, kind: input, shape index: {}]
  %s5 = inlined_call_operand.hbm [shape: f32[1,256], index: 5, kind: input, shape index: {}]
  %s6 = inlined_call_operand.hbm [shape: bf16[256,256], index: 6, kind: input, shape index: {}]
  %s7 = inlined_call_operand.hbm [shape: bf16[256,256], index: 7, kind: input, shape index: {}]
  %s8 = inlined_call_operand.hbm [shape: f32[1,256], index: 8, kind: input, shape index: {}]
  %s9 = inlined_call_operand.hbm [shape: bf16[256,1024], index: 9, kind: input, shape index: {}]
  %s10 = inlined_call_operand.hbm [shape: f32[1,1024], index: 10, kind: input, shape index: {}]
  %s11 = inlined_call_operand.hbm [shape: f32[8,1024], index: 11, kind: output, shape index: {}]
  %s12 = sld [smem:[#allocation0]]
  $region98: #{pointnet2_forward.7} parent=0
    _
  %s14 = ssub.s32 1, %s12
  %s15 = scalar_select 0, %s14, %s12
  $region1: #{pointnet2_forward.7} parent=0
    #allocation2 [shape = 'u8[8192]{0}', space=vmem, size = 0x2000, scoped, tag = 'input window, operand 0, single buffered']
    #allocation3 [shape = 's32[1]{0}', space=sflag, size = 0x4, scoped, tag = 'scoped memory for pointnet2_forward.7']
    #allocation4 [shape = 's32[1]{0}', space=sflag, size = 0x4, scoped, tag = 'scoped memory for pointnet2_forward.7']
    #allocation5 [shape = 'u8[8192]{0}', space=vmem, size = 0x2000, scoped, tag = 'input window, operand 1, single buffered']
    #allocation6 [shape = 's32[1]{0}', space=sflag, size = 0x4, scoped, tag = 'scoped memory for pointnet2_forward.7']
    #allocation7 [shape = 'u8[131072]{0}', space=vmem, size = 0x20000, scoped, tag = 'input window, operand 2, single buffered']
    #allocation8 [shape = 'u8[1024]{0}', space=vmem, size = 0x400, scoped, tag = 'input window, operand 3, single buffered']
    #allocation9 [shape = 's32[1]{0}', space=sflag, size = 0x4, scoped, tag = 'scoped memory for pointnet2_forward.7']
    #allocation10 [shape = 'u8[131072]{0}', space=vmem, size = 0x20000, scoped, tag = 'input window, operand 4, single buffered']
    #allocation11 [shape = 'u8[1024]{0}', space=vmem, size = 0x400, scoped, tag = 'input window, operand 5, single buffered']
    #allocation12 [shape = 's32[1]{0}', space=sflag, size = 0x4, scoped, tag = 'scoped memory for pointnet2_forward.7']
    #allocation13 [shape = 'u8[131072]{0}', space=vmem, size = 0x20000, scoped, tag = 'input window, operand 6, single buffered']
    #allocation14 [shape = 'u8[131072]{0}', space=vmem, size = 0x20000, scoped, tag = 'input window, operand 7, single buffered']
    #allocation15 [shape = 's32[1]{0}', space=sflag, size = 0x4, scoped, tag = 'scoped memory for pointnet2_forward.7']
    #allocation16 [shape = 'u8[1024]{0}', space=vmem, size = 0x400, scoped, tag = 'input window, operand 8, single buffered']
    #allocation17 [shape = 'u8[524288]{0}', space=vmem, size = 0x80000, scoped, tag = 'input window, operand 9, single buffered']
    #allocation18 [shape = 's32[1]{0}', space=sflag, size = 0x4, scoped, tag = 'scoped memory for pointnet2_forward.7']
    #allocation19 [shape = 'u8[4096]{0}', space=vmem, size = 0x1000, scoped, tag = 'input window, operand 10, single buffered']
    #allocation20 [shape = 'u8[32768]{0}', space=vmem, size = 0x8000, scoped, tag = 'output window, operand 0, single buffered']
    %16 = vsyncpa [#allocation3], 0
    %17 = vsyncpa [#allocation6], 0
    %18 = vsyncpa [#allocation9], 0
    %19 = vsyncpa [#allocation12], 0
    %20 = vsyncpa [#allocation15], 0
    %21 = vsyncpa [#allocation18], 0
    %22 = vsyncpa [#allocation4], 0
    // Predicated region
    $region2: #{pointnet2_forward.7} parent=1 // pred_check
      _
    $region3: #{pointnet2_forward.7} parent=1 // pred_check_branch
      %24 = sbr.rel (0) target = $region5
    $region4: #{pointnet2_forward.7} parent=1 // pred_region
      %s26 = ssub.s32 256, 256
      %27 = vsyncadd [#allocation3], %s26
      %s29 = sshll.u32 [#allocation2], 4
      %s30 = int_to_ptr.vmem [resolvable:$true] %s29
      %32 = dma.hbm_to_vmem [thread:$0]  %s0, 256, %s30, [#allocation3]
    $region5: #{pointnet2_forward.7} parent=1 // pred_fallthru
      _
    // Predicated region
    $region6: #{pointnet2_forward.7} parent=1 // pred_check
      _
    $region7: #{pointnet2_forward.7} parent=1 // pred_check_branch
      %34 = sbr.rel (0) target = $region9
    $region8: #{pointnet2_forward.7} parent=1 // pred_region
      %s36 = ssub.s32 256, 256
      %37 = vsyncadd [#allocation6], %s36
      %s39 = sshll.u32 [#allocation5], 4
      %s40 = int_to_ptr.vmem [resolvable:$true] %s39
      %42 = dma.hbm_to_vmem [thread:$0]  %s1, 256, %s40, [#allocation6]
    $region9: #{pointnet2_forward.7} parent=1 // pred_fallthru
      _
    // Predicated region
    $region10: #{pointnet2_forward.7} parent=1 // pred_check
      _
    $region11: #{pointnet2_forward.7} parent=1 // pred_check_branch
      %44 = sbr.rel (0) target = $region13
    $region12: #{pointnet2_forward.7} parent=1 // pred_region
      %s46 = ssub.s32 4096, 4096
      %47 = vsyncadd [#allocation6], %s46
      %s48 = sshll.u32 [#allocation7], 4
      %s49 = int_to_ptr.vmem [resolvable:$true] %s48
      %54 = dma.hbm_to_vmem [thread:$0]  %s2, 4096, %s49, [#allocation6], 128, 128, 8
    $region13: #{pointnet2_forward.7} parent=1 // pred_fallthru
      _
    // Predicated region
    $region14: #{pointnet2_forward.7} parent=1 // pred_check
      _
    $region15: #{pointnet2_forward.7} parent=1 // pred_check_branch
      %56 = sbr.rel (0) target = $region17
    $region16: #{pointnet2_forward.7} parent=1 // pred_region
      %s58 = ssub.s32 32, 32
      %59 = vsyncadd [#allocation9], %s58
      %s61 = sshll.u32 [#allocation8], 4
      %s62 = int_to_ptr.vmem [resolvable:$true] %s61
      %64 = dma.hbm_to_vmem [thread:$0]  %s3, 32, %s62, [#allocation9]
    $region17: #{pointnet2_forward.7} parent=1 // pred_fallthru
      _
    // Predicated region
    $region18: #{pointnet2_forward.7} parent=1 // pred_check
      _
    $region19: #{pointnet2_forward.7} parent=1 // pred_check_branch
      %66 = sbr.rel (0) target = $region21
    $region20: #{pointnet2_forward.7} parent=1 // pred_region
      %s68 = ssub.s32 4096, 4096
      %69 = vsyncadd [#allocation9], %s68
      %s70 = sshll.u32 [#allocation10], 4
      %s71 = int_to_ptr.vmem [resolvable:$true] %s70
      %76 = dma.hbm_to_vmem [thread:$0]  %s4, 4096, %s71, [#allocation9], 128, 128, 8
    $region21: #{pointnet2_forward.7} parent=1 // pred_fallthru
      _
    // Predicated region
    $region22: #{pointnet2_forward.7} parent=1 // pred_check
      _
    $region23: #{pointnet2_forward.7} parent=1 // pred_check_branch
      %78 = sbr.rel (0) target = $region25
    $region24: #{pointnet2_forward.7} parent=1 // pred_region
      %s80 = ssub.s32 32, 32
      %81 = vsyncadd [#allocation12], %s80
      %s83 = sshll.u32 [#allocation11], 4
      %s84 = int_to_ptr.vmem [resolvable:$true] %s83
      %86 = dma.hbm_to_vmem [thread:$0]  %s5, 32, %s84, [#allocation12]
    $region25: #{pointnet2_forward.7} parent=1 // pred_fallthru
      _
    // Predicated region
    $region26: #{pointnet2_forward.7} parent=1 // pred_check
      _
    $region27: #{pointnet2_forward.7} parent=1 // pred_check_branch
      %88 = sbr.rel (0) target = $region29
    $region28: #{pointnet2_forward.7} parent=1 // pred_region
      %s90 = ssub.s32 4096, 4096
      %91 = vsyncadd [#allocation12], %s90
      %s92 = sshll.u32 [#allocation13], 4
      %s93 = int_to_ptr.vmem [resolvable:$true] %s92
      %98 = dma.hbm_to_vmem [thread:$0]  %s6, 4096, %s93, [#allocation12], 128, 128, 8
    $region29: #{pointnet2_forward.7} parent=1 // pred_fallthru
      _
    // Predicated region
    $region30: #{pointnet2_forward.7} parent=1 // pred_check
      _
    $region31: #{pointnet2_forward.7} parent=1 // pred_check_branch
      %100 = sbr.rel (0) target = $region33
    $region32: #{pointnet2_forward.7} parent=1 // pred_region
      %s102 = ssub.s32 4096, 4096
      %103 = vsyncadd [#allocation15], %s102
      %s104 = sshll.u32 [#allocation14], 4
      %s105 = int_to_ptr.vmem [resolvable:$true] %s104
      %110 = dma.hbm_to_vmem [thread:$0]  %s7, 4096, %s105, [#allocation15], 128, 128, 8
    $region33: #{pointnet2_forward.7} parent=1 // pred_fallthru
      _
    // Predicated region
    $region34: #{pointnet2_forward.7} parent=1 // pred_check
      _
    $region35: #{pointnet2_forward.7} parent=1 // pred_check_branch
      %112 = sbr.rel (0) target = $region37
    $region36: #{pointnet2_forward.7} parent=1 // pred_region
      %s114 = ssub.s32 32, 32
      %115 = vsyncadd [#allocation15], %s114
      %s117 = sshll.u32 [#allocation16], 4
      %s118 = int_to_ptr.vmem [resolvable:$true] %s117
      %120 = dma.hbm_to_vmem [thread:$0]  %s8, 32, %s118, [#allocation15]
    $region37: #{pointnet2_forward.7} parent=1 // pred_fallthru
      _
    // Predicated region
    $region38: #{pointnet2_forward.7} parent=1 // pred_check
      _
    $region39: #{pointnet2_forward.7} parent=1 // pred_check_branch
      %122 = sbr.rel (0) target = $region41
    $region40: #{pointnet2_forward.7} parent=1 // pred_region
      %s124 = ssub.s32 16384, 16384
      %125 = vsyncadd [#allocation18], %s124
      %s126 = sshll.u32 [#allocation17], 4
      %s127 = int_to_ptr.vmem [resolvable:$true] %s126
      %132 = dma.hbm_to_vmem [thread:$0]  %s9, 16384, %s127, [#allocation18], 512, 512, 32
    $region41: #{pointnet2_forward.7} parent=1 // pred_fallthru
      _
    // Predicated region
    $region42: #{pointnet2_forward.7} parent=1 // pred_check
      _
    $region43: #{pointnet2_forward.7} parent=1 // pred_check_branch
      %134 = sbr.rel (0) target = $region45
    $region44: #{pointnet2_forward.7} parent=1 // pred_region
      %s136 = ssub.s32 128, 128
      %137 = vsyncadd [#allocation18], %s136
      %s139 = sshll.u32 [#allocation19], 4
      %s140 = int_to_ptr.vmem [resolvable:$true] %s139
      %142 = dma.hbm_to_vmem [thread:$0]  %s10, 128, %s140, [#allocation18]
    $region45: #{pointnet2_forward.7} parent=1 // pred_fallthru
      _
    // Predicated region
    $region46: #{pointnet2_forward.7} parent=1 // pred_check
      _
    $region47: #{pointnet2_forward.7} parent=1 // pred_check_branch
      %144 = sbr.rel (0) target = $region49
    $region48: #{pointnet2_forward.7} parent=1 // pred_region
      %145 = dma.done [#allocation3], 256
    $region49: #{pointnet2_forward.7} parent=1 // pred_fallthru
      _
    // Predicated region
    $region50: #{pointnet2_forward.7} parent=1 // pred_check
      _
    $region51: #{pointnet2_forward.7} parent=1 // pred_check_branch
      %147 = sbr.rel (0) target = $region53
    $region52: #{pointnet2_forward.7} parent=1 // pred_region
      %148 = dma.done [#allocation6], 256
    $region53: #{pointnet2_forward.7} parent=1 // pred_fallthru
      _
    // Predicated region
    $region54: #{pointnet2_forward.7} parent=1 // pred_check
      _
    $region55: #{pointnet2_forward.7} parent=1 // pred_check_branch
      %150 = sbr.rel (0) target = $region57
    $region56: #{pointnet2_forward.7} parent=1 // pred_region
      %151 = dma.done [#allocation6], 4096
    $region57: #{pointnet2_forward.7} parent=1 // pred_fallthru
      _
    // Predicated region
    $region58: #{pointnet2_forward.7} parent=1 // pred_check
      _
    $region59: #{pointnet2_forward.7} parent=1 // pred_check_branch
      %153 = sbr.rel (0) target = $region61
    $region60: #{pointnet2_forward.7} parent=1 // pred_region
      %154 = dma.done [#allocation9], 32
    $region61: #{pointnet2_forward.7} parent=1 // pred_fallthru
      _
    // Predicated region
    $region62: #{pointnet2_forward.7} parent=1 // pred_check
      _
    $region63: #{pointnet2_forward.7} parent=1 // pred_check_branch
      %156 = sbr.rel (0) target = $region65
    $region64: #{pointnet2_forward.7} parent=1 // pred_region
      %157 = dma.done [#allocation9], 4096
    $region65: #{pointnet2_forward.7} parent=1 // pred_fallthru
      _
    // Predicated region
    $region66: #{pointnet2_forward.7} parent=1 // pred_check
      _
    $region67: #{pointnet2_forward.7} parent=1 // pred_check_branch
      %159 = sbr.rel (0) target = $region69
    $region68: #{pointnet2_forward.7} parent=1 // pred_region
      %160 = dma.done [#allocation12], 32
    $region69: #{pointnet2_forward.7} parent=1 // pred_fallthru
      _
    // Predicated region
    $region70: #{pointnet2_forward.7} parent=1 // pred_check
      _
    $region71: #{pointnet2_forward.7} parent=1 // pred_check_branch
      %162 = sbr.rel (0) target = $region73
    $region72: #{pointnet2_forward.7} parent=1 // pred_region
      %163 = dma.done [#allocation12], 4096
    $region73: #{pointnet2_forward.7} parent=1 // pred_fallthru
      _
    // Predicated region
    $region74: #{pointnet2_forward.7} parent=1 // pred_check
      _
    $region75: #{pointnet2_forward.7} parent=1 // pred_check_branch
      %165 = sbr.rel (0) target = $region77
    $region76: #{pointnet2_forward.7} parent=1 // pred_region
      %166 = dma.done [#allocation15], 4096
    $region77: #{pointnet2_forward.7} parent=1 // pred_fallthru
      _
    // Predicated region
    $region78: #{pointnet2_forward.7} parent=1 // pred_check
      _
    $region79: #{pointnet2_forward.7} parent=1 // pred_check_branch
      %168 = sbr.rel (0) target = $region81
    $region80: #{pointnet2_forward.7} parent=1 // pred_region
      %169 = dma.done [#allocation15], 32
    $region81: #{pointnet2_forward.7} parent=1 // pred_fallthru
      _
    // Predicated region
    $region82: #{pointnet2_forward.7} parent=1 // pred_check
      _
    $region83: #{pointnet2_forward.7} parent=1 // pred_check_branch
      %171 = sbr.rel (0) target = $region85
    $region84: #{pointnet2_forward.7} parent=1 // pred_region
      %172 = dma.done [#allocation18], 16384
    $region85: #{pointnet2_forward.7} parent=1 // pred_fallthru
      _
    // Predicated region
    $region86: #{pointnet2_forward.7} parent=1 // pred_check
      _
    $region87: #{pointnet2_forward.7} parent=1 // pred_check_branch
      %174 = sbr.rel (0) target = $region89
    $region88: #{pointnet2_forward.7} parent=1 // pred_region
      %175 = dma.done [#allocation18], 128
    $region89: #{pointnet2_forward.7} parent=1 // pred_fallthru
      _
    %v176 = vld [vmem:[#allocation5] sm:$0xff]
    %v177 = vld [vmem:[#allocation5 + $0x8] sm:$0xff]
    %v178 = vpack.c.bf16 %v176, %v176
    %v179 = vpack.c.bf16 %v177, %v177
    %v180 = vld [vmem:[#allocation7] sm:$0xff]
    %v181 = vld [vmem:[#allocation7 + $0x8] sm:$0xff]
    %v182 = vld [vmem:[#allocation7 + $0x10] sm:$0xff]
    %v183 = vld [vmem:[#allocation7 + $0x18] sm:$0xff]
    %v184 = vld [vmem:[#allocation7 + $0x20] sm:$0xff]
    %v185 = vld [vmem:[#allocation7 + $0x28] sm:$0xff]
    %v186 = vld [vmem:[#allocation7 + $0x30] sm:$0xff]
    %v187 = vld [vmem:[#allocation7 + $0x38] sm:$0xff]
    %v188 = vld [vmem:[#allocation7 + $0x40] sm:$0xff]
    %v189 = vld [vmem:[#allocation7 + $0x48] sm:$0xff]
    %v190 = vld [vmem:[#allocation7 + $0x50] sm:$0xff]
    %v191 = vld [vmem:[#allocation7 + $0x58] sm:$0xff]
    %v192 = vld [vmem:[#allocation7 + $0x60] sm:$0xff]
    %v193 = vld [vmem:[#allocation7 + $0x68] sm:$0xff]
    %v194 = vld [vmem:[#allocation7 + $0x70] sm:$0xff]
    %v195 = vld [vmem:[#allocation7 + $0x78] sm:$0xff]
    %v196 = vld [vmem:[#allocation7 + $0x80] sm:$0xff]
    %v197 = vld [vmem:[#allocation7 + $0x88] sm:$0xff]
    %v198 = vld [vmem:[#allocation7 + $0x90] sm:$0xff]
    %v199 = vld [vmem:[#allocation7 + $0x98] sm:$0xff]
    %v200 = vld [vmem:[#allocation7 + $0xa0] sm:$0xff]
    %v201 = vld [vmem:[#allocation7 + $0xa8] sm:$0xff]
    %v202 = vld [vmem:[#allocation7 + $0xb0] sm:$0xff]
    %v203 = vld [vmem:[#allocation7 + $0xb8] sm:$0xff]
    %v204 = vld [vmem:[#allocation7 + $0xc0] sm:$0xff]
    %v205 = vld [vmem:[#allocation7 + $0xc8] sm:$0xff]
    %v206 = vld [vmem:[#allocation7 + $0xd0] sm:$0xff]
    %v207 = vld [vmem:[#allocation7 + $0xd8] sm:$0xff]
    %v208 = vld [vmem:[#allocation7 + $0xe0] sm:$0xff]
    %v209 = vld [vmem:[#allocation7 + $0xe8] sm:$0xff]
    %v210 = vld [vmem:[#allocation7 + $0xf0] sm:$0xff]
    %v211 = vld [vmem:[#allocation7 + $0xf8] sm:$0xff]
    %v212 = vld [vmem:[#allocation8] sm:$0x3]
    %v214 = vlaneseq
    %v215 = vshrl.u32 %v214, 7
    %v216 = vsub.s32 0, %v215
    %v217 = vrot.slane %v212, %v216
    %v218 = vlaneseq
    %v219 = vshrl.u32 %v218, 7
    %v220 = vsub.s32 1, %v219
    %v221 = vrot.slane %v212, %v220
    %v256 = vunpack.c.l.b16 %v180
    %v257 = vunpack.c.h.b16 %v180
    %v258 = vunpack.c.l.b16 %v181
    %v259 = vunpack.c.h.b16 %v181
    %v260 = vunpack.c.l.b16 %v182
    %v261 = vunpack.c.h.b16 %v182
    %v262 = vunpack.c.l.b16 %v183
    %v263 = vunpack.c.h.b16 %v183
    %v264 = vunpack.c.l.b16 %v184
    %v265 = vunpack.c.h.b16 %v184
    %v266 = vunpack.c.l.b16 %v185
    %v267 = vunpack.c.h.b16 %v185
    %v268 = vunpack.c.l.b16 %v186
    %v269 = vunpack.c.h.b16 %v186
    %v270 = vunpack.c.l.b16 %v187
    %v271 = vunpack.c.h.b16 %v187
    %v272 = vunpack.c.l.b16 %v188
    %v273 = vunpack.c.h.b16 %v188
    %v274 = vunpack.c.l.b16 %v189
    %v275 = vunpack.c.h.b16 %v189
    %v276 = vunpack.c.l.b16 %v190
    %v277 = vunpack.c.h.b16 %v190
    %v278 = vunpack.c.l.b16 %v191
    %v279 = vunpack.c.h.b16 %v191
    %v280 = vunpack.c.l.b16 %v192
    %v281 = vunpack.c.h.b16 %v192
    %v282 = vunpack.c.l.b16 %v193
    %v283 = vunpack.c.h.b16 %v193
    %v284 = vunpack.c.l.b16 %v194
    %v285 = vunpack.c.h.b16 %v194
    %v286 = vunpack.c.l.b16 %v195
    %v287 = vunpack.c.h.b16 %v195
    %v288 = vunpack.c.l.b16 %v196
    %v289 = vunpack.c.h.b16 %v196
    %v290 = vunpack.c.l.b16 %v197
    %v291 = vunpack.c.h.b16 %v197
    %v292 = vunpack.c.l.b16 %v198
    %v293 = vunpack.c.h.b16 %v198
    %v294 = vunpack.c.l.b16 %v199
    %v295 = vunpack.c.h.b16 %v199
    %v296 = vunpack.c.l.b16 %v200
    %v297 = vunpack.c.h.b16 %v200
    %v298 = vunpack.c.l.b16 %v201
    %v299 = vunpack.c.h.b16 %v201
    %v300 = vunpack.c.l.b16 %v202
    %v301 = vunpack.c.h.b16 %v202
    %v302 = vunpack.c.l.b16 %v203
    %v303 = vunpack.c.h.b16 %v203
    %v304 = vunpack.c.l.b16 %v204
    %v305 = vunpack.c.h.b16 %v204
    %v306 = vunpack.c.l.b16 %v205
    %v307 = vunpack.c.h.b16 %v205
    %v308 = vunpack.c.l.b16 %v206
    %v309 = vunpack.c.h.b16 %v206
    %v310 = vunpack.c.l.b16 %v207
    %v311 = vunpack.c.h.b16 %v207
    %v312 = vunpack.c.l.b16 %v208
    %v313 = vunpack.c.h.b16 %v208
    %v314 = vunpack.c.l.b16 %v209
    %v315 = vunpack.c.h.b16 %v209
    %v316 = vunpack.c.l.b16 %v210
    %v317 = vunpack.c.h.b16 %v210
    %v318 = vunpack.c.l.b16 %v211
    %v319 = vunpack.c.h.b16 %v211
    %v320 = vpack.c.b16 %v258, %v256
    %v321 = vpack.c.b16 %v259, %v257
    %v322 = vpack.c.b16 %v262, %v260
    %v323 = vpack.c.b16 %v263, %v261
    %v324 = vpack.c.b16 %v266, %v264
    %v325 = vpack.c.b16 %v267, %v265
    %v326 = vpack.c.b16 %v270, %v268
    %v327 = vpack.c.b16 %v271, %v269
    %v328 = vpack.c.b16 %v274, %v272
    %v329 = vpack.c.b16 %v275, %v273
    %v330 = vpack.c.b16 %v278, %v276
    %v331 = vpack.c.b16 %v279, %v277
    %v332 = vpack.c.b16 %v282, %v280
    %v333 = vpack.c.b16 %v283, %v281
    %v334 = vpack.c.b16 %v286, %v284
    %v335 = vpack.c.b16 %v287, %v285
    %v336 = vpack.c.b16 %v290, %v288
    %v337 = vpack.c.b16 %v291, %v289
    %v338 = vpack.c.b16 %v294, %v292
    %v339 = vpack.c.b16 %v295, %v293
    %v340 = vpack.c.b16 %v298, %v296
    %v341 = vpack.c.b16 %v299, %v297
    %v342 = vpack.c.b16 %v302, %v300
    %v343 = vpack.c.b16 %v303, %v301
    %v344 = vpack.c.b16 %v306, %v304
    %v345 = vpack.c.b16 %v307, %v305
    %v346 = vpack.c.b16 %v310, %v308
    %v347 = vpack.c.b16 %v311, %v309
    %v348 = vpack.c.b16 %v314, %v312
    %v349 = vpack.c.b16 %v315, %v313
    %v350 = vpack.c.b16 %v318, %v316
    %v351 = vpack.c.b16 %v319, %v317
    %384 = vmatprep.subr.bf16.mxu0 %v321
    %385 = vmatpush1.bf16.msra.mxu0 %v320
    %386 = vmatprep.subr.bf16.mxu0 %v323
    %387 = vmatpush1.bf16.msra.mxu0 %v322
    %388 = vmatprep.subr.bf16.mxu0 %v325
    %389 = vmatpush1.bf16.msra.mxu0 %v324
    %390 = vmatprep.subr.bf16.mxu0 %v327
    %391 = vmatpush1.bf16.msra.mxu0 %v326
    %392 = vmatprep.subr.bf16.mxu0 %v329
    %393 = vmatpush1.bf16.msra.mxu0 %v328
    %394 = vmatprep.subr.bf16.mxu0 %v331
    %395 = vmatpush1.bf16.msra.mxu0 %v330
    %396 = vmatprep.subr.bf16.mxu0 %v333
    %397 = vmatpush1.bf16.msra.mxu0 %v332
    %398 = vmatprep.subr.bf16.mxu0 %v335
    %399 = vmatpush1.bf16.msra.mxu0 %v334
    %400 = vmatprep.subr.bf16.mxu0 %v337
    %401 = vmatpush1.bf16.msra.mxu0 %v336
    %402 = vmatprep.subr.bf16.mxu0 %v339
    %403 = vmatpush1.bf16.msra.mxu0 %v338
    %404 = vmatprep.subr.bf16.mxu0 %v341
    %405 = vmatpush1.bf16.msra.mxu0 %v340
    %406 = vmatprep.subr.bf16.mxu0 %v343
    %407 = vmatpush1.bf16.msra.mxu0 %v342
    %408 = vmatprep.subr.bf16.mxu0 %v345
    %409 = vmatpush1.bf16.msra.mxu0 %v344
    %410 = vmatprep.subr.bf16.mxu0 %v347
    %411 = vmatpush1.bf16.msra.mxu0 %v346
    %412 = vmatprep.subr.bf16.mxu0 %v349
    %413 = vmatpush1.bf16.msra.mxu0 %v348
    %414 = vmatprep.subr.bf16.mxu0 %v351
    %415 = vmatpush1.bf16.msra.mxu0 %v350
    %416 = vmatprep.mubr.bf16.mxu0 %v179
    %417 = vmatmul.mubr.bf16.gmra.mrb[0].mxu0 %v178
    %v418 = vpop.f32.mrb[0].mxu0
    %v419 = vadd.f32 %v217, %v418
    %v420 = vpop.f32.mrb[0].mxu0
    %v421 = vadd.f32 %v221, %v420
    %v422 = vpop.f32.mrb[0].mxu0
    %v423 = vpop.f32.mrb[0].mxu0
    %424 = vdwg.mxu0
    %v425 = vmax.f32 %v419, 0.0
    %v426 = vmax.f32 %v421, 0.0
    %v427 = vpack.c.bf16 %v425, %v425
    %v428 = vpack.c.bf16 %v426, %v426
    %v429 = vld [vmem:[#allocation10] sm:$0xff]
    %v430 = vld [vmem:[#allocation10 + $0x8] sm:$0xff]
    %v431 = vld [vmem:[#allocation10 + $0x10] sm:$0xff]
    %v432 = vld [vmem:[#allocation10 + $0x18] sm:$0xff]
    %v433 = vld [vmem:[#allocation10 + $0x20] sm:$0xff]
    %v434 = vld [vmem:[#allocation10 + $0x28] sm:$0xff]
    %v435 = vld [vmem:[#allocation10 + $0x30] sm:$0xff]
    %v436 = vld [vmem:[#allocation10 + $0x38] sm:$0xff]
    %v437 = vld [vmem:[#allocation10 + $0x40] sm:$0xff]
    %v438 = vld [vmem:[#allocation10 + $0x48] sm:$0xff]
    %v439 = vld [vmem:[#allocation10 + $0x50] sm:$0xff]
    %v440 = vld [vmem:[#allocation10 + $0x58] sm:$0xff]
    %v441 = vld [vmem:[#allocation10 + $0x60] sm:$0xff]
    %v442 = vld [vmem:[#allocation10 + $0x68] sm:$0xff]
    %v443 = vld [vmem:[#allocation10 + $0x70] sm:$0xff]
    %v444 = vld [vmem:[#allocation10 + $0x78] sm:$0xff]
    %v445 = vld [vmem:[#allocation10 + $0x80] sm:$0xff]
    %v446 = vld [vmem:[#allocation10 + $0x88] sm:$0xff]
    %v447 = vld [vmem:[#allocation10 + $0x90] sm:$0xff]
    %v448 = vld [vmem:[#allocation10 + $0x98] sm:$0xff]
    %v449 = vld [vmem:[#allocation10 + $0xa0] sm:$0xff]
    %v450 = vld [vmem:[#allocation10 + $0xa8] sm:$0xff]
    %v451 = vld [vmem:[#allocation10 + $0xb0] sm:$0xff]
    %v452 = vld [vmem:[#allocation10 + $0xb8] sm:$0xff]
    %v453 = vld [vmem:[#allocation10 + $0xc0] sm:$0xff]
    %v454 = vld [vmem:[#allocation10 + $0xc8] sm:$0xff]
    %v455 = vld [vmem:[#allocation10 + $0xd0] sm:$0xff]
    %v456 = vld [vmem:[#allocation10 + $0xd8] sm:$0xff]
    %v457 = vld [vmem:[#allocation10 + $0xe0] sm:$0xff]
    %v458 = vld [vmem:[#allocation10 + $0xe8] sm:$0xff]
    %v459 = vld [vmem:[#allocation10 + $0xf0] sm:$0xff]
    %v460 = vld [vmem:[#allocation10 + $0xf8] sm:$0xff]
    %v461 = vld [vmem:[#allocation11] sm:$0x3]
    %v463 = vlaneseq
    %v464 = vshrl.u32 %v463, 7
    %v465 = vsub.s32 0, %v464
    %v466 = vrot.slane %v461, %v465
    %v467 = vlaneseq
    %v468 = vshrl.u32 %v467, 7
    %v469 = vsub.s32 1, %v468
    %v470 = vrot.slane %v461, %v469
    %v505 = vunpack.c.l.b16 %v429
    %v506 = vunpack.c.h.b16 %v429
    %v507 = vunpack.c.l.b16 %v430
    %v508 = vunpack.c.h.b16 %v430
    %v509 = vunpack.c.l.b16 %v431
    %v510 = vunpack.c.h.b16 %v431
    %v511 = vunpack.c.l.b16 %v432
    %v512 = vunpack.c.h.b16 %v432
    %v513 = vunpack.c.l.b16 %v433
    %v514 = vunpack.c.h.b16 %v433
    %v515 = vunpack.c.l.b16 %v434
    %v516 = vunpack.c.h.b16 %v434
    %v517 = vunpack.c.l.b16 %v435
    %v518 = vunpack.c.h.b16 %v435
    %v519 = vunpack.c.l.b16 %v436
    %v520 = vunpack.c.h.b16 %v436
    %v521 = vunpack.c.l.b16 %v437
    %v522 = vunpack.c.h.b16 %v437
    %v523 = vunpack.c.l.b16 %v438
    %v524 = vunpack.c.h.b16 %v438
    %v525 = vunpack.c.l.b16 %v439
    %v526 = vunpack.c.h.b16 %v439
    %v527 = vunpack.c.l.b16 %v440
    %v528 = vunpack.c.h.b16 %v440
    %v529 = vunpack.c.l.b16 %v441
    %v530 = vunpack.c.h.b16 %v441
    %v531 = vunpack.c.l.b16 %v442
    %v532 = vunpack.c.h.b16 %v442
    %v533 = vunpack.c.l.b16 %v443
    %v534 = vunpack.c.h.b16 %v443
    %v535 = vunpack.c.l.b16 %v444
    %v536 = vunpack.c.h.b16 %v444
    %v537 = vunpack.c.l.b16 %v445
    %v538 = vunpack.c.h.b16 %v445
    %v539 = vunpack.c.l.b16 %v446
    %v540 = vunpack.c.h.b16 %v446
    %v541 = vunpack.c.l.b16 %v447
    %v542 = vunpack.c.h.b16 %v447
    %v543 = vunpack.c.l.b16 %v448
    %v544 = vunpack.c.h.b16 %v448
    %v545 = vunpack.c.l.b16 %v449
    %v546 = vunpack.c.h.b16 %v449
    %v547 = vunpack.c.l.b16 %v450
    %v548 = vunpack.c.h.b16 %v450
    %v549 = vunpack.c.l.b16 %v451
    %v550 = vunpack.c.h.b16 %v451
    %v551 = vunpack.c.l.b16 %v452
    %v552 = vunpack.c.h.b16 %v452
    %v553 = vunpack.c.l.b16 %v453
    %v554 = vunpack.c.h.b16 %v453
    %v555 = vunpack.c.l.b16 %v454
    %v556 = vunpack.c.h.b16 %v454
    %v557 = vunpack.c.l.b16 %v455
    %v558 = vunpack.c.h.b16 %v455
    %v559 = vunpack.c.l.b16 %v456
    %v560 = vunpack.c.h.b16 %v456
    %v561 = vunpack.c.l.b16 %v457
    %v562 = vunpack.c.h.b16 %v457
    %v563 = vunpack.c.l.b16 %v458
    %v564 = vunpack.c.h.b16 %v458
    %v565 = vunpack.c.l.b16 %v459
    %v566 = vunpack.c.h.b16 %v459
    %v567 = vunpack.c.l.b16 %v460
    %v568 = vunpack.c.h.b16 %v460
    %v569 = vpack.c.b16 %v507, %v505
    %v570 = vpack.c.b16 %v508, %v506
    %v571 = vpack.c.b16 %v511, %v509
    %v572 = vpack.c.b16 %v512, %v510
    %v573 = vpack.c.b16 %v515, %v513
    %v574 = vpack.c.b16 %v516, %v514
    %v575 = vpack.c.b16 %v519, %v517
    %v576 = vpack.c.b16 %v520, %v518
    %v577 = vpack.c.b16 %v523, %v521
    %v578 = vpack.c.b16 %v524, %v522
    %v579 = vpack.c.b16 %v527, %v525
    %v580 = vpack.c.b16 %v528, %v526
    %v581 = vpack.c.b16 %v531, %v529
    %v582 = vpack.c.b16 %v532, %v530
    %v583 = vpack.c.b16 %v535, %v533
    %v584 = vpack.c.b16 %v536, %v534
    %v585 = vpack.c.b16 %v539, %v537
    %v586 = vpack.c.b16 %v540, %v538
    %v587 = vpack.c.b16 %v543, %v541
    %v588 = vpack.c.b16 %v544, %v542
    %v589 = vpack.c.b16 %v547, %v545
    %v590 = vpack.c.b16 %v548, %v546
    %v591 = vpack.c.b16 %v551, %v549
    %v592 = vpack.c.b16 %v552, %v550
    %v593 = vpack.c.b16 %v555, %v553
    %v594 = vpack.c.b16 %v556, %v554
    %v595 = vpack.c.b16 %v559, %v557
    %v596 = vpack.c.b16 %v560, %v558
    %v597 = vpack.c.b16 %v563, %v561
    %v598 = vpack.c.b16 %v564, %v562
    %v599 = vpack.c.b16 %v567, %v565
    %v600 = vpack.c.b16 %v568, %v566
    %633 = vmatprep.subr.bf16.mxu0 %v570
    %634 = vmatpush1.bf16.msra.mxu0 %v569
    %635 = vmatprep.subr.bf16.mxu0 %v572
    %636 = vmatpush1.bf16.msra.mxu0 %v571
    %637 = vmatprep.subr.bf16.mxu0 %v574
    %638 = vmatpush1.bf16.msra.mxu0 %v573
    %639 = vmatprep.subr.bf16.mxu0 %v576
    %640 = vmatpush1.bf16.msra.mxu0 %v575
    %641 = vmatprep.subr.bf16.mxu0 %v578
    %642 = vmatpush1.bf16.msra.mxu0 %v577
    %643 = vmatprep.subr.bf16.mxu0 %v580
    %644 = vmatpush1.bf16.msra.mxu0 %v579
    %645 = vmatprep.subr.bf16.mxu0 %v582
    %646 = vmatpush1.bf16.msra.mxu0 %v581
    %647 = vmatprep.subr.bf16.mxu0 %v584
    %648 = vmatpush1.bf16.msra.mxu0 %v583
    %649 = vmatprep.subr.bf16.mxu0 %v586
    %650 = vmatpush1.bf16.msra.mxu0 %v585
    %651 = vmatprep.subr.bf16.mxu0 %v588
    %652 = vmatpush1.bf16.msra.mxu0 %v587
    %653 = vmatprep.subr.bf16.mxu0 %v590
    %654 = vmatpush1.bf16.msra.mxu0 %v589
    %655 = vmatprep.subr.bf16.mxu0 %v592
    %656 = vmatpush1.bf16.msra.mxu0 %v591
    %657 = vmatprep.subr.bf16.mxu0 %v594
    %658 = vmatpush1.bf16.msra.mxu0 %v593
    %659 = vmatprep.subr.bf16.mxu0 %v596
    %660 = vmatpush1.bf16.msra.mxu0 %v595
    %661 = vmatprep.subr.bf16.mxu0 %v598
    %662 = vmatpush1.bf16.msra.mxu0 %v597
    %663 = vmatprep.subr.bf16.mxu0 %v600
    %664 = vmatpush1.bf16.msra.mxu0 %v599
    %665 = vmatprep.mubr.bf16.mxu0 %v428
    %666 = vmatmul.mubr.bf16.gmra.mrb[0].mxu0 %v427
    %v667 = vpop.f32.mrb[0].mxu0
    %v668 = vadd.f32 %v466, %v667
    %v669 = vpop.f32.mrb[0].mxu0
    %v670 = vadd.f32 %v470, %v669
    %v671 = vpop.f32.mrb[0].mxu0
    %v672 = vpop.f32.mrb[0].mxu0
    %673 = vdwg.mxu0
    %v674 = vld [vmem:[#allocation2] sm:$0xff]
    %v675 = vld [vmem:[#allocation2 + $0x8] sm:$0xff]
    %v676 = vpack.c.bf16 %v674, %v674
    %v677 = vpack.c.bf16 %v675, %v675
    %v678 = vld [vmem:[#allocation13] sm:$0xff]
    %v679 = vld [vmem:[#allocation13 + $0x8] sm:$0xff]
    %v680 = vld [vmem:[#allocation13 + $0x10] sm:$0xff]
    %v681 = vld [vmem:[#allocation13 + $0x18] sm:$0xff]
    %v682 = vld [vmem:[#allocation13 + $0x20] sm:$0xff]
    %v683 = vld [vmem:[#allocation13 + $0x28] sm:$0xff]
    %v684 = vld [vmem:[#allocation13 + $0x30] sm:$0xff]
    %v685 = vld [vmem:[#allocation13 + $0x38] sm:$0xff]
    %v686 = vld [vmem:[#allocation13 + $0x40] sm:$0xff]
    %v687 = vld [vmem:[#allocation13 + $0x48] sm:$0xff]
    %v688 = vld [vmem:[#allocation13 + $0x50] sm:$0xff]
    %v689 = vld [vmem:[#allocation13 + $0x58] sm:$0xff]
    %v690 = vld [vmem:[#allocation13 + $0x60] sm:$0xff]
    %v691 = vld [vmem:[#allocation13 + $0x68] sm:$0xff]
    %v692 = vld [vmem:[#allocation13 + $0x70] sm:$0xff]
    %v693 = vld [vmem:[#allocation13 + $0x78] sm:$0xff]
    %v694 = vld [vmem:[#allocation13 + $0x80] sm:$0xff]
    %v695 = vld [vmem:[#allocation13 + $0x88] sm:$0xff]
    %v696 = vld [vmem:[#allocation13 + $0x90] sm:$0xff]
    %v697 = vld [vmem:[#allocation13 + $0x98] sm:$0xff]
    %v698 = vld [vmem:[#allocation13 + $0xa0] sm:$0xff]
    %v699 = vld [vmem:[#allocation13 + $0xa8] sm:$0xff]
    %v700 = vld [vmem:[#allocation13 + $0xb0] sm:$0xff]
    %v701 = vld [vmem:[#allocation13 + $0xb8] sm:$0xff]
    %v702 = vld [vmem:[#allocation13 + $0xc0] sm:$0xff]
    %v703 = vld [vmem:[#allocation13 + $0xc8] sm:$0xff]
    %v704 = vld [vmem:[#allocation13 + $0xd0] sm:$0xff]
    %v705 = vld [vmem:[#allocation13 + $0xd8] sm:$0xff]
    %v706 = vld [vmem:[#allocation13 + $0xe0] sm:$0xff]
    %v707 = vld [vmem:[#allocation13 + $0xe8] sm:$0xff]
    %v708 = vld [vmem:[#allocation13 + $0xf0] sm:$0xff]
    %v709 = vld [vmem:[#allocation13 + $0xf8] sm:$0xff]
    %v710 = vpack.c.bf16 %v668, %v668
    %v711 = vpack.c.bf16 %v670, %v670
    %v712 = vld [vmem:[#allocation14] sm:$0xff]
    %v713 = vld [vmem:[#allocation14 + $0x8] sm:$0xff]
    %v714 = vld [vmem:[#allocation14 + $0x10] sm:$0xff]
    %v715 = vld [vmem:[#allocation14 + $0x18] sm:$0xff]
    %v716 = vld [vmem:[#allocation14 + $0x20] sm:$0xff]
    %v717 = vld [vmem:[#allocation14 + $0x28] sm:$0xff]
    %v718 = vld [vmem:[#allocation14 + $0x30] sm:$0xff]
    %v719 = vld [vmem:[#allocation14 + $0x38] sm:$0xff]
    %v720 = vld [vmem:[#allocation14 + $0x40] sm:$0xff]
    %v721 = vld [vmem:[#allocation14 + $0x48] sm:$0xff]
    %v722 = vld [vmem:[#allocation14 + $0x50] sm:$0xff]
    %v723 = vld [vmem:[#allocation14 + $0x58] sm:$0xff]
    %v724 = vld [vmem:[#allocation14 + $0x60] sm:$0xff]
    %v725 = vld [vmem:[#allocation14 + $0x68] sm:$0xff]
    %v726 = vld [vmem:[#allocation14 + $0x70] sm:$0xff]
    %v727 = vld [vmem:[#allocation14 + $0x78] sm:$0xff]
    %v728 = vld [vmem:[#allocation14 + $0x80] sm:$0xff]
    %v729 = vld [vmem:[#allocation14 + $0x88] sm:$0xff]
    %v730 = vld [vmem:[#allocation14 + $0x90] sm:$0xff]
    %v731 = vld [vmem:[#allocation14 + $0x98] sm:$0xff]
    %v732 = vld [vmem:[#allocation14 + $0xa0] sm:$0xff]
    %v733 = vld [vmem:[#allocation14 + $0xa8] sm:$0xff]
    %v734 = vld [vmem:[#allocation14 + $0xb0] sm:$0xff]
    %v735 = vld [vmem:[#allocation14 + $0xb8] sm:$0xff]
    %v736 = vld [vmem:[#allocation14 + $0xc0] sm:$0xff]
    %v737 = vld [vmem:[#allocation14 + $0xc8] sm:$0xff]
    %v738 = vld [vmem:[#allocation14 + $0xd0] sm:$0xff]
    %v739 = vld [vmem:[#allocation14 + $0xd8] sm:$0xff]
    %v740 = vld [vmem:[#allocation14 + $0xe0] sm:$0xff]
    %v741 = vld [vmem:[#allocation14 + $0xe8] sm:$0xff]
    %v742 = vld [vmem:[#allocation14 + $0xf0] sm:$0xff]
    %v743 = vld [vmem:[#allocation14 + $0xf8] sm:$0xff]
    %v776 = vunpack.c.l.b16 %v712
    %v777 = vunpack.c.h.b16 %v712
    %v778 = vunpack.c.l.b16 %v713
    %v779 = vunpack.c.h.b16 %v713
    %v780 = vunpack.c.l.b16 %v714
    %v781 = vunpack.c.h.b16 %v714
    %v782 = vunpack.c.l.b16 %v715
    %v783 = vunpack.c.h.b16 %v715
    %v784 = vunpack.c.l.b16 %v716
    %v785 = vunpack.c.h.b16 %v716
    %v786 = vunpack.c.l.b16 %v717
    %v787 = vunpack.c.h.b16 %v717
    %v788 = vunpack.c.l.b16 %v718
    %v789 = vunpack.c.h.b16 %v718
    %v790 = vunpack.c.l.b16 %v719
    %v791 = vunpack.c.h.b16 %v719
    %v792 = vunpack.c.l.b16 %v720
    %v793 = vunpack.c.h.b16 %v720
    %v794 = vunpack.c.l.b16 %v721
    %v795 = vunpack.c.h.b16 %v721
    %v796 = vunpack.c.l.b16 %v722
    %v797 = vunpack.c.h.b16 %v722
    %v798 = vunpack.c.l.b16 %v723
    %v799 = vunpack.c.h.b16 %v723
    %v800 = vunpack.c.l.b16 %v724
    %v801 = vunpack.c.h.b16 %v724
    %v802 = vunpack.c.l.b16 %v725
    %v803 = vunpack.c.h.b16 %v725
    %v804 = vunpack.c.l.b16 %v726
    %v805 = vunpack.c.h.b16 %v726
    %v806 = vunpack.c.l.b16 %v727
    %v807 = vunpack.c.h.b16 %v727
    %v808 = vunpack.c.l.b16 %v728
    %v809 = vunpack.c.h.b16 %v728
    %v810 = vunpack.c.l.b16 %v729
    %v811 = vunpack.c.h.b16 %v729
    %v812 = vunpack.c.l.b16 %v730
    %v813 = vunpack.c.h.b16 %v730
    %v814 = vunpack.c.l.b16 %v731
    %v815 = vunpack.c.h.b16 %v731
    %v816 = vunpack.c.l.b16 %v732
    %v817 = vunpack.c.h.b16 %v732
    %v818 = vunpack.c.l.b16 %v733
    %v819 = vunpack.c.h.b16 %v733
    %v820 = vunpack.c.l.b16 %v734
    %v821 = vunpack.c.h.b16 %v734
    %v822 = vunpack.c.l.b16 %v735
    %v823 = vunpack.c.h.b16 %v735
    %v824 = vunpack.c.l.b16 %v736
    %v825 = vunpack.c.h.b16 %v736
    %v826 = vunpack.c.l.b16 %v737
    %v827 = vunpack.c.h.b16 %v737
    %v828 = vunpack.c.l.b16 %v738
    %v829 = vunpack.c.h.b16 %v738
    %v830 = vunpack.c.l.b16 %v739
    %v831 = vunpack.c.h.b16 %v739
    %v832 = vunpack.c.l.b16 %v740
    %v833 = vunpack.c.h.b16 %v740
    %v834 = vunpack.c.l.b16 %v741
    %v835 = vunpack.c.h.b16 %v741
    %v836 = vunpack.c.l.b16 %v742
    %v837 = vunpack.c.h.b16 %v742
    %v838 = vunpack.c.l.b16 %v743
    %v839 = vunpack.c.h.b16 %v743
    %v840 = vpack.c.b16 %v778, %v776
    %v841 = vpack.c.b16 %v779, %v777
    %v842 = vpack.c.b16 %v782, %v780
    %v843 = vpack.c.b16 %v783, %v781
    %v844 = vpack.c.b16 %v786, %v784
    %v845 = vpack.c.b16 %v787, %v785
    %v846 = vpack.c.b16 %v790, %v788
    %v847 = vpack.c.b16 %v791, %v789
    %v848 = vpack.c.b16 %v794, %v792
    %v849 = vpack.c.b16 %v795, %v793
    %v850 = vpack.c.b16 %v798, %v796
    %v851 = vpack.c.b16 %v799, %v797
    %v852 = vpack.c.b16 %v802, %v800
    %v853 = vpack.c.b16 %v803, %v801
    %v854 = vpack.c.b16 %v806, %v804
    %v855 = vpack.c.b16 %v807, %v805
    %v856 = vpack.c.b16 %v810, %v808
    %v857 = vpack.c.b16 %v811, %v809
    %v858 = vpack.c.b16 %v814, %v812
    %v859 = vpack.c.b16 %v815, %v813
    %v860 = vpack.c.b16 %v818, %v816
    %v861 = vpack.c.b16 %v819, %v817
    %v862 = vpack.c.b16 %v822, %v820
    %v863 = vpack.c.b16 %v823, %v821
    %v864 = vpack.c.b16 %v826, %v824
    %v865 = vpack.c.b16 %v827, %v825
    %v866 = vpack.c.b16 %v830, %v828
    %v867 = vpack.c.b16 %v831, %v829
    %v868 = vpack.c.b16 %v834, %v832
    %v869 = vpack.c.b16 %v835, %v833
    %v870 = vpack.c.b16 %v838, %v836
    %v871 = vpack.c.b16 %v839, %v837
    %904 = vmatprep.subr.bf16.mxu0 %v841
    %905 = vmatpush1.bf16.msra.mxu0 %v840
    %906 = vmatprep.subr.bf16.mxu0 %v843
    %907 = vmatpush1.bf16.msra.mxu0 %v842
    %908 = vmatprep.subr.bf16.mxu0 %v845
    %909 = vmatpush1.bf16.msra.mxu0 %v844
    %910 = vmatprep.subr.bf16.mxu0 %v847
    %911 = vmatpush1.bf16.msra.mxu0 %v846
    %912 = vmatprep.subr.bf16.mxu0 %v849
    %913 = vmatpush1.bf16.msra.mxu0 %v848
    %914 = vmatprep.subr.bf16.mxu0 %v851
    %915 = vmatpush1.bf16.msra.mxu0 %v850
    %916 = vmatprep.subr.bf16.mxu0 %v853
    %917 = vmatpush1.bf16.msra.mxu0 %v852
    %918 = vmatprep.subr.bf16.mxu0 %v855
    %919 = vmatpush1.bf16.msra.mxu0 %v854
    %920 = vmatprep.subr.bf16.mxu0 %v857
    %921 = vmatpush1.bf16.msra.mxu0 %v856
    %922 = vmatprep.subr.bf16.mxu0 %v859
    %923 = vmatpush1.bf16.msra.mxu0 %v858
    %924 = vmatprep.subr.bf16.mxu0 %v861
    %925 = vmatpush1.bf16.msra.mxu0 %v860
    %926 = vmatprep.subr.bf16.mxu0 %v863
    %927 = vmatpush1.bf16.msra.mxu0 %v862
    %928 = vmatprep.subr.bf16.mxu0 %v865
    %929 = vmatpush1.bf16.msra.mxu0 %v864
    %930 = vmatprep.subr.bf16.mxu0 %v867
    %931 = vmatpush1.bf16.msra.mxu0 %v866
    %932 = vmatprep.subr.bf16.mxu0 %v869
    %933 = vmatpush1.bf16.msra.mxu0 %v868
    %934 = vmatprep.subr.bf16.mxu0 %v871
    %935 = vmatpush1.bf16.msra.mxu0 %v870
    %936 = vmatprep.mubr.bf16.mxu0 %v711
    %937 = vmatmul.mubr.bf16.gmra.mrb[0].mxu0 %v710
    %v938 = vpop.f32.mrb[0].mxu0
    %v939 = vadd.f32 0.0, %v938
    %v940 = vpop.f32.mrb[0].mxu0
    %v941 = vadd.f32 0.0, %v940
    %v942 = vpop.f32.mrb[0].mxu0
    %v943 = vpop.f32.mrb[0].mxu0
    %944 = vdwg.mxu0
    %v977 = vunpack.c.l.b16 %v678
    %v978 = vunpack.c.h.b16 %v678
    %v979 = vunpack.c.l.b16 %v679
    %v980 = vunpack.c.h.b16 %v679
    %v981 = vunpack.c.l.b16 %v680
    %v982 = vunpack.c.h.b16 %v680
    %v983 = vunpack.c.l.b16 %v681
    %v984 = vunpack.c.h.b16 %v681
    %v985 = vunpack.c.l.b16 %v682
    %v986 = vunpack.c.h.b16 %v682
    %v987 = vunpack.c.l.b16 %v683
    %v988 = vunpack.c.h.b16 %v683
    %v989 = vunpack.c.l.b16 %v684
    %v990 = vunpack.c.h.b16 %v684
    %v991 = vunpack.c.l.b16 %v685
    %v992 = vunpack.c.h.b16 %v685
    %v993 = vunpack.c.l.b16 %v686
    %v994 = vunpack.c.h.b16 %v686
    %v995 = vunpack.c.l.b16 %v687
    %v996 = vunpack.c.h.b16 %v687
    %v997 = vunpack.c.l.b16 %v688
    %v998 = vunpack.c.h.b16 %v688
    %v999 = vunpack.c.l.b16 %v689
    %v1000 = vunpack.c.h.b16 %v689
    %v1001 = vunpack.c.l.b16 %v690
    %v1002 = vunpack.c.h.b16 %v690
    %v1003 = vunpack.c.l.b16 %v691
    %v1004 = vunpack.c.h.b16 %v691
    %v1005 = vunpack.c.l.b16 %v692
    %v1006 = vunpack.c.h.b16 %v692
    %v1007 = vunpack.c.l.b16 %v693
    %v1008 = vunpack.c.h.b16 %v693
    %v1009 = vunpack.c.l.b16 %v694
    %v1010 = vunpack.c.h.b16 %v694
    %v1011 = vunpack.c.l.b16 %v695
    %v1012 = vunpack.c.h.b16 %v695
    %v1013 = vunpack.c.l.b16 %v696
    %v1014 = vunpack.c.h.b16 %v696
    %v1015 = vunpack.c.l.b16 %v697
    %v1016 = vunpack.c.h.b16 %v697
    %v1017 = vunpack.c.l.b16 %v698
    %v1018 = vunpack.c.h.b16 %v698
    %v1019 = vunpack.c.l.b16 %v699
    %v1020 = vunpack.c.h.b16 %v699
    %v1021 = vunpack.c.l.b16 %v700
    %v1022 = vunpack.c.h.b16 %v700
    %v1023 = vunpack.c.l.b16 %v701
    %v1024 = vunpack.c.h.b16 %v701
    %v1025 = vunpack.c.l.b16 %v702
    %v1026 = vunpack.c.h.b16 %v702
    %v1027 = vunpack.c.l.b16 %v703
    %v1028 = vunpack.c.h.b16 %v703
    %v1029 = vunpack.c.l.b16 %v704
    %v1030 = vunpack.c.h.b16 %v704
    %v1031 = vunpack.c.l.b16 %v705
    %v1032 = vunpack.c.h.b16 %v705
    %v1033 = vunpack.c.l.b16 %v706
    %v1034 = vunpack.c.h.b16 %v706
    %v1035 = vunpack.c.l.b16 %v707
    %v1036 = vunpack.c.h.b16 %v707
    %v1037 = vunpack.c.l.b16 %v708
    %v1038 = vunpack.c.h.b16 %v708
    %v1039 = vunpack.c.l.b16 %v709
    %v1040 = vunpack.c.h.b16 %v709
    %v1041 = vpack.c.b16 %v979, %v977
    %v1042 = vpack.c.b16 %v980, %v978
    %v1043 = vpack.c.b16 %v983, %v981
    %v1044 = vpack.c.b16 %v984, %v982
    %v1045 = vpack.c.b16 %v987, %v985
    %v1046 = vpack.c.b16 %v988, %v986
    %v1047 = vpack.c.b16 %v991, %v989
    %v1048 = vpack.c.b16 %v992, %v990
    %v1049 = vpack.c.b16 %v995, %v993
    %v1050 = vpack.c.b16 %v996, %v994
    %v1051 = vpack.c.b16 %v999, %v997
    %v1052 = vpack.c.b16 %v1000, %v998
    %v1053 = vpack.c.b16 %v1003, %v1001
    %v1054 = vpack.c.b16 %v1004, %v1002
    %v1055 = vpack.c.b16 %v1007, %v1005
    %v1056 = vpack.c.b16 %v1008, %v1006
    %v1057 = vpack.c.b16 %v1011, %v1009
    %v1058 = vpack.c.b16 %v1012, %v1010
    %v1059 = vpack.c.b16 %v1015, %v1013
    %v1060 = vpack.c.b16 %v1016, %v1014
    %v1061 = vpack.c.b16 %v1019, %v1017
    %v1062 = vpack.c.b16 %v1020, %v1018
    %v1063 = vpack.c.b16 %v1023, %v1021
    %v1064 = vpack.c.b16 %v1024, %v1022
    %v1065 = vpack.c.b16 %v1027, %v1025
    %v1066 = vpack.c.b16 %v1028, %v1026
    %v1067 = vpack.c.b16 %v1031, %v1029
    %v1068 = vpack.c.b16 %v1032, %v1030
    %v1069 = vpack.c.b16 %v1035, %v1033
    %v1070 = vpack.c.b16 %v1036, %v1034
    %v1071 = vpack.c.b16 %v1039, %v1037
    %v1072 = vpack.c.b16 %v1040, %v1038
    %1105 = vmatprep.subr.bf16.mxu0 %v1042
    %1106 = vmatpush1.bf16.msra.mxu0 %v1041
    %1107 = vmatprep.subr.bf16.mxu0 %v1044
    %1108 = vmatpush1.bf16.msra.mxu0 %v1043
    %1109 = vmatprep.subr.bf16.mxu0 %v1046
    %1110 = vmatpush1.bf16.msra.mxu0 %v1045
    %1111 = vmatprep.subr.bf16.mxu0 %v1048
    %1112 = vmatpush1.bf16.msra.mxu0 %v1047
    %1113 = vmatprep.subr.bf16.mxu0 %v1050
    %1114 = vmatpush1.bf16.msra.mxu0 %v1049
    %1115 = vmatprep.subr.bf16.mxu0 %v1052
    %1116 = vmatpush1.bf16.msra.mxu0 %v1051
    %1117 = vmatprep.subr.bf16.mxu0 %v1054
    %1118 = vmatpush1.bf16.msra.mxu0 %v1053
    %1119 = vmatprep.subr.bf16.mxu0 %v1056
    %1120 = vmatpush1.bf16.msra.mxu0 %v1055
    %1121 = vmatprep.subr.bf16.mxu0 %v1058
    %1122 = vmatpush1.bf16.msra.mxu0 %v1057
    %1123 = vmatprep.subr.bf16.mxu0 %v1060
    %1124 = vmatpush1.bf16.msra.mxu0 %v1059
    %1125 = vmatprep.subr.bf16.mxu0 %v1062
    %1126 = vmatpush1.bf16.msra.mxu0 %v1061
    %1127 = vmatprep.subr.bf16.mxu0 %v1064
    %1128 = vmatpush1.bf16.msra.mxu0 %v1063
    %1129 = vmatprep.subr.bf16.mxu0 %v1066
    %1130 = vmatpush1.bf16.msra.mxu0 %v1065
    %1131 = vmatprep.subr.bf16.mxu0 %v1068
    %1132 = vmatpush1.bf16.msra.mxu0 %v1067
    %1133 = vmatprep.subr.bf16.mxu0 %v1070
    %1134 = vmatpush1.bf16.msra.mxu0 %v1069
    %1135 = vmatprep.subr.bf16.mxu0 %v1072
    %1136 = vmatpush1.bf16.msra.mxu0 %v1071
    %1137 = vmatprep.mubr.bf16.mxu0 %v677
    %1138 = vmatmul.mubr.bf16.gmra.mrb[0].mxu0 %v676
    %v1139 = vpop.f32.mrb[0].mxu0
    %v1140 = vadd.f32 %v939, %v1139
    %v1141 = vpop.f32.mrb[0].mxu0
    %v1142 = vadd.f32 %v941, %v1141
    %v1143 = vpop.f32.mrb[0].mxu0
    %v1144 = vpop.f32.mrb[0].mxu0
    %1145 = vdwg.mxu0
    %v1146 = vld [vmem:[#allocation16] sm:$0x3]
    %v1148 = vlaneseq
    %v1149 = vshrl.u32 %v1148, 7
    %v1150 = vsub.s32 0, %v1149
    %v1151 = vrot.slane %v1146, %v1150
    %v1152 = vlaneseq
    %v1153 = vshrl.u32 %v1152, 7
    %v1154 = vsub.s32 1, %v1153
    %v1155 = vrot.slane %v1146, %v1154
    %v1158 = vadd.f32 %v1140, %v1151
    %v1159 = vadd.f32 %v1142, %v1155
    %v1160 = vmax.f32 %v1158, 0.0
    %v1161 = vmax.f32 %v1159, 0.0
    %v1162 = vpack.c.bf16 %v1160, %v1160
    %v1163 = vpack.c.bf16 %v1161, %v1161
    %v1164 = vld [vmem:[#allocation17] sm:$0xff]
    %v1165 = vld [vmem:[#allocation17 + $0x8] sm:$0xff]
    %v1166 = vld [vmem:[#allocation17 + $0x10] sm:$0xff]
    %v1167 = vld [vmem:[#allocation17 + $0x18] sm:$0xff]
    %v1168 = vld [vmem:[#allocation17 + $0x20] sm:$0xff]
    %v1169 = vld [vmem:[#allocation17 + $0x28] sm:$0xff]
    %v1170 = vld [vmem:[#allocation17 + $0x30] sm:$0xff]
    %v1171 = vld [vmem:[#allocation17 + $0x38] sm:$0xff]
    %v1172 = vld [vmem:[#allocation17 + $0x40] sm:$0xff]
    %v1173 = vld [vmem:[#allocation17 + $0x48] sm:$0xff]
    %v1174 = vld [vmem:[#allocation17 + $0x50] sm:$0xff]
    %v1175 = vld [vmem:[#allocation17 + $0x58] sm:$0xff]
    %v1176 = vld [vmem:[#allocation17 + $0x60] sm:$0xff]
    %v1177 = vld [vmem:[#allocation17 + $0x68] sm:$0xff]
    %v1178 = vld [vmem:[#allocation17 + $0x70] sm:$0xff]
    %v1179 = vld [vmem:[#allocation17 + $0x78] sm:$0xff]
    %v1180 = vld [vmem:[#allocation17 + $0x80] sm:$0xff]
    %v1181 = vld [vmem:[#allocation17 + $0x88] sm:$0xff]
    %v1182 = vld [vmem:[#allocation17 + $0x90] sm:$0xff]
    %v1183 = vld [vmem:[#allocation17 + $0x98] sm:$0xff]
    %v1184 = vld [vmem:[#allocation17 + $0xa0] sm:$0xff]
    %v1185 = vld [vmem:[#allocation17 + $0xa8] sm:$0xff]
    %v1186 = vld [vmem:[#allocation17 + $0xb0] sm:$0xff]
    %v1187 = vld [vmem:[#allocation17 + $0xb8] sm:$0xff]
    %v1188 = vld [vmem:[#allocation17 + $0xc0] sm:$0xff]
    %v1189 = vld [vmem:[#allocation17 + $0xc8] sm:$0xff]
    %v1190 = vld [vmem:[#allocation17 + $0xd0] sm:$0xff]
    %v1191 = vld [vmem:[#allocation17 + $0xd8] sm:$0xff]
    %v1192 = vld [vmem:[#allocation17 + $0xe0] sm:$0xff]
    %v1193 = vld [vmem:[#allocation17 + $0xe8] sm:$0xff]
    %v1194 = vld [vmem:[#allocation17 + $0xf0] sm:$0xff]
    %v1195 = vld [vmem:[#allocation17 + $0xf8] sm:$0xff]
    %v1196 = vld [vmem:[#allocation17 + $0x100] sm:$0xff]
    %v1197 = vld [vmem:[#allocation17 + $0x108] sm:$0xff]
    %v1198 = vld [vmem:[#allocation17 + $0x110] sm:$0xff]
    %v1199 = vld [vmem:[#allocation17 + $0x118] sm:$0xff]
    %v1200 = vld [vmem:[#allocation17 + $0x120] sm:$0xff]
    %v1201 = vld [vmem:[#allocation17 + $0x128] sm:$0xff]
    %v1202 = vld [vmem:[#allocation17 + $0x130] sm:$0xff]
    %v1203 = vld [vmem:[#allocation17 + $0x138] sm:$0xff]
    %v1204 = vld [vmem:[#allocation17 + $0x140] sm:$0xff]
    %v1205 = vld [vmem:[#allocation17 + $0x148] sm:$0xff]
    %v1206 = vld [vmem:[#allocation17 + $0x150] sm:$0xff]
    %v1207 = vld [vmem:[#allocation17 + $0x158] sm:$0xff]
    %v1208 = vld [vmem:[#allocation17 + $0x160] sm:$0xff]
    %v1209 = vld [vmem:[#allocation17 + $0x168] sm:$0xff]
    %v1210 = vld [vmem:[#allocation17 + $0x170] sm:$0xff]
    %v1211 = vld [vmem:[#allocation17 + $0x178] sm:$0xff]
    %v1212 = vld [vmem:[#allocation17 + $0x180] sm:$0xff]
    %v1213 = vld [vmem:[#allocation17 + $0x188] sm:$0xff]
    %v1214 = vld [vmem:[#allocation17 + $0x190] sm:$0xff]
    %v1215 = vld [vmem:[#allocation17 + $0x198] sm:$0xff]
    %v1216 = vld [vmem:[#allocation17 + $0x1a0] sm:$0xff]
    %v1217 = vld [vmem:[#allocation17 + $0x1a8] sm:$0xff]
    %v1218 = vld [vmem:[#allocation17 + $0x1b0] sm:$0xff]
    %v1219 = vld [vmem:[#allocation17 + $0x1b8] sm:$0xff]
    %v1220 = vld [vmem:[#allocation17 + $0x1c0] sm:$0xff]
    %v1221 = vld [vmem:[#allocation17 + $0x1c8] sm:$0xff]
    %v1222 = vld [vmem:[#allocation17 + $0x1d0] sm:$0xff]
    %v1223 = vld [vmem:[#allocation17 + $0x1d8] sm:$0xff]
    %v1224 = vld [vmem:[#allocation17 + $0x1e0] sm:$0xff]
    %v1225 = vld [vmem:[#allocation17 + $0x1e8] sm:$0xff]
    %v1226 = vld [vmem:[#allocation17 + $0x1f0] sm:$0xff]
    %v1227 = vld [vmem:[#allocation17 + $0x1f8] sm:$0xff]
    %v1228 = vld [vmem:[#allocation17 + $0x200] sm:$0xff]
    %v1229 = vld [vmem:[#allocation17 + $0x208] sm:$0xff]
    %v1230 = vld [vmem:[#allocation17 + $0x210] sm:$0xff]
    %v1231 = vld [vmem:[#allocation17 + $0x218] sm:$0xff]
    %v1232 = vld [vmem:[#allocation17 + $0x220] sm:$0xff]
    %v1233 = vld [vmem:[#allocation17 + $0x228] sm:$0xff]
    %v1234 = vld [vmem:[#allocation17 + $0x230] sm:$0xff]
    %v1235 = vld [vmem:[#allocation17 + $0x238] sm:$0xff]
    %v1236 = vld [vmem:[#allocation17 + $0x240] sm:$0xff]
    %v1237 = vld [vmem:[#allocation17 + $0x248] sm:$0xff]
    %v1238 = vld [vmem:[#allocation17 + $0x250] sm:$0xff]
    %v1239 = vld [vmem:[#allocation17 + $0x258] sm:$0xff]
    %v1240 = vld [vmem:[#allocation17 + $0x260] sm:$0xff]
    %v1241 = vld [vmem:[#allocation17 + $0x268] sm:$0xff]
    %v1242 = vld [vmem:[#allocation17 + $0x270] sm:$0xff]
    %v1243 = vld [vmem:[#allocation17 + $0x278] sm:$0xff]
    %v1244 = vld [vmem:[#allocation17 + $0x280] sm:$0xff]
    %v1245 = vld [vmem:[#allocation17 + $0x288] sm:$0xff]
    %v1246 = vld [vmem:[#allocation17 + $0x290] sm:$0xff]
    %v1247 = vld [vmem:[#allocation17 + $0x298] sm:$0xff]
    %v1248 = vld [vmem:[#allocation17 + $0x2a0] sm:$0xff]
    %v1249 = vld [vmem:[#allocation17 + $0x2a8] sm:$0xff]
    %v1250 = vld [vmem:[#allocation17 + $0x2b0] sm:$0xff]
    %v1251 = vld [vmem:[#allocation17 + $0x2b8] sm:$0xff]
    %v1252 = vld [vmem:[#allocation17 + $0x2c0] sm:$0xff]
    %v1253 = vld [vmem:[#allocation17 + $0x2c8] sm:$0xff]
    %v1254 = vld [vmem:[#allocation17 + $0x2d0] sm:$0xff]
    %v1255 = vld [vmem:[#allocation17 + $0x2d8] sm:$0xff]
    %v1256 = vld [vmem:[#allocation17 + $0x2e0] sm:$0xff]
    %v1257 = vld [vmem:[#allocation17 + $0x2e8] sm:$0xff]
    %v1258 = vld [vmem:[#allocation17 + $0x2f0] sm:$0xff]
    %v1259 = vld [vmem:[#allocation17 + $0x2f8] sm:$0xff]
    %v1260 = vld [vmem:[#allocation17 + $0x300] sm:$0xff]
    %v1261 = vld [vmem:[#allocation17 + $0x308] sm:$0xff]
    %v1262 = vld [vmem:[#allocation17 + $0x310] sm:$0xff]
    %v1263 = vld [vmem:[#allocation17 + $0x318] sm:$0xff]
    %v1264 = vld [vmem:[#allocation17 + $0x320] sm:$0xff]
    %v1265 = vld [vmem:[#allocation17 + $0x328] sm:$0xff]
    %v1266 = vld [vmem:[#allocation17 + $0x330] sm:$0xff]
    %v1267 = vld [vmem:[#allocation17 + $0x338] sm:$0xff]
    %v1268 = vld [vmem:[#allocation17 + $0x340] sm:$0xff]
    %v1269 = vld [vmem:[#allocation17 + $0x348] sm:$0xff]
    %v1270 = vld [vmem:[#allocation17 + $0x350] sm:$0xff]
    %v1271 = vld [vmem:[#allocation17 + $0x358] sm:$0xff]
    %v1272 = vld [vmem:[#allocation17 + $0x360] sm:$0xff]
    %v1273 = vld [vmem:[#allocation17 + $0x368] sm:$0xff]
    %v1274 = vld [vmem:[#allocation17 + $0x370] sm:$0xff]
    %v1275 = vld [vmem:[#allocation17 + $0x378] sm:$0xff]
    %v1276 = vld [vmem:[#allocation17 + $0x380] sm:$0xff]
    %v1277 = vld [vmem:[#allocation17 + $0x388] sm:$0xff]
    %v1278 = vld [vmem:[#allocation17 + $0x390] sm:$0xff]
    %v1279 = vld [vmem:[#allocation17 + $0x398] sm:$0xff]
    %v1280 = vld [vmem:[#allocation17 + $0x3a0] sm:$0xff]
    %v1281 = vld [vmem:[#allocation17 + $0x3a8] sm:$0xff]
    %v1282 = vld [vmem:[#allocation17 + $0x3b0] sm:$0xff]
    %v1283 = vld [vmem:[#allocation17 + $0x3b8] sm:$0xff]
    %v1284 = vld [vmem:[#allocation17 + $0x3c0] sm:$0xff]
    %v1285 = vld [vmem:[#allocation17 + $0x3c8] sm:$0xff]
    %v1286 = vld [vmem:[#allocation17 + $0x3d0] sm:$0xff]
    %v1287 = vld [vmem:[#allocation17 + $0x3d8] sm:$0xff]
    %v1288 = vld [vmem:[#allocation17 + $0x3e0] sm:$0xff]
    %v1289 = vld [vmem:[#allocation17 + $0x3e8] sm:$0xff]
    %v1290 = vld [vmem:[#allocation17 + $0x3f0] sm:$0xff]
    %v1291 = vld [vmem:[#allocation17 + $0x3f8] sm:$0xff]
    %v1292 = vld [vmem:[#allocation19] sm:$0xff]
    %v1294 = vlaneseq
    %v1295 = vshrl.u32 %v1294, 7
    %v1296 = vsub.s32 0, %v1295
    %v1297 = vrot.slane %v1292, %v1296
    %v1298 = vlaneseq
    %v1299 = vshrl.u32 %v1298, 7
    %v1300 = vsub.s32 1, %v1299
    %v1301 = vrot.slane %v1292, %v1300
    %v1302 = vlaneseq
    %v1303 = vshrl.u32 %v1302, 7
    %v1304 = vsub.s32 2, %v1303
    %v1305 = vrot.slane %v1292, %v1304
    %v1306 = vlaneseq
    %v1307 = vshrl.u32 %v1306, 7
    %v1308 = vsub.s32 3, %v1307
    %v1309 = vrot.slane %v1292, %v1308
    %v1310 = vlaneseq
    %v1311 = vshrl.u32 %v1310, 7
    %v1312 = vsub.s32 4, %v1311
    %v1313 = vrot.slane %v1292, %v1312
    %v1314 = vlaneseq
    %v1315 = vshrl.u32 %v1314, 7
    %v1316 = vsub.s32 5, %v1315
    %v1317 = vrot.slane %v1292, %v1316
    %v1318 = vlaneseq
    %v1319 = vshrl.u32 %v1318, 7
    %v1320 = vsub.s32 6, %v1319
    %v1321 = vrot.slane %v1292, %v1320
    %v1322 = vlaneseq
    %v1323 = vshrl.u32 %v1322, 7
    %v1324 = vsub.s32 7, %v1323
    %v1325 = vrot.slane %v1292, %v1324
    %v1462 = vunpack.c.l.b16 %v1164
    %v1463 = vunpack.c.h.b16 %v1164
    %v1464 = vunpack.c.l.b16 %v1165
    %v1465 = vunpack.c.h.b16 %v1165
    %v1466 = vunpack.c.l.b16 %v1166
    %v1467 = vunpack.c.h.b16 %v1166
    %v1468 = vunpack.c.l.b16 %v1167
    %v1469 = vunpack.c.h.b16 %v1167
    %v1470 = vunpack.c.l.b16 %v1168
    %v1471 = vunpack.c.h.b16 %v1168
    %v1472 = vunpack.c.l.b16 %v1169
    %v1473 = vunpack.c.h.b16 %v1169
    %v1474 = vunpack.c.l.b16 %v1170
    %v1475 = vunpack.c.h.b16 %v1170
    %v1476 = vunpack.c.l.b16 %v1171
    %v1477 = vunpack.c.h.b16 %v1171
    %v1478 = vunpack.c.l.b16 %v1172
    %v1479 = vunpack.c.h.b16 %v1172
    %v1480 = vunpack.c.l.b16 %v1173
    %v1481 = vunpack.c.h.b16 %v1173
    %v1482 = vunpack.c.l.b16 %v1174
    %v1483 = vunpack.c.h.b16 %v1174
    %v1484 = vunpack.c.l.b16 %v1175
    %v1485 = vunpack.c.h.b16 %v1175
    %v1486 = vunpack.c.l.b16 %v1176
    %v1487 = vunpack.c.h.b16 %v1176
    %v1488 = vunpack.c.l.b16 %v1177
    %v1489 = vunpack.c.h.b16 %v1177
    %v1490 = vunpack.c.l.b16 %v1178
    %v1491 = vunpack.c.h.b16 %v1178
    %v1492 = vunpack.c.l.b16 %v1179
    %v1493 = vunpack.c.h.b16 %v1179
    %v1494 = vunpack.c.l.b16 %v1180
    %v1495 = vunpack.c.h.b16 %v1180
    %v1496 = vunpack.c.l.b16 %v1181
    %v1497 = vunpack.c.h.b16 %v1181
    %v1498 = vunpack.c.l.b16 %v1182
    %v1499 = vunpack.c.h.b16 %v1182
    %v1500 = vunpack.c.l.b16 %v1183
    %v1501 = vunpack.c.h.b16 %v1183
    %v1502 = vunpack.c.l.b16 %v1184
    %v1503 = vunpack.c.h.b16 %v1184
    %v1504 = vunpack.c.l.b16 %v1185
    %v1505 = vunpack.c.h.b16 %v1185
    %v1506 = vunpack.c.l.b16 %v1186
    %v1507 = vunpack.c.h.b16 %v1186
    %v1508 = vunpack.c.l.b16 %v1187
    %v1509 = vunpack.c.h.b16 %v1187
    %v1510 = vunpack.c.l.b16 %v1188
    %v1511 = vunpack.c.h.b16 %v1188
    %v1512 = vunpack.c.l.b16 %v1189
    %v1513 = vunpack.c.h.b16 %v1189
    %v1514 = vunpack.c.l.b16 %v1190
    %v1515 = vunpack.c.h.b16 %v1190
    %v1516 = vunpack.c.l.b16 %v1191
    %v1517 = vunpack.c.h.b16 %v1191
    %v1518 = vunpack.c.l.b16 %v1192
    %v1519 = vunpack.c.h.b16 %v1192
    %v1520 = vunpack.c.l.b16 %v1193
    %v1521 = vunpack.c.h.b16 %v1193
    %v1522 = vunpack.c.l.b16 %v1194
    %v1523 = vunpack.c.h.b16 %v1194
    %v1524 = vunpack.c.l.b16 %v1195
    %v1525 = vunpack.c.h.b16 %v1195
    %v1526 = vunpack.c.l.b16 %v1196
    %v1527 = vunpack.c.h.b16 %v1196
    %v1528 = vunpack.c.l.b16 %v1197
    %v1529 = vunpack.c.h.b16 %v1197
    %v1530 = vunpack.c.l.b16 %v1198
    %v1531 = vunpack.c.h.b16 %v1198
    %v1532 = vunpack.c.l.b16 %v1199
    %v1533 = vunpack.c.h.b16 %v1199
    %v1534 = vunpack.c.l.b16 %v1200
    %v1535 = vunpack.c.h.b16 %v1200
    %v1536 = vunpack.c.l.b16 %v1201
    %v1537 = vunpack.c.h.b16 %v1201
    %v1538 = vunpack.c.l.b16 %v1202
    %v1539 = vunpack.c.h.b16 %v1202
    %v1540 = vunpack.c.l.b16 %v1203
    %v1541 = vunpack.c.h.b16 %v1203
    %v1542 = vunpack.c.l.b16 %v1204
    %v1543 = vunpack.c.h.b16 %v1204
    %v1544 = vunpack.c.l.b16 %v1205
    %v1545 = vunpack.c.h.b16 %v1205
    %v1546 = vunpack.c.l.b16 %v1206
    %v1547 = vunpack.c.h.b16 %v1206
    %v1548 = vunpack.c.l.b16 %v1207
    %v1549 = vunpack.c.h.b16 %v1207
    %v1550 = vunpack.c.l.b16 %v1208
    %v1551 = vunpack.c.h.b16 %v1208
    %v1552 = vunpack.c.l.b16 %v1209
    %v1553 = vunpack.c.h.b16 %v1209
    %v1554 = vunpack.c.l.b16 %v1210
    %v1555 = vunpack.c.h.b16 %v1210
    %v1556 = vunpack.c.l.b16 %v1211
    %v1557 = vunpack.c.h.b16 %v1211
    %v1558 = vunpack.c.l.b16 %v1212
    %v1559 = vunpack.c.h.b16 %v1212
    %v1560 = vunpack.c.l.b16 %v1213
    %v1561 = vunpack.c.h.b16 %v1213
    %v1562 = vunpack.c.l.b16 %v1214
    %v1563 = vunpack.c.h.b16 %v1214
    %v1564 = vunpack.c.l.b16 %v1215
    %v1565 = vunpack.c.h.b16 %v1215
    %v1566 = vunpack.c.l.b16 %v1216
    %v1567 = vunpack.c.h.b16 %v1216
    %v1568 = vunpack.c.l.b16 %v1217
    %v1569 = vunpack.c.h.b16 %v1217
    %v1570 = vunpack.c.l.b16 %v1218
    %v1571 = vunpack.c.h.b16 %v1218
    %v1572 = vunpack.c.l.b16 %v1219
    %v1573 = vunpack.c.h.b16 %v1219
    %v1574 = vunpack.c.l.b16 %v1220
    %v1575 = vunpack.c.h.b16 %v1220
    %v1576 = vunpack.c.l.b16 %v1221
    %v1577 = vunpack.c.h.b16 %v1221
    %v1578 = vunpack.c.l.b16 %v1222
    %v1579 = vunpack.c.h.b16 %v1222
    %v1580 = vunpack.c.l.b16 %v1223
    %v1581 = vunpack.c.h.b16 %v1223
    %v1582 = vunpack.c.l.b16 %v1224
    %v1583 = vunpack.c.h.b16 %v1224
    %v1584 = vunpack.c.l.b16 %v1225
    %v1585 = vunpack.c.h.b16 %v1225
    %v1586 = vunpack.c.l.b16 %v1226
    %v1587 = vunpack.c.h.b16 %v1226
    %v1588 = vunpack.c.l.b16 %v1227
    %v1589 = vunpack.c.h.b16 %v1227
    %v1590 = vunpack.c.l.b16 %v1228
    %v1591 = vunpack.c.h.b16 %v1228
    %v1592 = vunpack.c.l.b16 %v1229
    %v1593 = vunpack.c.h.b16 %v1229
    %v1594 = vunpack.c.l.b16 %v1230
    %v1595 = vunpack.c.h.b16 %v1230
    %v1596 = vunpack.c.l.b16 %v1231
    %v1597 = vunpack.c.h.b16 %v1231
    %v1598 = vunpack.c.l.b16 %v1232
    %v1599 = vunpack.c.h.b16 %v1232
    %v1600 = vunpack.c.l.b16 %v1233
    %v1601 = vunpack.c.h.b16 %v1233
    %v1602 = vunpack.c.l.b16 %v1234
    %v1603 = vunpack.c.h.b16 %v1234
    %v1604 = vunpack.c.l.b16 %v1235
    %v1605 = vunpack.c.h.b16 %v1235
    %v1606 = vunpack.c.l.b16 %v1236
    %v1607 = vunpack.c.h.b16 %v1236
    %v1608 = vunpack.c.l.b16 %v1237
    %v1609 = vunpack.c.h.b16 %v1237
    %v1610 = vunpack.c.l.b16 %v1238
    %v1611 = vunpack.c.h.b16 %v1238
    %v1612 = vunpack.c.l.b16 %v1239
    %v1613 = vunpack.c.h.b16 %v1239
    %v1614 = vunpack.c.l.b16 %v1240
    %v1615 = vunpack.c.h.b16 %v1240
    %v1616 = vunpack.c.l.b16 %v1241
    %v1617 = vunpack.c.h.b16 %v1241
    %v1618 = vunpack.c.l.b16 %v1242
    %v1619 = vunpack.c.h.b16 %v1242
    %v1620 = vunpack.c.l.b16 %v1243
    %v1621 = vunpack.c.h.b16 %v1243
    %v1622 = vunpack.c.l.b16 %v1244
    %v1623 = vunpack.c.h.b16 %v1244
    %v1624 = vunpack.c.l.b16 %v1245
    %v1625 = vunpack.c.h.b16 %v1245
    %v1626 = vunpack.c.l.b16 %v1246
    %v1627 = vunpack.c.h.b16 %v1246
    %v1628 = vunpack.c.l.b16 %v1247
    %v1629 = vunpack.c.h.b16 %v1247
    %v1630 = vunpack.c.l.b16 %v1248
    %v1631 = vunpack.c.h.b16 %v1248
    %v1632 = vunpack.c.l.b16 %v1249
    %v1633 = vunpack.c.h.b16 %v1249
    %v1634 = vunpack.c.l.b16 %v1250
    %v1635 = vunpack.c.h.b16 %v1250
    %v1636 = vunpack.c.l.b16 %v1251
    %v1637 = vunpack.c.h.b16 %v1251
    %v1638 = vunpack.c.l.b16 %v1252
    %v1639 = vunpack.c.h.b16 %v1252
    %v1640 = vunpack.c.l.b16 %v1253
    %v1641 = vunpack.c.h.b16 %v1253
    %v1642 = vunpack.c.l.b16 %v1254
    %v1643 = vunpack.c.h.b16 %v1254
    %v1644 = vunpack.c.l.b16 %v1255
    %v1645 = vunpack.c.h.b16 %v1255
    %v1646 = vunpack.c.l.b16 %v1256
    %v1647 = vunpack.c.h.b16 %v1256
    %v1648 = vunpack.c.l.b16 %v1257
    %v1649 = vunpack.c.h.b16 %v1257
    %v1650 = vunpack.c.l.b16 %v1258
    %v1651 = vunpack.c.h.b16 %v1258
    %v1652 = vunpack.c.l.b16 %v1259
    %v1653 = vunpack.c.h.b16 %v1259
    %v1654 = vunpack.c.l.b16 %v1260
    %v1655 = vunpack.c.h.b16 %v1260
    %v1656 = vunpack.c.l.b16 %v1261
    %v1657 = vunpack.c.h.b16 %v1261
    %v1658 = vunpack.c.l.b16 %v1262
    %v1659 = vunpack.c.h.b16 %v1262
    %v1660 = vunpack.c.l.b16 %v1263
    %v1661 = vunpack.c.h.b16 %v1263
    %v1662 = vunpack.c.l.b16 %v1264
    %v1663 = vunpack.c.h.b16 %v1264
    %v1664 = vunpack.c.l.b16 %v1265
    %v1665 = vunpack.c.h.b16 %v1265
    %v1666 = vunpack.c.l.b16 %v1266
    %v1667 = vunpack.c.h.b16 %v1266
    %v1668 = vunpack.c.l.b16 %v1267
    %v1669 = vunpack.c.h.b16 %v1267
    %v1670 = vunpack.c.l.b16 %v1268
    %v1671 = vunpack.c.h.b16 %v1268
    %v1672 = vunpack.c.l.b16 %v1269
    %v1673 = vunpack.c.h.b16 %v1269
    %v1674 = vunpack.c.l.b16 %v1270
    %v1675 = vunpack.c.h.b16 %v1270
    %v1676 = vunpack.c.l.b16 %v1271
    %v1677 = vunpack.c.h.b16 %v1271
    %v1678 = vunpack.c.l.b16 %v1272
    %v1679 = vunpack.c.h.b16 %v1272
    %v1680 = vunpack.c.l.b16 %v1273
    %v1681 = vunpack.c.h.b16 %v1273
    %v1682 = vunpack.c.l.b16 %v1274
    %v1683 = vunpack.c.h.b16 %v1274
    %v1684 = vunpack.c.l.b16 %v1275
    %v1685 = vunpack.c.h.b16 %v1275
    %v1686 = vunpack.c.l.b16 %v1276
    %v1687 = vunpack.c.h.b16 %v1276
    %v1688 = vunpack.c.l.b16 %v1277
    %v1689 = vunpack.c.h.b16 %v1277
    %v1690 = vunpack.c.l.b16 %v1278
    %v1691 = vunpack.c.h.b16 %v1278
    %v1692 = vunpack.c.l.b16 %v1279
    %v1693 = vunpack.c.h.b16 %v1279
    %v1694 = vunpack.c.l.b16 %v1280
    %v1695 = vunpack.c.h.b16 %v1280
    %v1696 = vunpack.c.l.b16 %v1281
    %v1697 = vunpack.c.h.b16 %v1281
    %v1698 = vunpack.c.l.b16 %v1282
    %v1699 = vunpack.c.h.b16 %v1282
    %v1700 = vunpack.c.l.b16 %v1283
    %v1701 = vunpack.c.h.b16 %v1283
    %v1702 = vunpack.c.l.b16 %v1284
    %v1703 = vunpack.c.h.b16 %v1284
    %v1704 = vunpack.c.l.b16 %v1285
    %v1705 = vunpack.c.h.b16 %v1285
    %v1706 = vunpack.c.l.b16 %v1286
    %v1707 = vunpack.c.h.b16 %v1286
    %v1708 = vunpack.c.l.b16 %v1287
    %v1709 = vunpack.c.h.b16 %v1287
    %v1710 = vunpack.c.l.b16 %v1288
    %v1711 = vunpack.c.h.b16 %v1288
    %v1712 = vunpack.c.l.b16 %v1289
    %v1713 = vunpack.c.h.b16 %v1289
    %v1714 = vunpack.c.l.b16 %v1290
    %v1715 = vunpack.c.h.b16 %v1290
    %v1716 = vunpack.c.l.b16 %v1291
    %v1717 = vunpack.c.h.b16 %v1291
    %v1718 = vpack.c.b16 %v1470, %v1462
    %v1719 = vpack.c.b16 %v1471, %v1463
    %v1720 = vpack.c.b16 %v1472, %v1464
    %v1721 = vpack.c.b16 %v1473, %v1465
    %v1722 = vpack.c.b16 %v1474, %v1466
    %v1723 = vpack.c.b16 %v1475, %v1467
    %v1724 = vpack.c.b16 %v1476, %v1468
    %v1725 = vpack.c.b16 %v1477, %v1469
    %v1726 = vpack.c.b16 %v1486, %v1478
    %v1727 = vpack.c.b16 %v1487, %v1479
    %v1728 = vpack.c.b16 %v1488, %v1480
    %v1729 = vpack.c.b16 %v1489, %v1481
    %v1730 = vpack.c.b16 %v1490, %v1482
    %v1731 = vpack.c.b16 %v1491, %v1483
    %v1732 = vpack.c.b16 %v1492, %v1484
    %v1733 = vpack.c.b16 %v1493, %v1485
    %v1734 = vpack.c.b16 %v1502, %v1494
    %v1735 = vpack.c.b16 %v1503, %v1495
    %v1736 = vpack.c.b16 %v1504, %v1496
    %v1737 = vpack.c.b16 %v1505, %v1497
    %v1738 = vpack.c.b16 %v1506, %v1498
    %v1739 = vpack.c.b16 %v1507, %v1499
    %v1740 = vpack.c.b16 %v1508, %v1500
    %v1741 = vpack.c.b16 %v1509, %v1501
    %v1742 = vpack.c.b16 %v1518, %v1510
    %v1743 = vpack.c.b16 %v1519, %v1511
    %v1744 = vpack.c.b16 %v1520, %v1512
    %v1745 = vpack.c.b16 %v1521, %v1513
    %v1746 = vpack.c.b16 %v1522, %v1514
    %v1747 = vpack.c.b16 %v1523, %v1515
    %v1748 = vpack.c.b16 %v1524, %v1516
    %v1749 = vpack.c.b16 %v1525, %v1517
    %v1750 = vpack.c.b16 %v1534, %v1526
    %v1751 = vpack.c.b16 %v1535, %v1527
    %v1752 = vpack.c.b16 %v1536, %v1528
    %v1753 = vpack.c.b16 %v1537, %v1529
    %v1754 = vpack.c.b16 %v1538, %v1530
    %v1755 = vpack.c.b16 %v1539, %v1531
    %v1756 = vpack.c.b16 %v1540, %v1532
    %v1757 = vpack.c.b16 %v1541, %v1533
    %v1758 = vpack.c.b16 %v1550, %v1542
    %v1759 = vpack.c.b16 %v1551, %v1543
    %v1760 = vpack.c.b16 %v1552, %v1544
    %v1761 = vpack.c.b16 %v1553, %v1545
    %v1762 = vpack.c.b16 %v1554, %v1546
    %v1763 = vpack.c.b16 %v1555, %v1547
    %v1764 = vpack.c.b16 %v1556, %v1548
    %v1765 = vpack.c.b16 %v1557, %v1549
    %v1766 = vpack.c.b16 %v1566, %v1558
    %v1767 = vpack.c.b16 %v1567, %v1559
    %v1768 = vpack.c.b16 %v1568, %v1560
    %v1769 = vpack.c.b16 %v1569, %v1561
    %v1770 = vpack.c.b16 %v1570, %v1562
    %v1771 = vpack.c.b16 %v1571, %v1563
    %v1772 = vpack.c.b16 %v1572, %v1564
    %v1773 = vpack.c.b16 %v1573, %v1565
    %v1774 = vpack.c.b16 %v1582, %v1574
    %v1775 = vpack.c.b16 %v1583, %v1575
    %v1776 = vpack.c.b16 %v1584, %v1576
    %v1777 = vpack.c.b16 %v1585, %v1577
    %v1778 = vpack.c.b16 %v1586, %v1578
    %v1779 = vpack.c.b16 %v1587, %v1579
    %v1780 = vpack.c.b16 %v1588, %v1580
    %v1781 = vpack.c.b16 %v1589, %v1581
    %v1782 = vpack.c.b16 %v1598, %v1590
    %v1783 = vpack.c.b16 %v1599, %v1591
    %v1784 = vpack.c.b16 %v1600, %v1592
    %v1785 = vpack.c.b16 %v1601, %v1593
    %v1786 = vpack.c.b16 %v1602, %v1594
    %v1787 = vpack.c.b16 %v1603, %v1595
    %v1788 = vpack.c.b16 %v1604, %v1596
    %v1789 = vpack.c.b16 %v1605, %v1597
    %v1790 = vpack.c.b16 %v1614, %v1606
    %v1791 = vpack.c.b16 %v1615, %v1607
    %v1792 = vpack.c.b16 %v1616, %v1608
    %v1793 = vpack.c.b16 %v1617, %v1609
    %v1794 = vpack.c.b16 %v1618, %v1610
    %v1795 = vpack.c.b16 %v1619, %v1611
    %v1796 = vpack.c.b16 %v1620, %v1612
    %v1797 = vpack.c.b16 %v1621, %v1613
    %v1798 = vpack.c.b16 %v1630, %v1622
    %v1799 = vpack.c.b16 %v1631, %v1623
    %v1800 = vpack.c.b16 %v1632, %v1624
    %v1801 = vpack.c.b16 %v1633, %v1625
    %v1802 = vpack.c.b16 %v1634, %v1626
    %v1803 = vpack.c.b16 %v1635, %v1627
    %v1804 = vpack.c.b16 %v1636, %v1628
    %v1805 = vpack.c.b16 %v1637, %v1629
    %v1806 = vpack.c.b16 %v1646, %v1638
    %v1807 = vpack.c.b16 %v1647, %v1639
    %v1808 = vpack.c.b16 %v1648, %v1640
    %v1809 = vpack.c.b16 %v1649, %v1641
    %v1810 = vpack.c.b16 %v1650, %v1642
    %v1811 = vpack.c.b16 %v1651, %v1643
    %v1812 = vpack.c.b16 %v1652, %v1644
    %v1813 = vpack.c.b16 %v1653, %v1645
    %v1814 = vpack.c.b16 %v1662, %v1654
    %v1815 = vpack.c.b16 %v1663, %v1655
    %v1816 = vpack.c.b16 %v1664, %v1656
    %v1817 = vpack.c.b16 %v1665, %v1657
    %v1818 = vpack.c.b16 %v1666, %v1658
    %v1819 = vpack.c.b16 %v1667, %v1659
    %v1820 = vpack.c.b16 %v1668, %v1660
    %v1821 = vpack.c.b16 %v1669, %v1661
    %v1822 = vpack.c.b16 %v1678, %v1670
    %v1823 = vpack.c.b16 %v1679, %v1671
    %v1824 = vpack.c.b16 %v1680, %v1672
    %v1825 = vpack.c.b16 %v1681, %v1673
    %v1826 = vpack.c.b16 %v1682, %v1674
    %v1827 = vpack.c.b16 %v1683, %v1675
    %v1828 = vpack.c.b16 %v1684, %v1676
    %v1829 = vpack.c.b16 %v1685, %v1677
    %v1830 = vpack.c.b16 %v1694, %v1686
    %v1831 = vpack.c.b16 %v1695, %v1687
    %v1832 = vpack.c.b16 %v1696, %v1688
    %v1833 = vpack.c.b16 %v1697, %v1689
    %v1834 = vpack.c.b16 %v1698, %v1690
    %v1835 = vpack.c.b16 %v1699, %v1691
    %v1836 = vpack.c.b16 %v1700, %v1692
    %v1837 = vpack.c.b16 %v1701, %v1693
    %v1838 = vpack.c.b16 %v1710, %v1702
    %v1839 = vpack.c.b16 %v1711, %v1703
    %v1840 = vpack.c.b16 %v1712, %v1704
    %v1841 = vpack.c.b16 %v1713, %v1705
    %v1842 = vpack.c.b16 %v1714, %v1706
    %v1843 = vpack.c.b16 %v1715, %v1707
    %v1844 = vpack.c.b16 %v1716, %v1708
    %v1845 = vpack.c.b16 %v1717, %v1709
    %1974 = vmatprep.subr.bf16.mxu0 %v1719
    %1975 = vmatpush1.bf16.msra.mxu0 %v1718
    %1976 = vmatprep.subr.bf16.mxu0 %v1727
    %1977 = vmatpush1.bf16.msra.mxu0 %v1726
    %1978 = vmatprep.subr.bf16.mxu0 %v1735
    %1979 = vmatpush1.bf16.msra.mxu0 %v1734
    %1980 = vmatprep.subr.bf16.mxu0 %v1743
    %1981 = vmatpush1.bf16.msra.mxu0 %v1742
    %1982 = vmatprep.subr.bf16.mxu0 %v1751
    %1983 = vmatpush1.bf16.msra.mxu0 %v1750
    %1984 = vmatprep.subr.bf16.mxu0 %v1759
    %1985 = vmatpush1.bf16.msra.mxu0 %v1758
    %1986 = vmatprep.subr.bf16.mxu0 %v1767
    %1987 = vmatpush1.bf16.msra.mxu0 %v1766
    %1988 = vmatprep.subr.bf16.mxu0 %v1775
    %1989 = vmatpush1.bf16.msra.mxu0 %v1774
    %1990 = vmatprep.subr.bf16.mxu0 %v1783
    %1991 = vmatpush1.bf16.msra.mxu0 %v1782
    %1992 = vmatprep.subr.bf16.mxu0 %v1791
    %1993 = vmatpush1.bf16.msra.mxu0 %v1790
    %1994 = vmatprep.subr.bf16.mxu0 %v1799
    %1995 = vmatpush1.bf16.msra.mxu0 %v1798
    %1996 = vmatprep.subr.bf16.mxu0 %v1807
    %1997 = vmatpush1.bf16.msra.mxu0 %v1806
    %1998 = vmatprep.subr.bf16.mxu0 %v1815
    %1999 = vmatpush1.bf16.msra.mxu0 %v1814
    %2000 = vmatprep.subr.bf16.mxu0 %v1823
    %2001 = vmatpush1.bf16.msra.mxu0 %v1822
    %2002 = vmatprep.subr.bf16.mxu0 %v1831
    %2003 = vmatpush1.bf16.msra.mxu0 %v1830
    %2004 = vmatprep.subr.bf16.mxu0 %v1839
    %2005 = vmatpush1.bf16.msra.mxu0 %v1838
    %2006 = vmatprep.mubr.bf16.mxu0 %v1163
    %2007 = vmatmul.mubr.bf16.gmra.mrb[0].mxu0 %v1162
    %v2008 = vpop.f32.mrb[0].mxu0
    %v2009 = vadd.f32 %v1297, %v2008
    %v2010 = vpop.f32.mrb[0].mxu0
    %v2011 = vadd.f32 %v1301, %v2010
    %v2012 = vpop.f32.mrb[0].mxu0
    %v2013 = vpop.f32.mrb[0].mxu0
    %2014 = vdwg.mxu0
    %2015 = vmatprep.subr.bf16.mxu0 %v1721
    %2016 = vmatpush1.bf16.msra.mxu0 %v1720
    %2017 = vmatprep.subr.bf16.mxu0 %v1729
    %2018 = vmatpush1.bf16.msra.mxu0 %v1728
    %2019 = vmatprep.subr.bf16.mxu0 %v1737
    %2020 = vmatpush1.bf16.msra.mxu0 %v1736
    %2021 = vmatprep.subr.bf16.mxu0 %v1745
    %2022 = vmatpush1.bf16.msra.mxu0 %v1744
    %2023 = vmatprep.subr.bf16.mxu0 %v1753
    %2024 = vmatpush1.bf16.msra.mxu0 %v1752
    %2025 = vmatprep.subr.bf16.mxu0 %v1761
    %2026 = vmatpush1.bf16.msra.mxu0 %v1760
    %2027 = vmatprep.subr.bf16.mxu0 %v1769
    %2028 = vmatpush1.bf16.msra.mxu0 %v1768
    %2029 = vmatprep.subr.bf16.mxu0 %v1777
    %2030 = vmatpush1.bf16.msra.mxu0 %v1776
    %2031 = vmatprep.subr.bf16.mxu0 %v1785
    %2032 = vmatpush1.bf16.msra.mxu0 %v1784
    %2033 = vmatprep.subr.bf16.mxu0 %v1793
    %2034 = vmatpush1.bf16.msra.mxu0 %v1792
    %2035 = vmatprep.subr.bf16.mxu0 %v1801
    %2036 = vmatpush1.bf16.msra.mxu0 %v1800
    %2037 = vmatprep.subr.bf16.mxu0 %v1809
    %2038 = vmatpush1.bf16.msra.mxu0 %v1808
    %2039 = vmatprep.subr.bf16.mxu0 %v1817
    %2040 = vmatpush1.bf16.msra.mxu0 %v1816
    %2041 = vmatprep.subr.bf16.mxu0 %v1825
    %2042 = vmatpush1.bf16.msra.mxu0 %v1824
    %2043 = vmatprep.subr.bf16.mxu0 %v1833
    %2044 = vmatpush1.bf16.msra.mxu0 %v1832
    %2045 = vmatprep.subr.bf16.mxu0 %v1841
    %2046 = vmatpush1.bf16.msra.mxu0 %v1840
    %2047 = vmatprep.mubr.bf16.mxu0 %v1163
    %2048 = vmatmul.mubr.bf16.gmra.mrb[0].mxu0 %v1162
    %v2049 = vpop.f32.mrb[0].mxu0
    %v2050 = vadd.f32 %v1305, %v2049
    %v2051 = vpop.f32.mrb[0].mxu0
    %v2052 = vadd.f32 %v1309, %v2051
    %v2053 = vpop.f32.mrb[0].mxu0
    %v2054 = vpop.f32.mrb[0].mxu0
    %2055 = vdwg.mxu0
    %2056 = vmatprep.subr.bf16.mxu0 %v1723
    %2057 = vmatpush1.bf16.msra.mxu0 %v1722
    %2058 = vmatprep.subr.bf16.mxu0 %v1731
    %2059 = vmatpush1.bf16.msra.mxu0 %v1730
    %2060 = vmatprep.subr.bf16.mxu0 %v1739
    %2061 = vmatpush1.bf16.msra.mxu0 %v1738
    %2062 = vmatprep.subr.bf16.mxu0 %v1747
    %2063 = vmatpush1.bf16.msra.mxu0 %v1746
    %2064 = vmatprep.subr.bf16.mxu0 %v1755
    %2065 = vmatpush1.bf16.msra.mxu0 %v1754
    %2066 = vmatprep.subr.bf16.mxu0 %v1763
    %2067 = vmatpush1.bf16.msra.mxu0 %v1762
    %2068 = vmatprep.subr.bf16.mxu0 %v1771
    %2069 = vmatpush1.bf16.msra.mxu0 %v1770
    %2070 = vmatprep.subr.bf16.mxu0 %v1779
    %2071 = vmatpush1.bf16.msra.mxu0 %v1778
    %2072 = vmatprep.subr.bf16.mxu0 %v1787
    %2073 = vmatpush1.bf16.msra.mxu0 %v1786
    %2074 = vmatprep.subr.bf16.mxu0 %v1795
    %2075 = vmatpush1.bf16.msra.mxu0 %v1794
    %2076 = vmatprep.subr.bf16.mxu0 %v1803
    %2077 = vmatpush1.bf16.msra.mxu0 %v1802
    %2078 = vmatprep.subr.bf16.mxu0 %v1811
    %2079 = vmatpush1.bf16.msra.mxu0 %v1810
    %2080 = vmatprep.subr.bf16.mxu0 %v1819
    %2081 = vmatpush1.bf16.msra.mxu0 %v1818
    %2082 = vmatprep.subr.bf16.mxu0 %v1827
    %2083 = vmatpush1.bf16.msra.mxu0 %v1826
    %2084 = vmatprep.subr.bf16.mxu0 %v1835
    %2085 = vmatpush1.bf16.msra.mxu0 %v1834
    %2086 = vmatprep.subr.bf16.mxu0 %v1843
    %2087 = vmatpush1.bf16.msra.mxu0 %v1842
    %2088 = vmatprep.mubr.bf16.mxu0 %v1163
    %2089 = vmatmul.mubr.bf16.gmra.mrb[0].mxu0 %v1162
    %v2090 = vpop.f32.mrb[0].mxu0
    %v2091 = vadd.f32 %v1313, %v2090
    %v2092 = vpop.f32.mrb[0].mxu0
    %v2093 = vadd.f32 %v1317, %v2092
    %v2094 = vpop.f32.mrb[0].mxu0
    %v2095 = vpop.f32.mrb[0].mxu0
    %2096 = vdwg.mxu0
    %2097 = vmatprep.subr.bf16.mxu0 %v1725
    %2098 = vmatpush1.bf16.msra.mxu0 %v1724
    %2099 = vmatprep.subr.bf16.mxu0 %v1733
    %2100 = vmatpush1.bf16.msra.mxu0 %v1732
    %2101 = vmatprep.subr.bf16.mxu0 %v1741
    %2102 = vmatpush1.bf16.msra.mxu0 %v1740
    %2103 = vmatprep.subr.bf16.mxu0 %v1749
    %2104 = vmatpush1.bf16.msra.mxu0 %v1748
    %2105 = vmatprep.subr.bf16.mxu0 %v1757
    %2106 = vmatpush1.bf16.msra.mxu0 %v1756
    %2107 = vmatprep.subr.bf16.mxu0 %v1765
    %2108 = vmatpush1.bf16.msra.mxu0 %v1764
    %2109 = vmatprep.subr.bf16.mxu0 %v1773
    %2110 = vmatpush1.bf16.msra.mxu0 %v1772
    %2111 = vmatprep.subr.bf16.mxu0 %v1781
    %2112 = vmatpush1.bf16.msra.mxu0 %v1780
    %2113 = vmatprep.subr.bf16.mxu0 %v1789
    %2114 = vmatpush1.bf16.msra.mxu0 %v1788
    %2115 = vmatprep.subr.bf16.mxu0 %v1797
    %2116 = vmatpush1.bf16.msra.mxu0 %v1796
    %2117 = vmatprep.subr.bf16.mxu0 %v1805
    %2118 = vmatpush1.bf16.msra.mxu0 %v1804
    %2119 = vmatprep.subr.bf16.mxu0 %v1813
    %2120 = vmatpush1.bf16.msra.mxu0 %v1812
    %2121 = vmatprep.subr.bf16.mxu0 %v1821
    %2122 = vmatpush1.bf16.msra.mxu0 %v1820
    %2123 = vmatprep.subr.bf16.mxu0 %v1829
    %2124 = vmatpush1.bf16.msra.mxu0 %v1828
    %2125 = vmatprep.subr.bf16.mxu0 %v1837
    %2126 = vmatpush1.bf16.msra.mxu0 %v1836
    %2127 = vmatprep.subr.bf16.mxu0 %v1845
    %2128 = vmatpush1.bf16.msra.mxu0 %v1844
    %2129 = vmatprep.mubr.bf16.mxu0 %v1163
    %2130 = vmatmul.mubr.bf16.gmra.mrb[0].mxu0 %v1162
    %v2131 = vpop.f32.mrb[0].mxu0
    %v2132 = vadd.f32 %v1321, %v2131
    %v2133 = vpop.f32.mrb[0].mxu0
    %v2134 = vadd.f32 %v1325, %v2133
    %v2135 = vpop.f32.mrb[0].mxu0
    %v2136 = vpop.f32.mrb[0].mxu0
    %2137 = vdwg.mxu0
    %2138 = vst [vmem:[#allocation20] sm:$0xff] %v2009
    %2139 = vst [vmem:[#allocation20 + $0x8] sm:$0xff] %v2011
    %2140 = vst [vmem:[#allocation20 + $0x10] sm:$0xff] %v2050
    %2141 = vst [vmem:[#allocation20 + $0x18] sm:$0xff] %v2052
    %2142 = vst [vmem:[#allocation20 + $0x20] sm:$0xff] %v2091
    %2143 = vst [vmem:[#allocation20 + $0x28] sm:$0xff] %v2093
    %2144 = vst [vmem:[#allocation20 + $0x30] sm:$0xff] %v2132
    %2145 = vst [vmem:[#allocation20 + $0x38] sm:$0xff] %v2134
    // Predicated region
    $region90: #{pointnet2_forward.7} parent=1 // pred_check
      _
    $region91: #{pointnet2_forward.7} parent=1 // pred_check_branch
      %2147 = sbr.rel (0) target = $region93
    $region92: #{pointnet2_forward.7} parent=1 // pred_region
      %s2149 = ssub.s32 1024, 1024
      %2150 = vsyncadd [#allocation4], %s2149
      %s2152 = sshll.u32 [#allocation20], 4
      %s2153 = int_to_ptr.vmem [resolvable:$true] %s2152
      %2155 = dma.vmem_to_hbm [thread:$0]  %s2153, 1024, %s11, [#allocation4]
    $region93: #{pointnet2_forward.7} parent=1 // pred_fallthru
      _
    // Predicated region
    $region94: #{pointnet2_forward.7} parent=1 // pred_check
      _
    $region95: #{pointnet2_forward.7} parent=1 // pred_check_branch
      %2157 = sbr.rel (0) target = $region97
    $region96: #{pointnet2_forward.7} parent=1 // pred_region
      %2158 = dma.done [#allocation4], 1024
    $region97: #{pointnet2_forward.7} parent=1 // pred_fallthru
      _
    %2159 = vsyncpa [#allocation3], 1
    %2160 = vsyncpa [#allocation6], 1
    %2161 = vsyncpa [#allocation9], 1
    %2162 = vsyncpa [#allocation12], 1
    %2163 = vsyncpa [#allocation15], 1
    %2164 = vsyncpa [#allocation18], 1
    %2165 = vsyncpa [#allocation4], 1

</llo_original>
